<compile_context>
chip_gen: v5e
topology: v5e:2x2
jax: 0.10.0
libtpu: 0.0.40
codegen_flags: <defaults>
</compile_context>

<pallas_src>
import functools

import jax
import jax.numpy as jnp
from jax.experimental import pallas as pl
from jax.experimental.pallas import tpu as pltpu

# ----------------------- model configuration (small, synthetic, lane-dense) ----------------
PATCH = 14          # vit_large_patch14 -> patch size 14
IMG = 28            # 28x28 image -> 2x2 = 4 patches (+ cls = 5 encoder tokens)
C_IN = 3
D_ENC = 128         # stands in for ViT-L embed dim 1024 (lane-dense)
ENC_HEADS = 4
ENC_LAYERS = 2
D_DEC = 128         # stands in for GPT-2 embed dim 768 (lane-dense)
DEC_HEADS = 4
DEC_LAYERS = 2
VOCAB = 256         # stands in for GPT-2 vocab 50257 (2 x 128-lane tiles)
BLOCK_SIZE = 64     # decoder positional-embedding table size
SEQ_T = 8           # text token length
VOCAB_TILE = 128    # lm_head vocab tile (lane-dense, multiple of 128)

VMEM_LIMIT = 32 * 1024 * 1024   # safe on v5e/v6e/v7x; recompute at real sizes


def _round_up(n, m):
    return ((n + m - 1) // m) * m


# ----------------------------------- kernel helpers -----------------------------------
def _gelu_tanh(x):
    # tanh-approximate GELU (GPT-2 "gelu_new"); f32 VPU + EUP work.
    return 0.5 * x * (1.0 + jnp.tanh(0.7978845608028654 * (x + 0.044715 * x * x * x)))


def _ln(x, g, b, eps):
    mu = jnp.mean(x, axis=-1, keepdims=True)
    xc = x - mu
    var = jnp.mean(xc * xc, axis=-1, keepdims=True)
    return xc * jax.lax.rsqrt(var + eps) * g + b


# --------------------- fused, layer-stacked transformer block (one pallas_call) ---------------------
def _stacked_block_kernel(
    x_ref, ln1g_ref, ln1b_ref, qkvw_ref, qkvb_ref, projw_ref, projb_ref,
    ln2g_ref, ln2b_ref, fc1w_ref, fc1b_ref, fc2w_ref, fc2b_ref, o_ref,
    *, nh, s_valid, causal, eps,
):
    l = pl.program_id(1)

    # Layer 0: seed the resident activation block from the HBM input.
    @pl.when(l == 0)
    def _():
        o_ref[0] = x_ref[0]

    x = o_ref[0]                               # [S, D] f32, resident across layer steps
    S, D = x.shape
    dh = D // nh
    scale = 1.0 / (dh ** 0.5)

    # ---- attention mask built in-kernel (two iota compares, no HBM bias input), applied once ----
    rows = jax.lax.broadcasted_iota(jnp.int32, (S, S), 0)
    cols = jax.lax.broadcasted_iota(jnp.int32, (S, S), 1)
    allowed = cols < s_valid                   # padded key positions are never attended
    if causal:
        allowed = allowed & (cols <= rows)
    mask_bias = jnp.where(allowed, 0.0, -1e30).astype(jnp.float32)   # [S, S]

    # ---- LN1 (f32) + fused QKV projection (bf16 operands, f32 accumulation) ----
    h = _ln(x, ln1g_ref[0], ln1b_ref[0], eps)
    qkv = jnp.dot(h.astype(jnp.bfloat16), qkvw_ref[0],
                  preferred_element_type=jnp.float32) + qkvb_ref[0]

    # head-major [nh, S, dh] bf16 views via static lane slices stacked on a new leading axis
    def heads(a):
        return jnp.stack(
            [a[:, i * dh:(i + 1) * dh].astype(jnp.bfloat16) for i in range(nh)], axis=0)
    qh = heads(qkv[:, 0 * D:1 * D])
    kh = heads(qkv[:, 1 * D:2 * D])
    vh = heads(qkv[:, 2 * D:3 * D])

    # ---- batched scores + softmax (f32), single mask application ----
    scores = jnp.einsum('hqd,hkd->hqk', qh, kh,
                        preferred_element_type=jnp.float32) * scale      # [nh, S, S]
    scores = scores + mask_bias[None]
    m = jnp.max(scores, axis=-1, keepdims=True)
    p = jnp.exp(scores - m)
    p = p * pl.reciprocal(jnp.sum(p, axis=-1, keepdims=True), approx=True)

    o = jnp.einsum('hqk,hkd->hqd', p.astype(jnp.bfloat16), vh,
                   preferred_element_type=jnp.float32)                   # [nh, S, dh]
    o = jnp.concatenate([o[i] for i in range(nh)], axis=-1)              # [S, D]

    # ---- single K=D output projection + bias + residual ----
    x = x + jnp.dot(o.astype(jnp.bfloat16), projw_ref[0],
                    preferred_element_type=jnp.float32) + projb_ref[0]

    # ---- LN2 + MLP (bf16 dots, f32 GELU) + residual ----
    h = _ln(x, ln2g_ref[0], ln2b_ref[0], eps)
    h = jnp.dot(h.astype(jnp.bfloat16), fc1w_ref[0],
                preferred_element_type=jnp.float32) + fc1b_ref[0]
    h = _gelu_tanh(h)
    h = jnp.dot(h.astype(jnp.bfloat16), fc2w_ref[0],
                preferred_element_type=jnp.float32) + fc2b_ref[0]
    o_ref[0] = (x + h).astype(o_ref.dtype)


def pallas_block_stack(x, p, nh, s_valid, causal):
    """Full pre-LN transformer stack (all layers) as a single fused kernel.

    x: [B, S_pad, D] f32.  p: dict of layer-stacked weights (leading dim L,
    matmul weights bf16).  The activation stays resident in VMEM across the
    'arbitrary' layer axis; weight blocks are indexed by the layer step so the
    next layer's weights DMA while the current layer computes.
    """
    B, S, D = x.shape
    L = p["qkv_w"].shape[0]
    mlp = p["fc1_w"].shape[-1]
    args = [
        x,
        p["ln1_g"], p["ln1_b"], p["qkv_w"], p["qkv_b"], p["proj_w"], p["proj_b"],
        p["ln2_g"], p["ln2_b"], p["fc1_w"], p["fc1_b"], p["fc2_w"], p["fc2_b"],
    ]
    in_specs = [
        pl.BlockSpec((1, S, D), lambda b, l: (b, 0, 0)),          # activations (seed at l==0)
        pl.BlockSpec((1, 1, D), lambda b, l: (l, 0, 0)),          # ln1_g    (L, 1, D)
        pl.BlockSpec((1, 1, D), lambda b, l: (l, 0, 0)),          # ln1_b
        pl.BlockSpec((1, D, 3 * D), lambda b, l: (l, 0, 0)),      # qkv_w    (L, D, 3D) bf16
        pl.BlockSpec((1, 1, 3 * D), lambda b, l: (l, 0, 0)),      # qkv_b
        pl.BlockSpec((1, D, D), lambda b, l: (l, 0, 0)),          # proj_w   bf16
        pl.BlockSpec((1, 1, D), lambda b, l: (l, 0, 0)),          # proj_b
        pl.BlockSpec((1, 1, D), lambda b, l: (l, 0, 0)),          # ln2_g
        pl.BlockSpec((1, 1, D), lambda b, l: (l, 0, 0)),          # ln2_b
        pl.BlockSpec((1, D, mlp), lambda b, l: (l, 0, 0)),        # fc1_w    bf16
        pl.BlockSpec((1, 1, mlp), lambda b, l: (l, 0, 0)),        # fc1_b
        pl.BlockSpec((1, mlp, D), lambda b, l: (l, 0, 0)),        # fc2_w    bf16
        pl.BlockSpec((1, 1, D), lambda b, l: (l, 0, 0)),          # fc2_b
    ]
    return pl.pallas_call(
        functools.partial(_stacked_block_kernel, nh=nh, s_valid=s_valid,
                          causal=causal, eps=1e-5),
        out_shape=jax.ShapeDtypeStruct((B, S, D), jnp.float32),
        grid=(B, L),
        in_specs=in_specs,
        out_specs=pl.BlockSpec((1, S, D), lambda b, l: (b, 0, 0)),
        compiler_params=pltpu.CompilerParams(
            dimension_semantics=("parallel", "arbitrary"),
            vmem_limit_bytes=VMEM_LIMIT),
    )(*args)


# ------------------------------- small fused linear kernels -------------------------------
def _linear_bias_kernel(x_ref, w_ref, b_ref, o_ref):
    o_ref[...] = (jnp.dot(x_ref[...].astype(jnp.bfloat16), w_ref[...],
                          preferred_element_type=jnp.float32)
                  + b_ref[...]).astype(o_ref.dtype)


def pallas_linear(x, w, b):
    """y = x @ w + b.  Used once for the (K-padded) patch-embed matmul.  w is bf16."""
    M, K = x.shape
    N = w.shape[1]
    return pl.pallas_call(
        _linear_bias_kernel,
        out_shape=jax.ShapeDtypeStruct((M, N), jnp.float32),
        grid=(1,),
        in_specs=[pl.BlockSpec((M, K), lambda i: (0, 0)),
                  pl.BlockSpec((K, N), lambda i: (0, 0)),
                  pl.BlockSpec((1, N), lambda i: (0, 0))],
        out_specs=pl.BlockSpec((M, N), lambda i: (0, 0)),
        compiler_params=pltpu.CompilerParams(vmem_limit_bytes=VMEM_LIMIT),
    )(x, w, b.reshape(1, N))


def _ln_linear_kernel(*refs, has_bias, eps):
    if has_bias:
        x_ref, g_ref, bln_ref, w_ref, bias_ref, o_ref = refs
    else:
        x_ref, g_ref, bln_ref, w_ref, o_ref = refs
    h = _ln(x_ref[...], g_ref[...], bln_ref[...], eps)
    y = jnp.dot(h.astype(jnp.bfloat16), w_ref[...], preferred_element_type=jnp.float32)
    if has_bias:
        y = y + bias_ref[...]
    o_ref[...] = y.astype(o_ref.dtype)


def pallas_ln_linear(x, g, bln, w, bias=None, tn=128):
    """y = LN(x) @ w (+ bias), tiled over the output dim N (lane-dense 128-multiple tiles).

    x: [M, D] f32, w: [D, N] bf16.  Used for (a) encoder final LN + img projection
    and (b) decoder final LN + vocab-tiled tied lm_head.
    """
    M, D = x.shape
    N = w.shape[1]
    assert N % tn == 0
    args = [x, g.reshape(1, D), bln.reshape(1, D), w]
    in_specs = [
        pl.BlockSpec((M, D), lambda j: (0, 0)),
        pl.BlockSpec((1, D), lambda j: (0, 0)),
        pl.BlockSpec((1, D), lambda j: (0, 0)),
        pl.BlockSpec((D, tn), lambda j: (0, j)),
    ]
    if bias is not None:
        args.append(bias.reshape(1, N))
        in_specs.append(pl.BlockSpec((1, tn), lambda j: (0, j)))
    return pl.pallas_call(
        functools.partial(_ln_linear_kernel, has_bias=bias is not None, eps=1e-5),
        out_shape=jax.ShapeDtypeStruct((M, N), jnp.float32),
        grid=(N // tn,),
        in_specs=in_specs,
        out_specs=pl.BlockSpec((M, tn), lambda j: (0, j)),
        compiler_params=pltpu.CompilerParams(
            dimension_semantics=("parallel",), vmem_limit_bytes=VMEM_LIMIT),
    )(*args)


# ------------------------------------ full forward pass ------------------------------------
def vit_caption_forward(params, imgs, tokens):
    B, C, H, W = imgs.shape
    gh, gw = H // PATCH, W // PATCH
    n_patches = gh * gw

    # ---- vision_encoder.forward_features(imgs) ----
    # patchify (== Conv2d(C_IN, D_ENC, kernel=stride=PATCH) on NCHW input); JAX glue.
    x = imgs.reshape(B, C, gh, PATCH, gw, PATCH)
    x = x.transpose(0, 2, 4, 1, 3, 5).reshape(B * n_patches, C * PATCH * PATCH)
    k_raw = C * PATCH * PATCH
    k_pad = _round_up(k_raw, 128)                                    # lane-align contraction once
    x = jnp.pad(x, ((0, 0), (0, k_pad - k_raw)))
    x = pallas_linear(x, params["patch_w"], params["patch_b"]).reshape(B, n_patches, D_ENC)

    cls = jnp.broadcast_to(params["cls"], (B, 1, D_ENC))
    x = jnp.concatenate([cls, x], axis=1) + params["pos"]            # [B, 5, D_ENC]
    s_enc = x.shape[1]
    s_enc_pad = _round_up(s_enc, 8)                                  # sublane-align S
    x = jnp.pad(x, ((0, 0), (0, s_enc_pad - s_enc), (0, 0)))

    # all encoder layers in one fused, layer-stacked kernel
    x = pallas_block_stack(x, params["enc_blocks"], ENC_HEADS, s_valid=s_enc, causal=False)

    # ---- encoder final LN + img_projection_layer (Linear 1024->768 analogue), fused ----
    img_emb = pallas_ln_linear(
        x.reshape(B * s_enc_pad, D_ENC),
        params["enc_lnf_g"], params["enc_lnf_b"],
        params["img_proj_w"], params["img_proj_b"],
    ).reshape(B, s_enc_pad, D_DEC)[:, :s_enc]

    # ---- text_decoder(token, img_embedding): GPT-2-style with image prefix ----
    # TODO(synk): token-embedding gather stays as XLA glue (jnp.take); at GPT-2
    # vocab size a Pallas DMA-gather kernel would be used instead.
    T = tokens.shape[1]
    tok_emb = jnp.take(params["wte"], tokens, axis=0) + params["wpe"][:T][None]
    h = jnp.concatenate([img_emb, tok_emb], axis=1)                  # [B, 5+T, D_DEC]
    S = h.shape[1]
    s_dec_pad = _round_up(S, 8)
    h = jnp.pad(h, ((0, 0), (0, s_dec_pad - S), (0, 0)))

    # all decoder layers in one fused, layer-stacked kernel (causal over image+text)
    h = pallas_block_stack(h, params["dec_blocks"], DEC_HEADS, s_valid=S, causal=True)

    # ---- decoder final LN + tied lm_head (pre-transposed bf16 weight, vocab-tiled), fused ----
    logits = pallas_ln_linear(
        h.reshape(B * s_dec_pad, D_DEC),
        params["dec_lnf_g"], params["dec_lnf_b"],
        params["wte_t"],                                            # [D_DEC, VOCAB] bf16
        tn=VOCAB_TILE,
    ).reshape(B, s_dec_pad, VOCAB)[:, :S]
    return logits


# ---------------------------------- deterministic init ----------------------------------
def init_params(key):
    keys = iter(jax.random.split(key, 64))

    def nrm(shape, scale=0.02):
        return scale * jax.random.normal(next(keys), shape, jnp.float32)

    def mk_stack(L, d, mlp):
        # layer-stacked block params; matmul weights stored bf16 (halves weight DMA).
        return {
            "ln1_g": jnp.ones((L, 1, d), jnp.float32),
            "ln1_b": jnp.zeros((L, 1, d), jnp.float32),
            "qkv_w": nrm((L, d, 3 * d)).astype(jnp.bfloat16),
            "qkv_b": jnp.zeros((L, 1, 3 * d), jnp.float32),
            "proj_w": nrm((L, d, d)).astype(jnp.bfloat16),
            "proj_b": jnp.zeros((L, 1, d), jnp.float32),
            "ln2_g": jnp.ones((L, 1, d), jnp.float32),
            "ln2_b": jnp.zeros((L, 1, d), jnp.float32),
            "fc1_w": nrm((L, d, mlp)).astype(jnp.bfloat16),
            "fc1_b": jnp.zeros((L, 1, mlp), jnp.float32),
            "fc2_w": nrm((L, mlp, d)).astype(jnp.bfloat16),
            "fc2_b": jnp.zeros((L, 1, d), jnp.float32),
        }

    n_patches = (IMG // PATCH) * (IMG // PATCH)
    k_raw = C_IN * PATCH * PATCH
    k_pad = _round_up(k_raw, 128)
    patch_w = jnp.zeros((k_pad, D_ENC), jnp.float32).at[:k_raw].set(nrm((k_raw, D_ENC)))
    wte = nrm((VOCAB, D_DEC))

    return {
        "patch_w": patch_w.astype(jnp.bfloat16),       # K padded to 128-multiple, zero rows
        "patch_b": jnp.zeros((D_ENC,), jnp.float32),
        "cls": nrm((1, 1, D_ENC)),
        "pos": nrm((1, n_patches + 1, D_ENC)),
        "enc_blocks": mk_stack(ENC_LAYERS, D_ENC, 4 * D_ENC),
        "enc_lnf_g": jnp.ones((D_ENC,), jnp.float32),
        "enc_lnf_b": jnp.zeros((D_ENC,), jnp.float32),
        "img_proj_w": nrm((D_ENC, D_DEC)).astype(jnp.bfloat16),
        "img_proj_b": jnp.zeros((D_DEC,), jnp.float32),
        "wte": wte,                                    # token-embedding table [VOCAB, D_DEC] f32
        "wte_t": wte.T.astype(jnp.bfloat16),           # weight-tied lm_head, pre-transposed bf16
        "wpe": nrm((BLOCK_SIZE, D_DEC)),
        "dec_blocks": mk_stack(DEC_LAYERS, D_DEC, 4 * D_DEC),
        "dec_lnf_g": jnp.ones((D_DEC,), jnp.float32),
        "dec_lnf_b": jnp.zeros((D_DEC,), jnp.float32),
    }


if __name__ == "__main__":
    root = jax.random.PRNGKey(0)
    pkey, ikey, tkey = jax.random.split(root, 3)
    params = init_params(pkey)
    imgs = jax.random.normal(ikey, (2, C_IN, IMG, IMG), jnp.float32)
    tokens = jax.random.randint(tkey, (2, SEQ_T), 0, VOCAB, dtype=jnp.int32)

    logits = jax.jit(vit_caption_forward)(params, imgs, tokens)
    jax.block_until_ready(logits)

    n_img_tokens = (IMG // PATCH) * (IMG // PATCH) + 1
    assert logits.shape == (2, n_img_tokens + SEQ_T, VOCAB), logits.shape
    assert bool(jnp.all(jnp.isfinite(logits)))
    print("KERNEL_OK")
</pallas_src>

<mosaic_0001>
module attributes {stable_mosaic.version = 11 : i64} {
  func.func @_linear_bias_kernel(%arg0: i32, %arg1: memref<8x640xf32, #tpu.memory_space<vmem>>, %arg2: memref<640x128xbf16, #tpu.memory_space<vmem>>, %arg3: memref<1x128xf32, #tpu.memory_space<vmem>>, %arg4: memref<8x128xf32, #tpu.memory_space<vmem>>) attributes {dimension_semantics = [#tpu.dimension_semantics<arbitrary>], iteration_bounds = array<i64: 1>, scalar_prefetch = 0 : i64, scratch_operands = 0 : i64, tpu.core_type = #tpu.core_type<tc>, window_params = [{pipeline_mode = #tpu.pipeline_mode<synchronous>, transform_indices = @transform_0, window_bounds = array<i64: 8, 640>}, {pipeline_mode = #tpu.pipeline_mode<synchronous>, transform_indices = @transform_1, window_bounds = array<i64: 640, 128>}, {pipeline_mode = #tpu.pipeline_mode<synchronous>, transform_indices = @transform_2, window_bounds = array<i64: 1, 128>}, {pipeline_mode = #tpu.pipeline_mode<synchronous>, transform_indices = @transform_3, window_bounds = array<i64: 8, 128>}]} {
    %c0 = arith.constant 0 : index
    %c0_0 = arith.constant 0 : index
    %0 = vector.load %arg1[%c0, %c0_0] : memref<8x640xf32, #tpu.memory_space<vmem>>, vector<8x640xf32>
    %1 = arith.truncf %0 : vector<8x640xf32> to vector<8x640xbf16>
    %c0_1 = arith.constant 0 : index
    %c0_2 = arith.constant 0 : index
    %2 = vector.load %arg2[%c0_1, %c0_2] : memref<640x128xbf16, #tpu.memory_space<vmem>>, vector<640x128xbf16>
    %cst = arith.constant dense<0.000000e+00> : vector<8x128xf32>
    %3 = tpu.matmul %1, %2, %cst {dimension_numbers = #tpu.dot_dimension_numbers<[1], [0], [0], [1], [0, 0, 1, 1], [], []>} : vector<8x640xbf16>, vector<640x128xbf16>, vector<8x128xf32> -> vector<8x128xf32>
    %c0_3 = arith.constant 0 : index
    %c0_4 = arith.constant 0 : index
    %4 = vector.load %arg3[%c0_3, %c0_4] : memref<1x128xf32, #tpu.memory_space<vmem>>, vector<1x128xf32>
    %5 = vector.broadcast %4 : vector<1x128xf32> to vector<8x128xf32>
    %6 = arith.addf %3, %5 : vector<8x128xf32>
    %c0_5 = arith.constant 0 : index
    %c0_6 = arith.constant 0 : index
    %7 = vector.load %arg4[%c0_5, %c0_6] : memref<8x128xf32, #tpu.memory_space<vmem>>, vector<8x128xf32>
    tpu.vector_store %arg4[%c0_5, %c0_6], %6 {strides = array<i32>} : memref<8x128xf32, #tpu.memory_space<vmem>>, vector<8x128xf32>,
    return
  }
  func.func @transform_0(%arg0: i32) -> (i32, i32) {
    %c0_i32 = arith.constant 0 : i32
    %c0_i32_0 = arith.constant 0 : i32
    %c0_i32_1 = arith.constant 0 : i32
    return %c0_i32, %c0_i32_0 : i32, i32
  }
  func.func @transform_1(%arg0: i32) -> (i32, i32) {
    %c0_i32 = arith.constant 0 : i32
    %c0_i32_0 = arith.constant 0 : i32
    %c0_i32_1 = arith.constant 0 : i32
    return %c0_i32, %c0_i32_0 : i32, i32
  }
  func.func @transform_2(%arg0: i32) -> (i32, i32) {
    %c0_i32 = arith.constant 0 : i32
    %c0_i32_0 = arith.constant 0 : i32
    %c0_i32_1 = arith.constant 0 : i32
    return %c0_i32, %c0_i32_0 : i32, i32
  }
  func.func @transform_3(%arg0: i32) -> (i32, i32) {
    %c0_i32 = arith.constant 0 : i32
    %c0_i32_0 = arith.constant 0 : i32
    %c0_i32_1 = arith.constant 0 : i32
    return %c0_i32, %c0_i32_0 : i32, i32
  }
}

module attributes {stable_mosaic.version = 11 : i64} {
  func.func @_ln_linear_kernel(%arg0: i32, %arg1: memref<16x128xf32, #tpu.memory_space<vmem>>, %arg2: memref<1x128xf32, #tpu.memory_space<vmem>>, %arg3: memref<1x128xf32, #tpu.memory_space<vmem>>, %arg4: memref<128x128xbf16, #tpu.memory_space<vmem>>, %arg5: memref<1x128xf32, #tpu.memory_space<vmem>>, %arg6: memref<16x128xf32, #tpu.memory_space<vmem>>) attributes {dimension_semantics = [#tpu.dimension_semantics<parallel>], iteration_bounds = array<i64: 1>, scalar_prefetch = 0 : i64, scratch_operands = 0 : i64, tpu.core_type = #tpu.core_type<tc>, window_params = [{pipeline_mode = #tpu.pipeline_mode<synchronous>, transform_indices = @transform_0, window_bounds = array<i64: 16, 128>}, {pipeline_mode = #tpu.pipeline_mode<synchronous>, transform_indices = @transform_1, window_bounds = array<i64: 1, 128>}, {pipeline_mode = #tpu.pipeline_mode<synchronous>, transform_indices = @transform_2, window_bounds = array<i64: 1, 128>}, {transform_indices = @transform_3, window_bounds = array<i64: 128, 128>}, {transform_indices = @transform_4, window_bounds = array<i64: 1, 128>}, {transform_indices = @transform_5, window_bounds = array<i64: 16, 128>}]} {
    %c0 = arith.constant 0 : index
    %c0_0 = arith.constant 0 : index
    %0 = vector.load %arg1[%c0, %c0_0] : memref<16x128xf32, #tpu.memory_space<vmem>>, vector<16x128xf32>
    %c0_1 = arith.constant 0 : index
    %c0_2 = arith.constant 0 : index
    %1 = vector.load %arg2[%c0_1, %c0_2] : memref<1x128xf32, #tpu.memory_space<vmem>>, vector<1x128xf32>
    %c0_3 = arith.constant 0 : index
    %c0_4 = arith.constant 0 : index
    %2 = vector.load %arg3[%c0_3, %c0_4] : memref<1x128xf32, #tpu.memory_space<vmem>>, vector<1x128xf32>
    %cst = arith.constant dense<0.000000e+00> : vector<16xf32>
    %3 = vector.multi_reduction <add>, %0, %cst [1] : vector<16x128xf32> to vector<16xf32>
    %4 = vector.shape_cast %3 : vector<16xf32> to vector<16x1xf32>
    %cst_5 = arith.constant 1.280000e+02 : f32
    %5 = vector.broadcast %cst_5 : f32 to vector<16x1xf32>
    %6 = arith.divf %4, %5 : vector<16x1xf32>
    %7 = vector.broadcast %6 : vector<16x1xf32> to vector<16x128xf32>
    %8 = arith.subf %0, %7 : vector<16x128xf32>
    %9 = arith.mulf %8, %8 : vector<16x128xf32>
    %cst_6 = arith.constant dense<0.000000e+00> : vector<16xf32>
    %10 = vector.multi_reduction <add>, %9, %cst_6 [1] : vector<16x128xf32> to vector<16xf32>
    %11 = vector.shape_cast %10 : vector<16xf32> to vector<16x1xf32>
    %cst_7 = arith.constant 1.280000e+02 : f32
    %12 = vector.broadcast %cst_7 : f32 to vector<16x1xf32>
    %13 = arith.divf %11, %12 : vector<16x1xf32>
    %cst_8 = arith.constant 9.99999974E-6 : f32
    %14 = vector.broadcast %cst_8 : f32 to vector<16x1xf32>
    %15 = arith.addf %13, %14 : vector<16x1xf32>
    %16 = math.rsqrt %15 : vector<16x1xf32>
    %17 = vector.broadcast %16 : vector<16x1xf32> to vector<16x128xf32>
    %18 = arith.mulf %8, %17 : vector<16x128xf32>
    %19 = vector.broadcast %1 : vector<1x128xf32> to vector<16x128xf32>
    %20 = arith.mulf %18, %19 : vector<16x128xf32>
    %21 = vector.broadcast %2 : vector<1x128xf32> to vector<16x128xf32>
    %22 = arith.addf %20, %21 : vector<16x128xf32>
    %23 = arith.truncf %22 : vector<16x128xf32> to vector<16x128xbf16>
    %c0_9 = arith.constant 0 : index
    %c0_10 = arith.constant 0 : index
    %24 = vector.load %arg4[%c0_9, %c0_10] : memref<128x128xbf16, #tpu.memory_space<vmem>>, vector<128x128xbf16>
    %cst_11 = arith.constant dense<0.000000e+00> : vector<16x128xf32>
    %25 = tpu.matmul %23, %24, %cst_11 {dimension_numbers = #tpu.dot_dimension_numbers<[1], [0], [0], [1], [0, 0, 1, 1], [], []>} : vector<16x128xbf16>, vector<128x128xbf16>, vector<16x128xf32> -> vector<16x128xf32>
    %c0_12 = arith.constant 0 : index
    %c0_13 = arith.constant 0 : index
    %26 = vector.load %arg5[%c0_12, %c0_13] : memref<1x128xf32, #tpu.memory_space<vmem>>, vector<1x128xf32>
    %27 = vector.broadcast %26 : vector<1x128xf32> to vector<16x128xf32>
    %28 = arith.addf %25, %27 : vector<16x128xf32>
    %c0_14 = arith.constant 0 : index
    %c0_15 = arith.constant 0 : index
    %29 = vector.load %arg6[%c0_14, %c0_15] : memref<16x128xf32, #tpu.memory_space<vmem>>, vector<16x128xf32>
    tpu.vector_store %arg6[%c0_14, %c0_15], %28 {strides = array<i32>} : memref<16x128xf32, #tpu.memory_space<vmem>>, vector<16x128xf32>,
    return
  }
  func.func @transform_0(%arg0: i32) -> (i32, i32) {
    %c0_i32 = arith.constant 0 : i32
    %c0_i32_0 = arith.constant 0 : i32
    %c0_i32_1 = arith.constant 0 : i32
    return %c0_i32, %c0_i32_0 : i32, i32
  }
  func.func @transform_1(%arg0: i32) -> (i32, i32) {
    %c0_i32 = arith.constant 0 : i32
    %c0_i32_0 = arith.constant 0 : i32
    %c0_i32_1 = arith.constant 0 : i32
    return %c0_i32, %c0_i32_0 : i32, i32
  }
  func.func @transform_2(%arg0: i32) -> (i32, i32) {
    %c0_i32 = arith.constant 0 : i32
    %c0_i32_0 = arith.constant 0 : i32
    %c0_i32_1 = arith.constant 0 : i32
    return %c0_i32, %c0_i32_0 : i32, i32
  }
  func.func @transform_3(%arg0: i32) -> (i32, i32) {
    %c0_i32 = arith.constant 0 : i32
    %c0_i32_0 = arith.constant 0 : i32
    return %c0_i32, %arg0 : i32, i32
  }
  func.func @transform_4(%arg0: i32) -> (i32, i32) {
    %c0_i32 = arith.constant 0 : i32
    %c0_i32_0 = arith.constant 0 : i32
    return %c0_i32, %arg0 : i32, i32
  }
  func.func @transform_5(%arg0: i32) -> (i32, i32) {
    %c0_i32 = arith.constant 0 : i32
    %c0_i32_0 = arith.constant 0 : i32
    return %c0_i32, %arg0 : i32, i32
  }
}

module attributes {stable_mosaic.version = 11 : i64} {
  func.func @_stacked_block_kernel(%arg0: i32, %arg1: i32, %arg2: memref<1x8x128xf32, #tpu.memory_space<vmem>>, %arg3: memref<1x1x128xf32, #tpu.memory_space<vmem>>, %arg4: memref<1x1x128xf32, #tpu.memory_space<vmem>>, %arg5: memref<1x128x384xbf16, #tpu.memory_space<vmem>>, %arg6: memref<1x1x384xf32, #tpu.memory_space<vmem>>, %arg7: memref<1x128x128xbf16, #tpu.memory_space<vmem>>, %arg8: memref<1x1x128xf32, #tpu.memory_space<vmem>>, %arg9: memref<1x1x128xf32, #tpu.memory_space<vmem>>, %arg10: memref<1x1x128xf32, #tpu.memory_space<vmem>>, %arg11: memref<1x128x512xbf16, #tpu.memory_space<vmem>>, %arg12: memref<1x1x512xf32, #tpu.memory_space<vmem>>, %arg13: memref<1x512x128xbf16, #tpu.memory_space<vmem>>, %arg14: memref<1x1x128xf32, #tpu.memory_space<vmem>>, %arg15: memref<1x8x128xf32, #tpu.memory_space<vmem>>) attributes {dimension_semantics = [#tpu.dimension_semantics<parallel>, #tpu.dimension_semantics<arbitrary>], iteration_bounds = array<i64: 2, 2>, scalar_prefetch = 0 : i64, scratch_operands = 0 : i64, tpu.core_type = #tpu.core_type<tc>, window_params = [{transform_indices = @transform_0, window_bounds = array<i64: 1, 8, 128>}, {transform_indices = @transform_1, window_bounds = array<i64: 1, 1, 128>}, {transform_indices = @transform_2, window_bounds = array<i64: 1, 1, 128>}, {transform_indices = @transform_3, window_bounds = array<i64: 1, 128, 384>}, {transform_indices = @transform_4, window_bounds = array<i64: 1, 1, 384>}, {transform_indices = @transform_5, window_bounds = array<i64: 1, 128, 128>}, {transform_indices = @transform_6, window_bounds = array<i64: 1, 1, 128>}, {transform_indices = @transform_7, window_bounds = array<i64: 1, 1, 128>}, {transform_indices = @transform_8, window_bounds = array<i64: 1, 1, 128>}, {transform_indices = @transform_9, window_bounds = array<i64: 1, 128, 512>}, {transform_indices = @transform_10, window_bounds = array<i64: 1, 1, 512>}, {transform_indices = @transform_11, window_bounds = array<i64: 1, 512, 128>}, {transform_indices = @transform_12, window_bounds = array<i64: 1, 1, 128>}, {transform_indices = @transform_13, window_bounds = array<i64: 1, 8, 128>}]} {
    %c0_i32 = arith.constant 0 : i32
    %0 = arith.cmpi eq, %arg1, %c0_i32 : i32
    %1 = arith.extui %0 : i1 to i32
    %c0_i32_0 = arith.constant 0 : i32
    %2 = arith.cmpi ne, %1, %c0_i32_0 : i32
    scf.if %2 {
      %c0_66 = arith.constant 0 : index
      %c0_67 = arith.constant 0 : index
      %c0_68 = arith.constant 0 : index
      %178 = vector.load %arg2[%c0_66, %c0_67, %c0_68] : memref<1x8x128xf32, #tpu.memory_space<vmem>>, vector<1x8x128xf32>
      %179 = vector.shape_cast %178 : vector<1x8x128xf32> to vector<8x128xf32>
      %c0_69 = arith.constant 0 : index
      %c0_70 = arith.constant 0 : index
      %c0_71 = arith.constant 0 : index
      %180 = vector.load %arg15[%c0_69, %c0_70, %c0_71] : memref<1x8x128xf32, #tpu.memory_space<vmem>>, vector<1x8x128xf32>
      %181 = vector.shape_cast %180 : vector<1x8x128xf32> to vector<8x128xf32>
      %182 = vector.shape_cast %179 : vector<8x128xf32> to vector<1x8x128xf32>
      tpu.vector_store %arg15[%c0_69, %c0_70, %c0_71], %182 {strides = array<i32>} : memref<1x8x128xf32, #tpu.memory_space<vmem>>, vector<1x8x128xf32>,
    } else {
    }
    %c0 = arith.constant 0 : index
    %c0_1 = arith.constant 0 : index
    %c0_2 = arith.constant 0 : index
    %3 = vector.load %arg15[%c0, %c0_1, %c0_2] : memref<1x8x128xf32, #tpu.memory_space<vmem>>, vector<1x8x128xf32>
    %4 = vector.shape_cast %3 : vector<1x8x128xf32> to vector<8x128xf32>
    %5 = tpu.iota {dimensions = array<i32: 1>} : vector<8x8xi32>
    %c5_i32 = arith.constant 5 : i32
    %6 = vector.broadcast %c5_i32 : i32 to vector<8x8xi32>
    %7 = arith.cmpi slt, %5, %6 : vector<8x8xi32>
    %cst = arith.constant 0.000000e+00 : f32
    %cst_3 = arith.constant -1.000000e+30 : f32
    %8 = vector.broadcast %cst : f32 to vector<8x8xf32>
    %9 = vector.broadcast %cst_3 : f32 to vector<8x8xf32>
    %10 = arith.select %7, %8, %9 : vector<8x8xi1>, vector<8x8xf32>
    %c0_4 = arith.constant 0 : index
    %c0_5 = arith.constant 0 : index
    %c0_6 = arith.constant 0 : index
    %11 = vector.load %arg3[%c0_4, %c0_5, %c0_6] : memref<1x1x128xf32, #tpu.memory_space<vmem>>, vector<1x1x128xf32>
    %12 = vector.shape_cast %11 : vector<1x1x128xf32> to vector<1x128xf32>
    %c0_7 = arith.constant 0 : index
    %c0_8 = arith.constant 0 : index
    %c0_9 = arith.constant 0 : index
    %13 = vector.load %arg4[%c0_7, %c0_8, %c0_9] : memref<1x1x128xf32, #tpu.memory_space<vmem>>, vector<1x1x128xf32>
    %14 = vector.shape_cast %13 : vector<1x1x128xf32> to vector<1x128xf32>
    %cst_10 = arith.constant dense<0.000000e+00> : vector<8xf32>
    %15 = vector.multi_reduction <add>, %4, %cst_10 [1] : vector<8x128xf32> to vector<8xf32>
    %16 = vector.shape_cast %15 : vector<8xf32> to vector<8x1xf32>
    %cst_11 = arith.constant 1.280000e+02 : f32
    %17 = vector.broadcast %cst_11 : f32 to vector<8x1xf32>
    %18 = arith.divf %16, %17 : vector<8x1xf32>
    %19 = vector.broadcast %18 : vector<8x1xf32> to vector<8x128xf32>
    %20 = arith.subf %4, %19 : vector<8x128xf32>
    %21 = arith.mulf %20, %20 : vector<8x128xf32>
    %cst_12 = arith.constant dense<0.000000e+00> : vector<8xf32>
    %22 = vector.multi_reduction <add>, %21, %cst_12 [1] : vector<8x128xf32> to vector<8xf32>
    %23 = vector.shape_cast %22 : vector<8xf32> to vector<8x1xf32>
    %cst_13 = arith.constant 1.280000e+02 : f32
    %24 = vector.broadcast %cst_13 : f32 to vector<8x1xf32>
    %25 = arith.divf %23, %24 : vector<8x1xf32>
    %cst_14 = arith.constant 9.99999974E-6 : f32
    %26 = vector.broadcast %cst_14 : f32 to vector<8x1xf32>
    %27 = arith.addf %25, %26 : vector<8x1xf32>
    %28 = math.rsqrt %27 : vector<8x1xf32>
    %29 = vector.broadcast %28 : vector<8x1xf32> to vector<8x128xf32>
    %30 = arith.mulf %20, %29 : vector<8x128xf32>
    %31 = vector.broadcast %12 : vector<1x128xf32> to vector<8x128xf32>
    %32 = arith.mulf %30, %31 : vector<8x128xf32>
    %33 = vector.broadcast %14 : vector<1x128xf32> to vector<8x128xf32>
    %34 = arith.addf %32, %33 : vector<8x128xf32>
    %35 = arith.truncf %34 : vector<8x128xf32> to vector<8x128xbf16>
    %c0_15 = arith.constant 0 : index
    %c0_16 = arith.constant 0 : index
    %c0_17 = arith.constant 0 : index
    %36 = vector.load %arg5[%c0_15, %c0_16, %c0_17] : memref<1x128x384xbf16, #tpu.memory_space<vmem>>, vector<1x128x384xbf16>
    %37 = vector.shape_cast %36 : vector<1x128x384xbf16> to vector<128x384xbf16>
    %cst_18 = arith.constant dense<0.000000e+00> : vector<8x384xf32>
    %38 = tpu.matmul %35, %37, %cst_18 {dimension_numbers = #tpu.dot_dimension_numbers<[1], [0], [0], [1], [0, 0, 1, 1], [], []>} : vector<8x128xbf16>, vector<128x384xbf16>, vector<8x384xf32> -> vector<8x384xf32>
    %c0_19 = arith.constant 0 : index
    %c0_20 = arith.constant 0 : index
    %c0_21 = arith.constant 0 : index
    %39 = vector.load %arg6[%c0_19, %c0_20, %c0_21] : memref<1x1x384xf32, #tpu.memory_space<vmem>>, vector<1x1x384xf32>
    %40 = vector.shape_cast %39 : vector<1x1x384xf32> to vector<1x384xf32>
    %41 = vector.broadcast %40 : vector<1x384xf32> to vector<8x384xf32>
    %42 = arith.addf %38, %41 : vector<8x384xf32>
    %43 = vector.extract_strided_slice %42 {offsets = [0, 0], sizes = [8, 128], strides = [1, 1]} : vector<8x384xf32> to vector<8x128xf32>
    %44 = vector.extract_strided_slice %43 {offsets = [0, 0], sizes = [8, 32], strides = [1, 1]} : vector<8x128xf32> to vector<8x32xf32>
    %45 = arith.truncf %44 : vector<8x32xf32> to vector<8x32xbf16>
    %46 = vector.extract_strided_slice %43 {offsets = [0, 32], sizes = [8, 32], strides = [1, 1]} : vector<8x128xf32> to vector<8x32xf32>
    %47 = arith.truncf %46 : vector<8x32xf32> to vector<8x32xbf16>
    %48 = vector.extract_strided_slice %43 {offsets = [0, 64], sizes = [8, 32], strides = [1, 1]} : vector<8x128xf32> to vector<8x32xf32>
    %49 = arith.truncf %48 : vector<8x32xf32> to vector<8x32xbf16>
    %50 = vector.extract_strided_slice %43 {offsets = [0, 96], sizes = [8, 32], strides = [1, 1]} : vector<8x128xf32> to vector<8x32xf32>
    %51 = arith.truncf %50 : vector<8x32xf32> to vector<8x32xbf16>
    %52 = vector.shape_cast %45 : vector<8x32xbf16> to vector<1x8x32xbf16>
    %53 = vector.shape_cast %47 : vector<8x32xbf16> to vector<1x8x32xbf16>
    %54 = vector.shape_cast %49 : vector<8x32xbf16> to vector<1x8x32xbf16>
    %55 = vector.shape_cast %51 : vector<8x32xbf16> to vector<1x8x32xbf16>
    %56 = tpu.concatenate %52, %53, %54, %55 in 0 : vector<1x8x32xbf16>, vector<1x8x32xbf16>, vector<1x8x32xbf16>, vector<1x8x32xbf16> -> vector<4x8x32xbf16>
    %57 = vector.extract_strided_slice %42 {offsets = [0, 128], sizes = [8, 128], strides = [1, 1]} : vector<8x384xf32> to vector<8x128xf32>
    %58 = vector.extract_strided_slice %57 {offsets = [0, 0], sizes = [8, 32], strides = [1, 1]} : vector<8x128xf32> to vector<8x32xf32>
    %59 = arith.truncf %58 : vector<8x32xf32> to vector<8x32xbf16>
    %60 = vector.extract_strided_slice %57 {offsets = [0, 32], sizes = [8, 32], strides = [1, 1]} : vector<8x128xf32> to vector<8x32xf32>
    %61 = arith.truncf %60 : vector<8x32xf32> to vector<8x32xbf16>
    %62 = vector.extract_strided_slice %57 {offsets = [0, 64], sizes = [8, 32], strides = [1, 1]} : vector<8x128xf32> to vector<8x32xf32>
    %63 = arith.truncf %62 : vector<8x32xf32> to vector<8x32xbf16>
    %64 = vector.extract_strided_slice %57 {offsets = [0, 96], sizes = [8, 32], strides = [1, 1]} : vector<8x128xf32> to vector<8x32xf32>
    %65 = arith.truncf %64 : vector<8x32xf32> to vector<8x32xbf16>
    %66 = vector.shape_cast %59 : vector<8x32xbf16> to vector<1x8x32xbf16>
    %67 = vector.shape_cast %61 : vector<8x32xbf16> to vector<1x8x32xbf16>
    %68 = vector.shape_cast %63 : vector<8x32xbf16> to vector<1x8x32xbf16>
    %69 = vector.shape_cast %65 : vector<8x32xbf16> to vector<1x8x32xbf16>
    %70 = tpu.concatenate %66, %67, %68, %69 in 0 : vector<1x8x32xbf16>, vector<1x8x32xbf16>, vector<1x8x32xbf16>, vector<1x8x32xbf16> -> vector<4x8x32xbf16>
    %71 = vector.extract_strided_slice %42 {offsets = [0, 256], sizes = [8, 128], strides = [1, 1]} : vector<8x384xf32> to vector<8x128xf32>
    %72 = vector.extract_strided_slice %71 {offsets = [0, 0], sizes = [8, 32], strides = [1, 1]} : vector<8x128xf32> to vector<8x32xf32>
    %73 = arith.truncf %72 : vector<8x32xf32> to vector<8x32xbf16>
    %74 = vector.extract_strided_slice %71 {offsets = [0, 32], sizes = [8, 32], strides = [1, 1]} : vector<8x128xf32> to vector<8x32xf32>
    %75 = arith.truncf %74 : vector<8x32xf32> to vector<8x32xbf16>
    %76 = vector.extract_strided_slice %71 {offsets = [0, 64], sizes = [8, 32], strides = [1, 1]} : vector<8x128xf32> to vector<8x32xf32>
    %77 = arith.truncf %76 : vector<8x32xf32> to vector<8x32xbf16>
    %78 = vector.extract_strided_slice %71 {offsets = [0, 96], sizes = [8, 32], strides = [1, 1]} : vector<8x128xf32> to vector<8x32xf32>
    %79 = arith.truncf %78 : vector<8x32xf32> to vector<8x32xbf16>
    %80 = vector.shape_cast %73 : vector<8x32xbf16> to vector<1x8x32xbf16>
    %81 = vector.shape_cast %75 : vector<8x32xbf16> to vector<1x8x32xbf16>
    %82 = vector.shape_cast %77 : vector<8x32xbf16> to vector<1x8x32xbf16>
    %83 = vector.shape_cast %79 : vector<8x32xbf16> to vector<1x8x32xbf16>
    %84 = tpu.concatenate %80, %81, %82, %83 in 0 : vector<1x8x32xbf16>, vector<1x8x32xbf16>, vector<1x8x32xbf16>, vector<1x8x32xbf16> -> vector<4x8x32xbf16>
    "tpu.trace_start"() <{level = 10 : i32, message = "hqd,hkd->hqk"}> : () -> ()
    %cst_22 = arith.constant dense<0.000000e+00> : vector<4x8x8xf32>
    %85 = tpu.matmul %56, %70, %cst_22 {dimension_numbers = #tpu.dot_dimension_numbers<[2], [2], [1], [1], [0, 0, 0, 1, 1, 1], [0], [0]>} : vector<4x8x32xbf16>, vector<4x8x32xbf16>, vector<4x8x8xf32> -> vector<4x8x8xf32>
    "tpu.trace_stop"() : () -> ()
    %cst_23 = arith.constant 0.176776692 : f32
    %86 = vector.broadcast %cst_23 : f32 to vector<4x8x8xf32>
    %87 = arith.mulf %85, %86 : vector<4x8x8xf32>
    %88 = vector.shape_cast %10 : vector<8x8xf32> to vector<1x8x8xf32>
    %89 = vector.broadcast %88 : vector<1x8x8xf32> to vector<4x8x8xf32>
    %90 = arith.addf %87, %89 : vector<4x8x8xf32>
    %cst_24 = arith.constant dense<0xFF800000> : vector<4x8xf32>
    %91 = vector.multi_reduction <maximumf>, %90, %cst_24 [2] : vector<4x8x8xf32> to vector<4x8xf32>
    %92 = vector.shape_cast %91 : vector<4x8xf32> to vector<4x8x1xf32>
    %93 = vector.broadcast %92 : vector<4x8x1xf32> to vector<4x8x8xf32>
    %94 = arith.subf %90, %93 : vector<4x8x8xf32>
    %95 = math.exp %94 : vector<4x8x8xf32>
    %cst_25 = arith.constant dense<0.000000e+00> : vector<4x8xf32>
    %96 = vector.multi_reduction <add>, %95, %cst_25 [2] : vector<4x8x8xf32> to vector<4x8xf32>
    %97 = vector.shape_cast %96 : vector<4x8xf32> to vector<4x8x1xf32>
    %98 = tpu.reciprocal %97 {approx = true} : vector<4x8x1xf32> -> vector<4x8x1xf32>
    %99 = vector.broadcast %98 : vector<4x8x1xf32> to vector<4x8x8xf32>
    %100 = arith.mulf %95, %99 : vector<4x8x8xf32>
    %101 = arith.truncf %100 : vector<4x8x8xf32> to vector<4x8x8xbf16>
    "tpu.trace_start"() <{level = 10 : i32, message = "hqk,hkd->hqd"}> : () -> ()
    %cst_26 = arith.constant dense<0.000000e+00> : vector<4x8x32xf32>
    %102 = tpu.matmul %101, %84, %cst_26 {dimension_numbers = #tpu.dot_dimension_numbers<[2], [1], [1], [2], [0, 0, 0, 1, 1, 2], [0], [0]>} : vector<4x8x8xbf16>, vector<4x8x32xbf16>, vector<4x8x32xf32> -> vector<4x8x32xf32>
    "tpu.trace_stop"() : () -> ()
    %103 = vector.extract_strided_slice %102 {offsets = [0, 0, 0], sizes = [1, 8, 32], strides = [1, 1, 1]} : vector<4x8x32xf32> to vector<1x8x32xf32>
    %104 = vector.shape_cast %103 : vector<1x8x32xf32> to vector<8x32xf32>
    %105 = vector.extract_strided_slice %102 {offsets = [1, 0, 0], sizes = [1, 8, 32], strides = [1, 1, 1]} : vector<4x8x32xf32> to vector<1x8x32xf32>
    %106 = vector.shape_cast %105 : vector<1x8x32xf32> to vector<8x32xf32>
    %107 = vector.extract_strided_slice %102 {offsets = [2, 0, 0], sizes = [1, 8, 32], strides = [1, 1, 1]} : vector<4x8x32xf32> to vector<1x8x32xf32>
    %108 = vector.shape_cast %107 : vector<1x8x32xf32> to vector<8x32xf32>
    %109 = vector.extract_strided_slice %102 {offsets = [3, 0, 0], sizes = [1, 8, 32], strides = [1, 1, 1]} : vector<4x8x32xf32> to vector<1x8x32xf32>
    %110 = vector.shape_cast %109 : vector<1x8x32xf32> to vector<8x32xf32>
    %111 = tpu.concatenate %104, %106, %108, %110 in 1 : vector<8x32xf32>, vector<8x32xf32>, vector<8x32xf32>, vector<8x32xf32> -> vector<8x128xf32>
    %112 = arith.truncf %111 : vector<8x128xf32> to vector<8x128xbf16>
    %c0_27 = arith.constant 0 : index
    %c0_28 = arith.constant 0 : index
    %c0_29 = arith.constant 0 : index
    %113 = vector.load %arg7[%c0_27, %c0_28, %c0_29] : memref<1x128x128xbf16, #tpu.memory_space<vmem>>, vector<1x128x128xbf16>
    %114 = vector.shape_cast %113 : vector<1x128x128xbf16> to vector<128x128xbf16>
    %cst_30 = arith.constant dense<0.000000e+00> : vector<8x128xf32>
    %115 = tpu.matmul %112, %114, %cst_30 {dimension_numbers = #tpu.dot_dimension_numbers<[1], [0], [0], [1], [0, 0, 1, 1], [], []>} : vector<8x128xbf16>, vector<128x128xbf16>, vector<8x128xf32> -> vector<8x128xf32>
    %116 = arith.addf %4, %115 : vector<8x128xf32>
    %c0_31 = arith.constant 0 : index
    %c0_32 = arith.constant 0 : index
    %c0_33 = arith.constant 0 : index
    %117 = vector.load %arg8[%c0_31, %c0_32, %c0_33] : memref<1x1x128xf32, #tpu.memory_space<vmem>>, vector<1x1x128xf32>
    %118 = vector.shape_cast %117 : vector<1x1x128xf32> to vector<1x128xf32>
    %119 = vector.broadcast %118 : vector<1x128xf32> to vector<8x128xf32>
    %120 = arith.addf %116, %119 : vector<8x128xf32>
    %c0_34 = arith.constant 0 : index
    %c0_35 = arith.constant 0 : index
    %c0_36 = arith.constant 0 : index
    %121 = vector.load %arg9[%c0_34, %c0_35, %c0_36] : memref<1x1x128xf32, #tpu.memory_space<vmem>>, vector<1x1x128xf32>
    %122 = vector.shape_cast %121 : vector<1x1x128xf32> to vector<1x128xf32>
    %c0_37 = arith.constant 0 : index
    %c0_38 = arith.constant 0 : index
    %c0_39 = arith.constant 0 : index
    %123 = vector.load %arg10[%c0_37, %c0_38, %c0_39] : memref<1x1x128xf32, #tpu.memory_space<vmem>>, vector<1x1x128xf32>
    %124 = vector.shape_cast %123 : vector<1x1x128xf32> to vector<1x128xf32>
    %cst_40 = arith.constant dense<0.000000e+00> : vector<8xf32>
    %125 = vector.multi_reduction <add>, %120, %cst_40 [1] : vector<8x128xf32> to vector<8xf32>
    %126 = vector.shape_cast %125 : vector<8xf32> to vector<8x1xf32>
    %cst_41 = arith.constant 1.280000e+02 : f32
    %127 = vector.broadcast %cst_41 : f32 to vector<8x1xf32>
    %128 = arith.divf %126, %127 : vector<8x1xf32>
    %129 = vector.broadcast %128 : vector<8x1xf32> to vector<8x128xf32>
    %130 = arith.subf %120, %129 : vector<8x128xf32>
    %131 = arith.mulf %130, %130 : vector<8x128xf32>
    %cst_42 = arith.constant dense<0.000000e+00> : vector<8xf32>
    %132 = vector.multi_reduction <add>, %131, %cst_42 [1] : vector<8x128xf32> to vector<8xf32>
    %133 = vector.shape_cast %132 : vector<8xf32> to vector<8x1xf32>
    %cst_43 = arith.constant 1.280000e+02 : f32
    %134 = vector.broadcast %cst_43 : f32 to vector<8x1xf32>
    %135 = arith.divf %133, %134 : vector<8x1xf32>
    %cst_44 = arith.constant 9.99999974E-6 : f32
    %136 = vector.broadcast %cst_44 : f32 to vector<8x1xf32>
    %137 = arith.addf %135, %136 : vector<8x1xf32>
    %138 = math.rsqrt %137 : vector<8x1xf32>
    %139 = vector.broadcast %138 : vector<8x1xf32> to vector<8x128xf32>
    %140 = arith.mulf %130, %139 : vector<8x128xf32>
    %141 = vector.broadcast %122 : vector<1x128xf32> to vector<8x128xf32>
    %142 = arith.mulf %140, %141 : vector<8x128xf32>
    %143 = vector.broadcast %124 : vector<1x128xf32> to vector<8x128xf32>
    %144 = arith.addf %142, %143 : vector<8x128xf32>
    %145 = arith.truncf %144 : vector<8x128xf32> to vector<8x128xbf16>
    %c0_45 = arith.constant 0 : index
    %c0_46 = arith.constant 0 : index
    %c0_47 = arith.constant 0 : index
    %146 = vector.load %arg11[%c0_45, %c0_46, %c0_47] : memref<1x128x512xbf16, #tpu.memory_space<vmem>>, vector<1x128x512xbf16>
    %147 = vector.shape_cast %146 : vector<1x128x512xbf16> to vector<128x512xbf16>
    %cst_48 = arith.constant dense<0.000000e+00> : vector<8x512xf32>
    %148 = tpu.matmul %145, %147, %cst_48 {dimension_numbers = #tpu.dot_dimension_numbers<[1], [0], [0], [1], [0, 0, 1, 1], [], []>} : vector<8x128xbf16>, vector<128x512xbf16>, vector<8x512xf32> -> vector<8x512xf32>
    %c0_49 = arith.constant 0 : index
    %c0_50 = arith.constant 0 : index
    %c0_51 = arith.constant 0 : index
    %149 = vector.load %arg12[%c0_49, %c0_50, %c0_51] : memref<1x1x512xf32, #tpu.memory_space<vmem>>, vector<1x1x512xf32>
    %150 = vector.shape_cast %149 : vector<1x1x512xf32> to vector<1x512xf32>
    %151 = vector.broadcast %150 : vector<1x512xf32> to vector<8x512xf32>
    %152 = arith.addf %148, %151 : vector<8x512xf32>
    %cst_52 = arith.constant 5.000000e-01 : f32
    %153 = vector.broadcast %cst_52 : f32 to vector<8x512xf32>
    %154 = arith.mulf %153, %152 : vector<8x512xf32>
    %cst_53 = arith.constant 4.471500e-02 : f32
    %155 = vector.broadcast %cst_53 : f32 to vector<8x512xf32>
    %156 = arith.mulf %155, %152 : vector<8x512xf32>
    %157 = arith.mulf %156, %152 : vector<8x512xf32>
    %158 = arith.mulf %157, %152 : vector<8x512xf32>
    %159 = arith.addf %152, %158 : vector<8x512xf32>
    %cst_54 = arith.constant 0.797884583 : f32
    %160 = vector.broadcast %cst_54 : f32 to vector<8x512xf32>
    %161 = arith.mulf %160, %159 : vector<8x512xf32>
    %162 = math.tanh %161 : vector<8x512xf32>
    %cst_55 = arith.constant 1.000000e+00 : f32
    %163 = vector.broadcast %cst_55 : f32 to vector<8x512xf32>
    %164 = arith.addf %163, %162 : vector<8x512xf32>
    %165 = arith.mulf %154, %164 : vector<8x512xf32>
    %166 = arith.truncf %165 : vector<8x512xf32> to vector<8x512xbf16>
    %c0_56 = arith.constant 0 : index
    %c0_57 = arith.constant 0 : index
    %c0_58 = arith.constant 0 : index
    %167 = vector.load %arg13[%c0_56, %c0_57, %c0_58] : memref<1x512x128xbf16, #tpu.memory_space<vmem>>, vector<1x512x128xbf16>
    %168 = vector.shape_cast %167 : vector<1x512x128xbf16> to vector<512x128xbf16>
    %cst_59 = arith.constant dense<0.000000e+00> : vector<8x128xf32>
    %169 = tpu.matmul %166, %168, %cst_59 {dimension_numbers = #tpu.dot_dimension_numbers<[1], [0], [0], [1], [0, 0, 1, 1], [], []>} : vector<8x512xbf16>, vector<512x128xbf16>, vector<8x128xf32> -> vector<8x128xf32>
    %c0_60 = arith.constant 0 : index
    %c0_61 = arith.constant 0 : index
    %c0_62 = arith.constant 0 : index
    %170 = vector.load %arg14[%c0_60, %c0_61, %c0_62] : memref<1x1x128xf32, #tpu.memory_space<vmem>>, vector<1x1x128xf32>
    %171 = vector.shape_cast %170 : vector<1x1x128xf32> to vector<1x128xf32>
    %172 = vector.broadcast %171 : vector<1x128xf32> to vector<8x128xf32>
    %173 = arith.addf %169, %172 : vector<8x128xf32>
    %174 = arith.addf %120, %173 : vector<8x128xf32>
    %c0_63 = arith.constant 0 : index
    %c0_64 = arith.constant 0 : index
    %c0_65 = arith.constant 0 : index
    %175 = vector.load %arg15[%c0_63, %c0_64, %c0_65] : memref<1x8x128xf32, #tpu.memory_space<vmem>>, vector<1x8x128xf32>
    %176 = vector.shape_cast %175 : vector<1x8x128xf32> to vector<8x128xf32>
    %177 = vector.shape_cast %174 : vector<8x128xf32> to vector<1x8x128xf32>
    tpu.vector_store %arg15[%c0_63, %c0_64, %c0_65], %177 {strides = array<i32>} : memref<1x8x128xf32, #tpu.memory_space<vmem>>, vector<1x8x128xf32>,
    return
  }
  func.func @transform_0(%arg0: i32, %arg1: i32) -> (i32, i32, i32) {
    %c0_i32 = arith.constant 0 : i32
    %c0_i32_0 = arith.constant 0 : i32
    %c0_i32_1 = arith.constant 0 : i32
    return %arg0, %c0_i32, %c0_i32_0 : i32, i32, i32
  }
  func.func @transform_1(%arg0: i32, %arg1: i32) -> (i32, i32, i32) {
    %c0_i32 = arith.constant 0 : i32
    %c0_i32_0 = arith.constant 0 : i32
    %c0_i32_1 = arith.constant 0 : i32
    return %arg1, %c0_i32, %c0_i32_0 : i32, i32, i32
  }
  func.func @transform_2(%arg0: i32, %arg1: i32) -> (i32, i32, i32) {
    %c0_i32 = arith.constant 0 : i32
    %c0_i32_0 = arith.constant 0 : i32
    %c0_i32_1 = arith.constant 0 : i32
    return %arg1, %c0_i32, %c0_i32_0 : i32, i32, i32
  }
  func.func @transform_3(%arg0: i32, %arg1: i32) -> (i32, i32, i32) {
    %c0_i32 = arith.constant 0 : i32
    %c0_i32_0 = arith.constant 0 : i32
    %c0_i32_1 = arith.constant 0 : i32
    return %arg1, %c0_i32, %c0_i32_0 : i32, i32, i32
  }
  func.func @transform_4(%arg0: i32, %arg1: i32) -> (i32, i32, i32) {
    %c0_i32 = arith.constant 0 : i32
    %c0_i32_0 = arith.constant 0 : i32
    %c0_i32_1 = arith.constant 0 : i32
    return %arg1, %c0_i32, %c0_i32_0 : i32, i32, i32
  }
  func.func @transform_5(%arg0: i32, %arg1: i32) -> (i32, i32, i32) {
    %c0_i32 = arith.constant 0 : i32
    %c0_i32_0 = arith.constant 0 : i32
    %c0_i32_1 = arith.constant 0 : i32
    return %arg1, %c0_i32, %c0_i32_0 : i32, i32, i32
  }
  func.func @transform_6(%arg0: i32, %arg1: i32) -> (i32, i32, i32) {
    %c0_i32 = arith.constant 0 : i32
    %c0_i32_0 = arith.constant 0 : i32
    %c0_i32_1 = arith.constant 0 : i32
    return %arg1, %c0_i32, %c0_i32_0 : i32, i32, i32
  }
  func.func @transform_7(%arg0: i32, %arg1: i32) -> (i32, i32, i32) {
    %c0_i32 = arith.constant 0 : i32
    %c0_i32_0 = arith.constant 0 : i32
    %c0_i32_1 = arith.constant 0 : i32
    return %arg1, %c0_i32, %c0_i32_0 : i32, i32, i32
  }
  func.func @transform_8(%arg0: i32, %arg1: i32) -> (i32, i32, i32) {
    %c0_i32 = arith.constant 0 : i32
    %c0_i32_0 = arith.constant 0 : i32
    %c0_i32_1 = arith.constant 0 : i32
    return %arg1, %c0_i32, %c0_i32_0 : i32, i32, i32
  }
  func.func @transform_9(%arg0: i32, %arg1: i32) -> (i32, i32, i32) {
    %c0_i32 = arith.constant 0 : i32
    %c0_i32_0 = arith.constant 0 : i32
    %c0_i32_1 = arith.constant 0 : i32
    return %arg1, %c0_i32, %c0_i32_0 : i32, i32, i32
  }
  func.func @transform_10(%arg0: i32, %arg1: i32) -> (i32, i32, i32) {
    %c0_i32 = arith.constant 0 : i32
    %c0_i32_0 = arith.constant 0 : i32
    %c0_i32_1 = arith.constant 0 : i32
    return %arg1, %c0_i32, %c0_i32_0 : i32, i32, i32
  }
  func.func @transform_11(%arg0: i32, %arg1: i32) -> (i32, i32, i32) {
    %c0_i32 = arith.constant 0 : i32
    %c0_i32_0 = arith.constant 0 : i32
    %c0_i32_1 = arith.constant 0 : i32
    return %arg1, %c0_i32, %c0_i32_0 : i32, i32, i32
  }
  func.func @transform_12(%arg0: i32, %arg1: i32) -> (i32, i32, i32) {
    %c0_i32 = arith.constant 0 : i32
    %c0_i32_0 = arith.constant 0 : i32
    %c0_i32_1 = arith.constant 0 : i32
    return %arg1, %c0_i32, %c0_i32_0 : i32, i32, i32
  }
  func.func @transform_13(%arg0: i32, %arg1: i32) -> (i32, i32, i32) {
    %c0_i32 = arith.constant 0 : i32
    %c0_i32_0 = arith.constant 0 : i32
    %c0_i32_1 = arith.constant 0 : i32
    return %arg0, %c0_i32, %c0_i32_0 : i32, i32, i32
  }
}

module attributes {stable_mosaic.version = 11 : i64} {
  func.func @_ln_linear_kernel(%arg0: i32, %arg1: memref<32x128xf32, #tpu.memory_space<vmem>>, %arg2: memref<1x128xf32, #tpu.memory_space<vmem>>, %arg3: memref<1x128xf32, #tpu.memory_space<vmem>>, %arg4: memref<128x128xbf16, #tpu.memory_space<vmem>>, %arg5: memref<32x128xf32, #tpu.memory_space<vmem>>) attributes {dimension_semantics = [#tpu.dimension_semantics<parallel>], iteration_bounds = array<i64: 2>, scalar_prefetch = 0 : i64, scratch_operands = 0 : i64, tpu.core_type = #tpu.core_type<tc>, window_params = [{pipeline_mode = #tpu.pipeline_mode<synchronous>, transform_indices = @transform_0, window_bounds = array<i64: 32, 128>}, {pipeline_mode = #tpu.pipeline_mode<synchronous>, transform_indices = @transform_1, window_bounds = array<i64: 1, 128>}, {pipeline_mode = #tpu.pipeline_mode<synchronous>, transform_indices = @transform_2, window_bounds = array<i64: 1, 128>}, {transform_indices = @transform_3, window_bounds = array<i64: 128, 128>}, {transform_indices = @transform_4, window_bounds = array<i64: 32, 128>}]} {
    %c0 = arith.constant 0 : index
    %c0_0 = arith.constant 0 : index
    %0 = vector.load %arg1[%c0, %c0_0] : memref<32x128xf32, #tpu.memory_space<vmem>>, vector<32x128xf32>
    %c0_1 = arith.constant 0 : index
    %c0_2 = arith.constant 0 : index
    %1 = vector.load %arg2[%c0_1, %c0_2] : memref<1x128xf32, #tpu.memory_space<vmem>>, vector<1x128xf32>
    %c0_3 = arith.constant 0 : index
    %c0_4 = arith.constant 0 : index
    %2 = vector.load %arg3[%c0_3, %c0_4] : memref<1x128xf32, #tpu.memory_space<vmem>>, vector<1x128xf32>
    %cst = arith.constant dense<0.000000e+00> : vector<32xf32>
    %3 = vector.multi_reduction <add>, %0, %cst [1] : vector<32x128xf32> to vector<32xf32>
    %4 = vector.shape_cast %3 : vector<32xf32> to vector<32x1xf32>
    %cst_5 = arith.constant 1.280000e+02 : f32
    %5 = vector.broadcast %cst_5 : f32 to vector<32x1xf32>
    %6 = arith.divf %4, %5 : vector<32x1xf32>
    %7 = vector.broadcast %6 : vector<32x1xf32> to vector<32x128xf32>
    %8 = arith.subf %0, %7 : vector<32x128xf32>
    %9 = arith.mulf %8, %8 : vector<32x128xf32>
    %cst_6 = arith.constant dense<0.000000e+00> : vector<32xf32>
    %10 = vector.multi_reduction <add>, %9, %cst_6 [1] : vector<32x128xf32> to vector<32xf32>
    %11 = vector.shape_cast %10 : vector<32xf32> to vector<32x1xf32>
    %cst_7 = arith.constant 1.280000e+02 : f32
    %12 = vector.broadcast %cst_7 : f32 to vector<32x1xf32>
    %13 = arith.divf %11, %12 : vector<32x1xf32>
    %cst_8 = arith.constant 9.99999974E-6 : f32
    %14 = vector.broadcast %cst_8 : f32 to vector<32x1xf32>
    %15 = arith.addf %13, %14 : vector<32x1xf32>
    %16 = math.rsqrt %15 : vector<32x1xf32>
    %17 = vector.broadcast %16 : vector<32x1xf32> to vector<32x128xf32>
    %18 = arith.mulf %8, %17 : vector<32x128xf32>
    %19 = vector.broadcast %1 : vector<1x128xf32> to vector<32x128xf32>
    %20 = arith.mulf %18, %19 : vector<32x128xf32>
    %21 = vector.broadcast %2 : vector<1x128xf32> to vector<32x128xf32>
    %22 = arith.addf %20, %21 : vector<32x128xf32>
    %23 = arith.truncf %22 : vector<32x128xf32> to vector<32x128xbf16>
    %c0_9 = arith.constant 0 : index
    %c0_10 = arith.constant 0 : index
    %24 = vector.load %arg4[%c0_9, %c0_10] : memref<128x128xbf16, #tpu.memory_space<vmem>>, vector<128x128xbf16>
    %cst_11 = arith.constant dense<0.000000e+00> : vector<32x128xf32>
    %25 = tpu.matmul %23, %24, %cst_11 {dimension_numbers = #tpu.dot_dimension_numbers<[1], [0], [0], [1], [0, 0, 1, 1], [], []>} : vector<32x128xbf16>, vector<128x128xbf16>, vector<32x128xf32> -> vector<32x128xf32>
    %c0_12 = arith.constant 0 : index
    %c0_13 = arith.constant 0 : index
    %26 = vector.load %arg5[%c0_12, %c0_13] : memref<32x128xf32, #tpu.memory_space<vmem>>, vector<32x128xf32>
    tpu.vector_store %arg5[%c0_12, %c0_13], %25 {strides = array<i32>} : memref<32x128xf32, #tpu.memory_space<vmem>>, vector<32x128xf32>,
    return
  }
  func.func @transform_0(%arg0: i32) -> (i32, i32) {
    %c0_i32 = arith.constant 0 : i32
    %c0_i32_0 = arith.constant 0 : i32
    %c0_i32_1 = arith.constant 0 : i32
    return %c0_i32, %c0_i32_0 : i32, i32
  }
  func.func @transform_1(%arg0: i32) -> (i32, i32) {
    %c0_i32 = arith.constant 0 : i32
    %c0_i32_0 = arith.constant 0 : i32
    %c0_i32_1 = arith.constant 0 : i32
    return %c0_i32, %c0_i32_0 : i32, i32
  }
  func.func @transform_2(%arg0: i32) -> (i32, i32) {
    %c0_i32 = arith.constant 0 : i32
    %c0_i32_0 = arith.constant 0 : i32
    %c0_i32_1 = arith.constant 0 : i32
    return %c0_i32, %c0_i32_0 : i32, i32
  }
  func.func @transform_3(%arg0: i32) -> (i32, i32) {
    %c0_i32 = arith.constant 0 : i32
    %c0_i32_0 = arith.constant 0 : i32
    return %c0_i32, %arg0 : i32, i32
  }
  func.func @transform_4(%arg0: i32) -> (i32, i32) {
    %c0_i32 = arith.constant 0 : i32
    %c0_i32_0 = arith.constant 0 : i32
    return %c0_i32, %arg0 : i32, i32
  }
}

module attributes {stable_mosaic.version = 11 : i64} {
  func.func @_stacked_block_kernel(%arg0: i32, %arg1: i32, %arg2: memref<1x16x128xf32, #tpu.memory_space<vmem>>, %arg3: memref<1x1x128xf32, #tpu.memory_space<vmem>>, %arg4: memref<1x1x128xf32, #tpu.memory_space<vmem>>, %arg5: memref<1x128x384xbf16, #tpu.memory_space<vmem>>, %arg6: memref<1x1x384xf32, #tpu.memory_space<vmem>>, %arg7: memref<1x128x128xbf16, #tpu.memory_space<vmem>>, %arg8: memref<1x1x128xf32, #tpu.memory_space<vmem>>, %arg9: memref<1x1x128xf32, #tpu.memory_space<vmem>>, %arg10: memref<1x1x128xf32, #tpu.memory_space<vmem>>, %arg11: memref<1x128x512xbf16, #tpu.memory_space<vmem>>, %arg12: memref<1x1x512xf32, #tpu.memory_space<vmem>>, %arg13: memref<1x512x128xbf16, #tpu.memory_space<vmem>>, %arg14: memref<1x1x128xf32, #tpu.memory_space<vmem>>, %arg15: memref<1x16x128xf32, #tpu.memory_space<vmem>>) attributes {dimension_semantics = [#tpu.dimension_semantics<parallel>, #tpu.dimension_semantics<arbitrary>], iteration_bounds = array<i64: 2, 2>, scalar_prefetch = 0 : i64, scratch_operands = 0 : i64, tpu.core_type = #tpu.core_type<tc>, window_params = [{transform_indices = @transform_0, window_bounds = array<i64: 1, 16, 128>}, {transform_indices = @transform_1, window_bounds = array<i64: 1, 1, 128>}, {transform_indices = @transform_2, window_bounds = array<i64: 1, 1, 128>}, {transform_indices = @transform_3, window_bounds = array<i64: 1, 128, 384>}, {transform_indices = @transform_4, window_bounds = array<i64: 1, 1, 384>}, {transform_indices = @transform_5, window_bounds = array<i64: 1, 128, 128>}, {transform_indices = @transform_6, window_bounds = array<i64: 1, 1, 128>}, {transform_indices = @transform_7, window_bounds = array<i64: 1, 1, 128>}, {transform_indices = @transform_8, window_bounds = array<i64: 1, 1, 128>}, {transform_indices = @transform_9, window_bounds = array<i64: 1, 128, 512>}, {transform_indices = @transform_10, window_bounds = array<i64: 1, 1, 512>}, {transform_indices = @transform_11, window_bounds = array<i64: 1, 512, 128>}, {transform_indices = @transform_12, window_bounds = array<i64: 1, 1, 128>}, {transform_indices = @transform_13, window_bounds = array<i64: 1, 16, 128>}]} {
    %c0_i32 = arith.constant 0 : i32
    %0 = arith.cmpi eq, %arg1, %c0_i32 : i32
    %1 = arith.extui %0 : i1 to i32
    %c0_i32_0 = arith.constant 0 : i32
    %2 = arith.cmpi ne, %1, %c0_i32_0 : i32
    scf.if %2 {
      %c0_66 = arith.constant 0 : index
      %c0_67 = arith.constant 0 : index
      %c0_68 = arith.constant 0 : index
      %181 = vector.load %arg2[%c0_66, %c0_67, %c0_68] : memref<1x16x128xf32, #tpu.memory_space<vmem>>, vector<1x16x128xf32>
      %182 = vector.shape_cast %181 : vector<1x16x128xf32> to vector<16x128xf32>
      %c0_69 = arith.constant 0 : index
      %c0_70 = arith.constant 0 : index
      %c0_71 = arith.constant 0 : index
      %183 = vector.load %arg15[%c0_69, %c0_70, %c0_71] : memref<1x16x128xf32, #tpu.memory_space<vmem>>, vector<1x16x128xf32>
      %184 = vector.shape_cast %183 : vector<1x16x128xf32> to vector<16x128xf32>
      %185 = vector.shape_cast %182 : vector<16x128xf32> to vector<1x16x128xf32>
      tpu.vector_store %arg15[%c0_69, %c0_70, %c0_71], %185 {strides = array<i32>} : memref<1x16x128xf32, #tpu.memory_space<vmem>>, vector<1x16x128xf32>,
    } else {
    }
    %c0 = arith.constant 0 : index
    %c0_1 = arith.constant 0 : index
    %c0_2 = arith.constant 0 : index
    %3 = vector.load %arg15[%c0, %c0_1, %c0_2] : memref<1x16x128xf32, #tpu.memory_space<vmem>>, vector<1x16x128xf32>
    %4 = vector.shape_cast %3 : vector<1x16x128xf32> to vector<16x128xf32>
    %5 = tpu.iota {dimensions = array<i32: 0>} : vector<16x16xi32>
    %6 = tpu.iota {dimensions = array<i32: 1>} : vector<16x16xi32>
    %c13_i32 = arith.constant 13 : i32
    %7 = vector.broadcast %c13_i32 : i32 to vector<16x16xi32>
    %8 = arith.cmpi slt, %6, %7 : vector<16x16xi32>
    %9 = arith.cmpi sle, %6, %5 : vector<16x16xi32>
    %10 = arith.andi %8, %9 : vector<16x16xi1>
    %cst = arith.constant 0.000000e+00 : f32
    %cst_3 = arith.constant -1.000000e+30 : f32
    %11 = vector.broadcast %cst : f32 to vector<16x16xf32>
    %12 = vector.broadcast %cst_3 : f32 to vector<16x16xf32>
    %13 = arith.select %10, %11, %12 : vector<16x16xi1>, vector<16x16xf32>
    %c0_4 = arith.constant 0 : index
    %c0_5 = arith.constant 0 : index
    %c0_6 = arith.constant 0 : index
    %14 = vector.load %arg3[%c0_4, %c0_5, %c0_6] : memref<1x1x128xf32, #tpu.memory_space<vmem>>, vector<1x1x128xf32>
    %15 = vector.shape_cast %14 : vector<1x1x128xf32> to vector<1x128xf32>
    %c0_7 = arith.constant 0 : index
    %c0_8 = arith.constant 0 : index
    %c0_9 = arith.constant 0 : index
    %16 = vector.load %arg4[%c0_7, %c0_8, %c0_9] : memref<1x1x128xf32, #tpu.memory_space<vmem>>, vector<1x1x128xf32>
    %17 = vector.shape_cast %16 : vector<1x1x128xf32> to vector<1x128xf32>
    %cst_10 = arith.constant dense<0.000000e+00> : vector<16xf32>
    %18 = vector.multi_reduction <add>, %4, %cst_10 [1] : vector<16x128xf32> to vector<16xf32>
    %19 = vector.shape_cast %18 : vector<16xf32> to vector<16x1xf32>
    %cst_11 = arith.constant 1.280000e+02 : f32
    %20 = vector.broadcast %cst_11 : f32 to vector<16x1xf32>
    %21 = arith.divf %19, %20 : vector<16x1xf32>
    %22 = vector.broadcast %21 : vector<16x1xf32> to vector<16x128xf32>
    %23 = arith.subf %4, %22 : vector<16x128xf32>
    %24 = arith.mulf %23, %23 : vector<16x128xf32>
    %cst_12 = arith.constant dense<0.000000e+00> : vector<16xf32>
    %25 = vector.multi_reduction <add>, %24, %cst_12 [1] : vector<16x128xf32> to vector<16xf32>
    %26 = vector.shape_cast %25 : vector<16xf32> to vector<16x1xf32>
    %cst_13 = arith.constant 1.280000e+02 : f32
    %27 = vector.broadcast %cst_13 : f32 to vector<16x1xf32>
    %28 = arith.divf %26, %27 : vector<16x1xf32>
    %cst_14 = arith.constant 9.99999974E-6 : f32
    %29 = vector.broadcast %cst_14 : f32 to vector<16x1xf32>
    %30 = arith.addf %28, %29 : vector<16x1xf32>
    %31 = math.rsqrt %30 : vector<16x1xf32>
    %32 = vector.broadcast %31 : vector<16x1xf32> to vector<16x128xf32>
    %33 = arith.mulf %23, %32 : vector<16x128xf32>
    %34 = vector.broadcast %15 : vector<1x128xf32> to vector<16x128xf32>
    %35 = arith.mulf %33, %34 : vector<16x128xf32>
    %36 = vector.broadcast %17 : vector<1x128xf32> to vector<16x128xf32>
    %37 = arith.addf %35, %36 : vector<16x128xf32>
    %38 = arith.truncf %37 : vector<16x128xf32> to vector<16x128xbf16>
    %c0_15 = arith.constant 0 : index
    %c0_16 = arith.constant 0 : index
    %c0_17 = arith.constant 0 : index
    %39 = vector.load %arg5[%c0_15, %c0_16, %c0_17] : memref<1x128x384xbf16, #tpu.memory_space<vmem>>, vector<1x128x384xbf16>
    %40 = vector.shape_cast %39 : vector<1x128x384xbf16> to vector<128x384xbf16>
    %cst_18 = arith.constant dense<0.000000e+00> : vector<16x384xf32>
    %41 = tpu.matmul %38, %40, %cst_18 {dimension_numbers = #tpu.dot_dimension_numbers<[1], [0], [0], [1], [0, 0, 1, 1], [], []>} : vector<16x128xbf16>, vector<128x384xbf16>, vector<16x384xf32> -> vector<16x384xf32>
    %c0_19 = arith.constant 0 : index
    %c0_20 = arith.constant 0 : index
    %c0_21 = arith.constant 0 : index
    %42 = vector.load %arg6[%c0_19, %c0_20, %c0_21] : memref<1x1x384xf32, #tpu.memory_space<vmem>>, vector<1x1x384xf32>
    %43 = vector.shape_cast %42 : vector<1x1x384xf32> to vector<1x384xf32>
    %44 = vector.broadcast %43 : vector<1x384xf32> to vector<16x384xf32>
    %45 = arith.addf %41, %44 : vector<16x384xf32>
    %46 = vector.extract_strided_slice %45 {offsets = [0, 0], sizes = [16, 128], strides = [1, 1]} : vector<16x384xf32> to vector<16x128xf32>
    %47 = vector.extract_strided_slice %46 {offsets = [0, 0], sizes = [16, 32], strides = [1, 1]} : vector<16x128xf32> to vector<16x32xf32>
    %48 = arith.truncf %47 : vector<16x32xf32> to vector<16x32xbf16>
    %49 = vector.extract_strided_slice %46 {offsets = [0, 32], sizes = [16, 32], strides = [1, 1]} : vector<16x128xf32> to vector<16x32xf32>
    %50 = arith.truncf %49 : vector<16x32xf32> to vector<16x32xbf16>
    %51 = vector.extract_strided_slice %46 {offsets = [0, 64], sizes = [16, 32], strides = [1, 1]} : vector<16x128xf32> to vector<16x32xf32>
    %52 = arith.truncf %51 : vector<16x32xf32> to vector<16x32xbf16>
    %53 = vector.extract_strided_slice %46 {offsets = [0, 96], sizes = [16, 32], strides = [1, 1]} : vector<16x128xf32> to vector<16x32xf32>
    %54 = arith.truncf %53 : vector<16x32xf32> to vector<16x32xbf16>
    %55 = vector.shape_cast %48 : vector<16x32xbf16> to vector<1x16x32xbf16>
    %56 = vector.shape_cast %50 : vector<16x32xbf16> to vector<1x16x32xbf16>
    %57 = vector.shape_cast %52 : vector<16x32xbf16> to vector<1x16x32xbf16>
    %58 = vector.shape_cast %54 : vector<16x32xbf16> to vector<1x16x32xbf16>
    %59 = tpu.concatenate %55, %56, %57, %58 in 0 : vector<1x16x32xbf16>, vector<1x16x32xbf16>, vector<1x16x32xbf16>, vector<1x16x32xbf16> -> vector<4x16x32xbf16>
    %60 = vector.extract_strided_slice %45 {offsets = [0, 128], sizes = [16, 128], strides = [1, 1]} : vector<16x384xf32> to vector<16x128xf32>
    %61 = vector.extract_strided_slice %60 {offsets = [0, 0], sizes = [16, 32], strides = [1, 1]} : vector<16x128xf32> to vector<16x32xf32>
    %62 = arith.truncf %61 : vector<16x32xf32> to vector<16x32xbf16>
    %63 = vector.extract_strided_slice %60 {offsets = [0, 32], sizes = [16, 32], strides = [1, 1]} : vector<16x128xf32> to vector<16x32xf32>
    %64 = arith.truncf %63 : vector<16x32xf32> to vector<16x32xbf16>
    %65 = vector.extract_strided_slice %60 {offsets = [0, 64], sizes = [16, 32], strides = [1, 1]} : vector<16x128xf32> to vector<16x32xf32>
    %66 = arith.truncf %65 : vector<16x32xf32> to vector<16x32xbf16>
    %67 = vector.extract_strided_slice %60 {offsets = [0, 96], sizes = [16, 32], strides = [1, 1]} : vector<16x128xf32> to vector<16x32xf32>
    %68 = arith.truncf %67 : vector<16x32xf32> to vector<16x32xbf16>
    %69 = vector.shape_cast %62 : vector<16x32xbf16> to vector<1x16x32xbf16>
    %70 = vector.shape_cast %64 : vector<16x32xbf16> to vector<1x16x32xbf16>
    %71 = vector.shape_cast %66 : vector<16x32xbf16> to vector<1x16x32xbf16>
    %72 = vector.shape_cast %68 : vector<16x32xbf16> to vector<1x16x32xbf16>
    %73 = tpu.concatenate %69, %70, %71, %72 in 0 : vector<1x16x32xbf16>, vector<1x16x32xbf16>, vector<1x16x32xbf16>, vector<1x16x32xbf16> -> vector<4x16x32xbf16>
    %74 = vector.extract_strided_slice %45 {offsets = [0, 256], sizes = [16, 128], strides = [1, 1]} : vector<16x384xf32> to vector<16x128xf32>
    %75 = vector.extract_strided_slice %74 {offsets = [0, 0], sizes = [16, 32], strides = [1, 1]} : vector<16x128xf32> to vector<16x32xf32>
    %76 = arith.truncf %75 : vector<16x32xf32> to vector<16x32xbf16>
    %77 = vector.extract_strided_slice %74 {offsets = [0, 32], sizes = [16, 32], strides = [1, 1]} : vector<16x128xf32> to vector<16x32xf32>
    %78 = arith.truncf %77 : vector<16x32xf32> to vector<16x32xbf16>
    %79 = vector.extract_strided_slice %74 {offsets = [0, 64], sizes = [16, 32], strides = [1, 1]} : vector<16x128xf32> to vector<16x32xf32>
    %80 = arith.truncf %79 : vector<16x32xf32> to vector<16x32xbf16>
    %81 = vector.extract_strided_slice %74 {offsets = [0, 96], sizes = [16, 32], strides = [1, 1]} : vector<16x128xf32> to vector<16x32xf32>
    %82 = arith.truncf %81 : vector<16x32xf32> to vector<16x32xbf16>
    %83 = vector.shape_cast %76 : vector<16x32xbf16> to vector<1x16x32xbf16>
    %84 = vector.shape_cast %78 : vector<16x32xbf16> to vector<1x16x32xbf16>
    %85 = vector.shape_cast %80 : vector<16x32xbf16> to vector<1x16x32xbf16>
    %86 = vector.shape_cast %82 : vector<16x32xbf16> to vector<1x16x32xbf16>
    %87 = tpu.concatenate %83, %84, %85, %86 in 0 : vector<1x16x32xbf16>, vector<1x16x32xbf16>, vector<1x16x32xbf16>, vector<1x16x32xbf16> -> vector<4x16x32xbf16>
    "tpu.trace_start"() <{level = 10 : i32, message = "hqd,hkd->hqk"}> : () -> ()
    %cst_22 = arith.constant dense<0.000000e+00> : vector<4x16x16xf32>
    %88 = tpu.matmul %59, %73, %cst_22 {dimension_numbers = #tpu.dot_dimension_numbers<[2], [2], [1], [1], [0, 0, 0, 1, 1, 1], [0], [0]>} : vector<4x16x32xbf16>, vector<4x16x32xbf16>, vector<4x16x16xf32> -> vector<4x16x16xf32>
    "tpu.trace_stop"() : () -> ()
    %cst_23 = arith.constant 0.176776692 : f32
    %89 = vector.broadcast %cst_23 : f32 to vector<4x16x16xf32>
    %90 = arith.mulf %88, %89 : vector<4x16x16xf32>
    %91 = vector.shape_cast %13 : vector<16x16xf32> to vector<1x16x16xf32>
    %92 = vector.broadcast %91 : vector<1x16x16xf32> to vector<4x16x16xf32>
    %93 = arith.addf %90, %92 : vector<4x16x16xf32>
    %cst_24 = arith.constant dense<0xFF800000> : vector<4x16xf32>
    %94 = vector.multi_reduction <maximumf>, %93, %cst_24 [2] : vector<4x16x16xf32> to vector<4x16xf32>
    %95 = vector.shape_cast %94 : vector<4x16xf32> to vector<4x16x1xf32>
    %96 = vector.broadcast %95 : vector<4x16x1xf32> to vector<4x16x16xf32>
    %97 = arith.subf %93, %96 : vector<4x16x16xf32>
    %98 = math.exp %97 : vector<4x16x16xf32>
    %cst_25 = arith.constant dense<0.000000e+00> : vector<4x16xf32>
    %99 = vector.multi_reduction <add>, %98, %cst_25 [2] : vector<4x16x16xf32> to vector<4x16xf32>
    %100 = vector.shape_cast %99 : vector<4x16xf32> to vector<4x16x1xf32>
    %101 = tpu.reciprocal %100 {approx = true} : vector<4x16x1xf32> -> vector<4x16x1xf32>
    %102 = vector.broadcast %101 : vector<4x16x1xf32> to vector<4x16x16xf32>
    %103 = arith.mulf %98, %102 : vector<4x16x16xf32>
    %104 = arith.truncf %103 : vector<4x16x16xf32> to vector<4x16x16xbf16>
    "tpu.trace_start"() <{level = 10 : i32, message = "hqk,hkd->hqd"}> : () -> ()
    %cst_26 = arith.constant dense<0.000000e+00> : vector<4x16x32xf32>
    %105 = tpu.matmul %104, %87, %cst_26 {dimension_numbers = #tpu.dot_dimension_numbers<[2], [1], [1], [2], [0, 0, 0, 1, 1, 2], [0], [0]>} : vector<4x16x16xbf16>, vector<4x16x32xbf16>, vector<4x16x32xf32> -> vector<4x16x32xf32>
    "tpu.trace_stop"() : () -> ()
    %106 = vector.extract_strided_slice %105 {offsets = [0, 0, 0], sizes = [1, 16, 32], strides = [1, 1, 1]} : vector<4x16x32xf32> to vector<1x16x32xf32>
    %107 = vector.shape_cast %106 : vector<1x16x32xf32> to vector<16x32xf32>
    %108 = vector.extract_strided_slice %105 {offsets = [1, 0, 0], sizes = [1, 16, 32], strides = [1, 1, 1]} : vector<4x16x32xf32> to vector<1x16x32xf32>
    %109 = vector.shape_cast %108 : vector<1x16x32xf32> to vector<16x32xf32>
    %110 = vector.extract_strided_slice %105 {offsets = [2, 0, 0], sizes = [1, 16, 32], strides = [1, 1, 1]} : vector<4x16x32xf32> to vector<1x16x32xf32>
    %111 = vector.shape_cast %110 : vector<1x16x32xf32> to vector<16x32xf32>
    %112 = vector.extract_strided_slice %105 {offsets = [3, 0, 0], sizes = [1, 16, 32], strides = [1, 1, 1]} : vector<4x16x32xf32> to vector<1x16x32xf32>
    %113 = vector.shape_cast %112 : vector<1x16x32xf32> to vector<16x32xf32>
    %114 = tpu.concatenate %107, %109, %111, %113 in 1 : vector<16x32xf32>, vector<16x32xf32>, vector<16x32xf32>, vector<16x32xf32> -> vector<16x128xf32>
    %115 = arith.truncf %114 : vector<16x128xf32> to vector<16x128xbf16>
    %c0_27 = arith.constant 0 : index
    %c0_28 = arith.constant 0 : index
    %c0_29 = arith.constant 0 : index
    %116 = vector.load %arg7[%c0_27, %c0_28, %c0_29] : memref<1x128x128xbf16, #tpu.memory_space<vmem>>, vector<1x128x128xbf16>
    %117 = vector.shape_cast %116 : vector<1x128x128xbf16> to vector<128x128xbf16>
    %cst_30 = arith.constant dense<0.000000e+00> : vector<16x128xf32>
    %118 = tpu.matmul %115, %117, %cst_30 {dimension_numbers = #tpu.dot_dimension_numbers<[1], [0], [0], [1], [0, 0, 1, 1], [], []>} : vector<16x128xbf16>, vector<128x128xbf16>, vector<16x128xf32> -> vector<16x128xf32>
    %119 = arith.addf %4, %118 : vector<16x128xf32>
    %c0_31 = arith.constant 0 : index
    %c0_32 = arith.constant 0 : index
    %c0_33 = arith.constant 0 : index
    %120 = vector.load %arg8[%c0_31, %c0_32, %c0_33] : memref<1x1x128xf32, #tpu.memory_space<vmem>>, vector<1x1x128xf32>
    %121 = vector.shape_cast %120 : vector<1x1x128xf32> to vector<1x128xf32>
    %122 = vector.broadcast %121 : vector<1x128xf32> to vector<16x128xf32>
    %123 = arith.addf %119, %122 : vector<16x128xf32>
    %c0_34 = arith.constant 0 : index
    %c0_35 = arith.constant 0 : index
    %c0_36 = arith.constant 0 : index
    %124 = vector.load %arg9[%c0_34, %c0_35, %c0_36] : memref<1x1x128xf32, #tpu.memory_space<vmem>>, vector<1x1x128xf32>
    %125 = vector.shape_cast %124 : vector<1x1x128xf32> to vector<1x128xf32>
    %c0_37 = arith.constant 0 : index
    %c0_38 = arith.constant 0 : index
    %c0_39 = arith.constant 0 : index
    %126 = vector.load %arg10[%c0_37, %c0_38, %c0_39] : memref<1x1x128xf32, #tpu.memory_space<vmem>>, vector<1x1x128xf32>
    %127 = vector.shape_cast %126 : vector<1x1x128xf32> to vector<1x128xf32>
    %cst_40 = arith.constant dense<0.000000e+00> : vector<16xf32>
    %128 = vector.multi_reduction <add>, %123, %cst_40 [1] : vector<16x128xf32> to vector<16xf32>
    %129 = vector.shape_cast %128 : vector<16xf32> to vector<16x1xf32>
    %cst_41 = arith.constant 1.280000e+02 : f32
    %130 = vector.broadcast %cst_41 : f32 to vector<16x1xf32>
    %131 = arith.divf %129, %130 : vector<16x1xf32>
    %132 = vector.broadcast %131 : vector<16x1xf32> to vector<16x128xf32>
    %133 = arith.subf %123, %132 : vector<16x128xf32>
    %134 = arith.mulf %133, %133 : vector<16x128xf32>
    %cst_42 = arith.constant dense<0.000000e+00> : vector<16xf32>
    %135 = vector.multi_reduction <add>, %134, %cst_42 [1] : vector<16x128xf32> to vector<16xf32>
    %136 = vector.shape_cast %135 : vector<16xf32> to vector<16x1xf32>
    %cst_43 = arith.constant 1.280000e+02 : f32
    %137 = vector.broadcast %cst_43 : f32 to vector<16x1xf32>
    %138 = arith.divf %136, %137 : vector<16x1xf32>
    %cst_44 = arith.constant 9.99999974E-6 : f32
    %139 = vector.broadcast %cst_44 : f32 to vector<16x1xf32>
    %140 = arith.addf %138, %139 : vector<16x1xf32>
    %141 = math.rsqrt %140 : vector<16x1xf32>
    %142 = vector.broadcast %141 : vector<16x1xf32> to vector<16x128xf32>
    %143 = arith.mulf %133, %142 : vector<16x128xf32>
    %144 = vector.broadcast %125 : vector<1x128xf32> to vector<16x128xf32>
    %145 = arith.mulf %143, %144 : vector<16x128xf32>
    %146 = vector.broadcast %127 : vector<1x128xf32> to vector<16x128xf32>
    %147 = arith.addf %145, %146 : vector<16x128xf32>
    %148 = arith.truncf %147 : vector<16x128xf32> to vector<16x128xbf16>
    %c0_45 = arith.constant 0 : index
    %c0_46 = arith.constant 0 : index
    %c0_47 = arith.constant 0 : index
    %149 = vector.load %arg11[%c0_45, %c0_46, %c0_47] : memref<1x128x512xbf16, #tpu.memory_space<vmem>>, vector<1x128x512xbf16>
    %150 = vector.shape_cast %149 : vector<1x128x512xbf16> to vector<128x512xbf16>
    %cst_48 = arith.constant dense<0.000000e+00> : vector<16x512xf32>
    %151 = tpu.matmul %148, %150, %cst_48 {dimension_numbers = #tpu.dot_dimension_numbers<[1], [0], [0], [1], [0, 0, 1, 1], [], []>} : vector<16x128xbf16>, vector<128x512xbf16>, vector<16x512xf32> -> vector<16x512xf32>
    %c0_49 = arith.constant 0 : index
    %c0_50 = arith.constant 0 : index
    %c0_51 = arith.constant 0 : index
    %152 = vector.load %arg12[%c0_49, %c0_50, %c0_51] : memref<1x1x512xf32, #tpu.memory_space<vmem>>, vector<1x1x512xf32>
    %153 = vector.shape_cast %152 : vector<1x1x512xf32> to vector<1x512xf32>
    %154 = vector.broadcast %153 : vector<1x512xf32> to vector<16x512xf32>
    %155 = arith.addf %151, %154 : vector<16x512xf32>
    %cst_52 = arith.constant 5.000000e-01 : f32
    %156 = vector.broadcast %cst_52 : f32 to vector<16x512xf32>
    %157 = arith.mulf %156, %155 : vector<16x512xf32>
    %cst_53 = arith.constant 4.471500e-02 : f32
    %158 = vector.broadcast %cst_53 : f32 to vector<16x512xf32>
    %159 = arith.mulf %158, %155 : vector<16x512xf32>
    %160 = arith.mulf %159, %155 : vector<16x512xf32>
    %161 = arith.mulf %160, %155 : vector<16x512xf32>
    %162 = arith.addf %155, %161 : vector<16x512xf32>
    %cst_54 = arith.constant 0.797884583 : f32
    %163 = vector.broadcast %cst_54 : f32 to vector<16x512xf32>
    %164 = arith.mulf %163, %162 : vector<16x512xf32>
    %165 = math.tanh %164 : vector<16x512xf32>
    %cst_55 = arith.constant 1.000000e+00 : f32
    %166 = vector.broadcast %cst_55 : f32 to vector<16x512xf32>
    %167 = arith.addf %166, %165 : vector<16x512xf32>
    %168 = arith.mulf %157, %167 : vector<16x512xf32>
    %169 = arith.truncf %168 : vector<16x512xf32> to vector<16x512xbf16>
    %c0_56 = arith.constant 0 : index
    %c0_57 = arith.constant 0 : index
    %c0_58 = arith.constant 0 : index
    %170 = vector.load %arg13[%c0_56, %c0_57, %c0_58] : memref<1x512x128xbf16, #tpu.memory_space<vmem>>, vector<1x512x128xbf16>
    %171 = vector.shape_cast %170 : vector<1x512x128xbf16> to vector<512x128xbf16>
    %cst_59 = arith.constant dense<0.000000e+00> : vector<16x128xf32>
    %172 = tpu.matmul %169, %171, %cst_59 {dimension_numbers = #tpu.dot_dimension_numbers<[1], [0], [0], [1], [0, 0, 1, 1], [], []>} : vector<16x512xbf16>, vector<512x128xbf16>, vector<16x128xf32> -> vector<16x128xf32>
    %c0_60 = arith.constant 0 : index
    %c0_61 = arith.constant 0 : index
    %c0_62 = arith.constant 0 : index
    %173 = vector.load %arg14[%c0_60, %c0_61, %c0_62] : memref<1x1x128xf32, #tpu.memory_space<vmem>>, vector<1x1x128xf32>
    %174 = vector.shape_cast %173 : vector<1x1x128xf32> to vector<1x128xf32>
    %175 = vector.broadcast %174 : vector<1x128xf32> to vector<16x128xf32>
    %176 = arith.addf %172, %175 : vector<16x128xf32>
    %177 = arith.addf %123, %176 : vector<16x128xf32>
    %c0_63 = arith.constant 0 : index
    %c0_64 = arith.constant 0 : index
    %c0_65 = arith.constant 0 : index
    %178 = vector.load %arg15[%c0_63, %c0_64, %c0_65] : memref<1x16x128xf32, #tpu.memory_space<vmem>>, vector<1x16x128xf32>
    %179 = vector.shape_cast %178 : vector<1x16x128xf32> to vector<16x128xf32>
    %180 = vector.shape_cast %177 : vector<16x128xf32> to vector<1x16x128xf32>
    tpu.vector_store %arg15[%c0_63, %c0_64, %c0_65], %180 {strides = array<i32>} : memref<1x16x128xf32, #tpu.memory_space<vmem>>, vector<1x16x128xf32>,
    return
  }
  func.func @transform_0(%arg0: i32, %arg1: i32) -> (i32, i32, i32) {
    %c0_i32 = arith.constant 0 : i32
    %c0_i32_0 = arith.constant 0 : i32
    %c0_i32_1 = arith.constant 0 : i32
    return %arg0, %c0_i32, %c0_i32_0 : i32, i32, i32
  }
  func.func @transform_1(%arg0: i32, %arg1: i32) -> (i32, i32, i32) {
    %c0_i32 = arith.constant 0 : i32
    %c0_i32_0 = arith.constant 0 : i32
    %c0_i32_1 = arith.constant 0 : i32
    return %arg1, %c0_i32, %c0_i32_0 : i32, i32, i32
  }
  func.func @transform_2(%arg0: i32, %arg1: i32) -> (i32, i32, i32) {
    %c0_i32 = arith.constant 0 : i32
    %c0_i32_0 = arith.constant 0 : i32
    %c0_i32_1 = arith.constant 0 : i32
    return %arg1, %c0_i32, %c0_i32_0 : i32, i32, i32
  }
  func.func @transform_3(%arg0: i32, %arg1: i32) -> (i32, i32, i32) {
    %c0_i32 = arith.constant 0 : i32
    %c0_i32_0 = arith.constant 0 : i32
    %c0_i32_1 = arith.constant 0 : i32
    return %arg1, %c0_i32, %c0_i32_0 : i32, i32, i32
  }
  func.func @transform_4(%arg0: i32, %arg1: i32) -> (i32, i32, i32) {
    %c0_i32 = arith.constant 0 : i32
    %c0_i32_0 = arith.constant 0 : i32
    %c0_i32_1 = arith.constant 0 : i32
    return %arg1, %c0_i32, %c0_i32_0 : i32, i32, i32
  }
  func.func @transform_5(%arg0: i32, %arg1: i32) -> (i32, i32, i32) {
    %c0_i32 = arith.constant 0 : i32
    %c0_i32_0 = arith.constant 0 : i32
    %c0_i32_1 = arith.constant 0 : i32
    return %arg1, %c0_i32, %c0_i32_0 : i32, i32, i32
  }
  func.func @transform_6(%arg0: i32, %arg1: i32) -> (i32, i32, i32) {
    %c0_i32 = arith.constant 0 : i32
    %c0_i32_0 = arith.constant 0 : i32
    %c0_i32_1 = arith.constant 0 : i32
    return %arg1, %c0_i32, %c0_i32_0 : i32, i32, i32
  }
  func.func @transform_7(%arg0: i32, %arg1: i32) -> (i32, i32, i32) {
    %c0_i32 = arith.constant 0 : i32
    %c0_i32_0 = arith.constant 0 : i32
    %c0_i32_1 = arith.constant 0 : i32
    return %arg1, %c0_i32, %c0_i32_0 : i32, i32, i32
  }
  func.func @transform_8(%arg0: i32, %arg1: i32) -> (i32, i32, i32) {
    %c0_i32 = arith.constant 0 : i32
    %c0_i32_0 = arith.constant 0 : i32
    %c0_i32_1 = arith.constant 0 : i32
    return %arg1, %c0_i32, %c0_i32_0 : i32, i32, i32
  }
  func.func @transform_9(%arg0: i32, %arg1: i32) -> (i32, i32, i32) {
    %c0_i32 = arith.constant 0 : i32
    %c0_i32_0 = arith.constant 0 : i32
    %c0_i32_1 = arith.constant 0 : i32
    return %arg1, %c0_i32, %c0_i32_0 : i32, i32, i32
  }
  func.func @transform_10(%arg0: i32, %arg1: i32) -> (i32, i32, i32) {
    %c0_i32 = arith.constant 0 : i32
    %c0_i32_0 = arith.constant 0 : i32
    %c0_i32_1 = arith.constant 0 : i32
    return %arg1, %c0_i32, %c0_i32_0 : i32, i32, i32
  }
  func.func @transform_11(%arg0: i32, %arg1: i32) -> (i32, i32, i32) {
    %c0_i32 = arith.constant 0 : i32
    %c0_i32_0 = arith.constant 0 : i32
    %c0_i32_1 = arith.constant 0 : i32
    return %arg1, %c0_i32, %c0_i32_0 : i32, i32, i32
  }
  func.func @transform_12(%arg0: i32, %arg1: i32) -> (i32, i32, i32) {
    %c0_i32 = arith.constant 0 : i32
    %c0_i32_0 = arith.constant 0 : i32
    %c0_i32_1 = arith.constant 0 : i32
    return %arg1, %c0_i32, %c0_i32_0 : i32, i32, i32
  }
  func.func @transform_13(%arg0: i32, %arg1: i32) -> (i32, i32, i32) {
    %c0_i32 = arith.constant 0 : i32
    %c0_i32_0 = arith.constant 0 : i32
    %c0_i32_1 = arith.constant 0 : i32
    return %arg0, %c0_i32, %c0_i32_0 : i32, i32, i32
  }
}

</mosaic_0001>

<llo_original>
// kernel: vit_caption_forward.7
$region0: #{vit_caption_forward.7}
  #allocation0 [shape = 'u32[]', space=smem, size = 0x4, offset = 0x4, fixed_abs, tag = 'smem constant byte address 0x4 - core index']
  #allocation1 [shape = 'u32[72,128]{1,0:T(1,128)}', space=vmem, size = 0x9000, scoped, tag = 'internal scratch']
  %s0 = inlined_call_operand.vmem [shape: f32[16,128], index: 0, kind: input, shape index: {}]
  %s1 = inlined_call_operand.vmem [shape: f32[1,128], index: 1, kind: input, shape index: {}]
  %s2 = inlined_call_operand.vmem [shape: f32[1,128], index: 2, kind: input, shape index: {}]
  %s3 = inlined_call_operand.hbm [shape: bf16[128,128], index: 3, kind: input, shape index: {}]
  %s4 = inlined_call_operand.vmem [shape: f32[1,128], index: 4, kind: input, shape index: {}]
  %s5 = inlined_call_operand.vmem [shape: f32[16,128], index: 5, kind: output, shape index: {}]
  %s6 = sld [smem:[#allocation0]]
  $region34: #{vit_caption_forward.7} parent=0
    _
  %s8 = ssub.s32 1, %s6
  %s9 = scalar_select 0, %s8, %s6
  $region1: #{vit_caption_forward.7} parent=0
    #allocation2 [shape = 'u8[32768]{0}', space=vmem, size = 0x8000, scoped, tag = 'input window, operand 3, single buffered']
    #allocation3 [shape = 's32[1]{0}', space=sflag, size = 0x4, scoped, tag = 'scoped memory for vit_caption_forward.7']
    %10 = vsyncpa [#allocation3], 0
    // Predicated region
    $region2: #{vit_caption_forward.7} parent=1 // pred_check
      _
    $region3: #{vit_caption_forward.7} parent=1 // pred_check_branch
      %12 = sbr.rel (0) target = $region5
    $region4: #{vit_caption_forward.7} parent=1 // pred_region
      _
    $region5: #{vit_caption_forward.7} parent=1 // pred_fallthru
      _
    // Predicated region
    $region6: #{vit_caption_forward.7} parent=1 // pred_check
      _
    $region7: #{vit_caption_forward.7} parent=1 // pred_check_branch
      %14 = sbr.rel (0) target = $region9
    $region8: #{vit_caption_forward.7} parent=1 // pred_region
      _
    $region9: #{vit_caption_forward.7} parent=1 // pred_fallthru
      _
    // Predicated region
    $region10: #{vit_caption_forward.7} parent=1 // pred_check
      _
    $region11: #{vit_caption_forward.7} parent=1 // pred_check_branch
      %16 = sbr.rel (0) target = $region13
    $region12: #{vit_caption_forward.7} parent=1 // pred_region
      _
    $region13: #{vit_caption_forward.7} parent=1 // pred_fallthru
      _
    // Predicated region
    $region14: #{vit_caption_forward.7} parent=1 // pred_check
      _
    $region15: #{vit_caption_forward.7} parent=1 // pred_check_branch
      %18 = sbr.rel (0) target = $region17
    $region16: #{vit_caption_forward.7} parent=1 // pred_region
      %20 = vsyncadd [#allocation3], 0
      %s21 = sshll.u32 %s3, 4
      %s22 = int_to_ptr.hbm [resolvable:$true] %s21
      %s23 = sshll.u32 [#allocation2], 4
      %s24 = int_to_ptr.vmem [resolvable:$true] %s23
      %29 = dma.hbm_to_vmem [thread:$0]  %s22, 1024, %s24, [#allocation3], 64, 64, 4
    $region17: #{vit_caption_forward.7} parent=1 // pred_fallthru
      _
    // Predicated region
    $region18: #{vit_caption_forward.7} parent=1 // pred_check
      _
    $region19: #{vit_caption_forward.7} parent=1 // pred_check_branch
      %31 = sbr.rel (0) target = $region21
    $region20: #{vit_caption_forward.7} parent=1 // pred_region
      _
    $region21: #{vit_caption_forward.7} parent=1 // pred_fallthru
      _
    // Predicated region
    $region22: #{vit_caption_forward.7} parent=1 // pred_check
      _
    $region23: #{vit_caption_forward.7} parent=1 // pred_check_branch
      %33 = sbr.rel (0) target = $region25
    $region24: #{vit_caption_forward.7} parent=1 // pred_region
      %35 = dma.done [#allocation3], 1024
    $region25: #{vit_caption_forward.7} parent=1 // pred_fallthru
      _
    %v36 = vld [vmem:[%s0] sm:$0xff]
    %v37 = vld [vmem:[%s0 + $0x8] sm:$0xff]
    %v38 = vld [vmem:[%s1] sm:$0x1]
    %v39 = vld [vmem:[%s2] sm:$0x1]
    %40 = vadd.xlane.f32.xlu0 %v36
    %v41 = vpop.xlane.xlu0 %40
    %42 = vadd.xlane.f32.xlu0 %v37
    %v43 = vpop.xlane.xlu0 %42
    %v44 = vrcp.pop 128.0
    %v45 = vmul.f32 128.0, %v44
    %v46 = vsub.f32 1.0, %v45
    %v47 = vmul.f32 %v44, %v46
    %v48 = vadd.f32 %v44, %v47
    %vm49 = vweird.f32 %v44
    %v50 = vsel %vm49, %v44, %v48
    %v51 = vmul.f32 %v41, %v50
    %v52 = vmul.f32 %v43, %v50
    %v53 = vsub.f32 %v36, %v51
    %v54 = vsub.f32 %v37, %v52
    %v55 = vmul.f32 %v53, %v53
    %v56 = vmul.f32 %v54, %v54
    %57 = vadd.xlane.f32.xlu0 %v55
    %v58 = vpop.xlane.xlu0 %57
    %59 = vadd.xlane.f32.xlu0 %v56
    %v60 = vpop.xlane.xlu0 %59
    %v61 = vmul.f32 %v58, %v50
    %v62 = vmul.f32 %v60, %v50
    %v63 = vadd.f32 %v61, 1e-05
    %v64 = vadd.f32 %v62, 1e-05
    %v65 = vrsqrt.pop %v63
    %v66 = vmul.f32 %v65, %v63
    %v67 = vmul.f32 %v66, %v65
    %v68 = vmul.f32 0.5, %v67
    %v69 = vsub.f32 1.5, %v68
    %v70 = vmul.f32 %v65, %v69
    %vm71 = vweird.f32 %v63
    %vm72 = vweird.f32 %v65
    %vm73 = vmor %vm71, %vm72
    %v74 = vsel %vm73, %v65, %v70
    %v75 = vrsqrt.pop %v64
    %v76 = vmul.f32 %v75, %v64
    %v77 = vmul.f32 %v76, %v75
    %v78 = vmul.f32 0.5, %v77
    %v79 = vsub.f32 1.5, %v78
    %v80 = vmul.f32 %v75, %v79
    %vm81 = vweird.f32 %v64
    %vm82 = vweird.f32 %v75
    %vm83 = vmor %vm81, %vm82
    %v84 = vsel %vm83, %v75, %v80
    %v85 = vmul.f32 %v53, %v74
    %v86 = vmul.f32 %v54, %v84
    %v88 = vperm.slane %v38, 0
    %v90 = vmul.f32 %v85, %v88
    %v91 = vmul.f32 %v86, %v88
    %v93 = vperm.slane %v39, 0
    %v95 = vadd.f32 %v90, %v93
    %v96 = vadd.f32 %v91, %v93
    %v97 = vpack.c.bf16 %v96, %v95
    %v98 = vld [vmem:[#allocation2] sm:$0xf]
    %v99 = vld [vmem:[#allocation2 + $0x4] sm:$0xf]
    %v100 = vld [vmem:[#allocation2 + $0x8] sm:$0xf]
    %v101 = vld [vmem:[#allocation2 + $0xc] sm:$0xf]
    %v102 = vld [vmem:[#allocation2 + $0x10] sm:$0xf]
    %v103 = vld [vmem:[#allocation2 + $0x14] sm:$0xf]
    %v104 = vld [vmem:[#allocation2 + $0x18] sm:$0xf]
    %v105 = vld [vmem:[#allocation2 + $0x1c] sm:$0xf]
    %v106 = vld [vmem:[#allocation2 + $0x20] sm:$0xf]
    %v107 = vld [vmem:[#allocation2 + $0x24] sm:$0xf]
    %v108 = vld [vmem:[#allocation2 + $0x28] sm:$0xf]
    %v109 = vld [vmem:[#allocation2 + $0x2c] sm:$0xf]
    %v110 = vld [vmem:[#allocation2 + $0x30] sm:$0xf]
    %v111 = vld [vmem:[#allocation2 + $0x34] sm:$0xf]
    %v112 = vld [vmem:[#allocation2 + $0x38] sm:$0xf]
    %v113 = vld [vmem:[#allocation2 + $0x3c] sm:$0xf]
    %v114 = vld [vmem:[%s4] sm:$0x1]
    %v116 = vperm.slane %v114, 0
    %v134 = vunpack.c.l.b16 %v98
    %v135 = vunpack.c.l.b16 %v99
    %v136 = vunpack.c.l.b16 %v100
    %v137 = vunpack.c.l.b16 %v101
    %v138 = vunpack.c.l.b16 %v102
    %v139 = vunpack.c.l.b16 %v103
    %v140 = vunpack.c.l.b16 %v104
    %v141 = vunpack.c.l.b16 %v105
    %v142 = vunpack.c.l.b16 %v106
    %v143 = vunpack.c.l.b16 %v107
    %v144 = vunpack.c.l.b16 %v108
    %v145 = vunpack.c.l.b16 %v109
    %v146 = vunpack.c.l.b16 %v110
    %v147 = vunpack.c.l.b16 %v111
    %v148 = vunpack.c.l.b16 %v112
    %v149 = vunpack.c.l.b16 %v113
    %v150 = vpack.c.b16 %v135, %v134
    %v151 = vpack.c.b16 %v137, %v136
    %v152 = vpack.c.b16 %v139, %v138
    %v153 = vpack.c.b16 %v141, %v140
    %v154 = vpack.c.b16 %v143, %v142
    %v155 = vpack.c.b16 %v145, %v144
    %v156 = vpack.c.b16 %v147, %v146
    %v157 = vpack.c.b16 %v149, %v148
    %166 = vmatpush.bf16.msra.mxu0 %v157
    %167 = vmatpush.bf16.msra.mxu0 %v156
    %168 = vmatpush.bf16.msra.mxu0 %v155
    %169 = vmatpush.bf16.msra.mxu0 %v154
    %170 = vmatpush.bf16.msra.mxu0 %v153
    %171 = vmatpush.bf16.msra.mxu0 %v152
    %172 = vmatpush.bf16.msra.mxu0 %v151
    %173 = vmatpush.bf16.msra.mxu0 %v150
    %174 = vmatmul.bf16.gmra.mxu0 %v97
    %v175 = vpop.f32.mrf.mxu0
    %v176 = vadd.f32 %v116, %v175
    %v177 = vpop.f32.mrf.mxu0
    %v178 = vadd.f32 %v116, %v177
    %179 = vdwg.mxu0
    %180 = vst [vmem:[%s5] sm:$0xff] %v176
    %181 = vst [vmem:[%s5 + $0x8] sm:$0xff] %v178
    // Predicated region
    $region26: #{vit_caption_forward.7} parent=1 // pred_check
      _
    $region27: #{vit_caption_forward.7} parent=1 // pred_check_branch
      %183 = sbr.rel (0) target = $region29
    $region28: #{vit_caption_forward.7} parent=1 // pred_region
      _
    $region29: #{vit_caption_forward.7} parent=1 // pred_fallthru
      _
    // Predicated region
    $region30: #{vit_caption_forward.7} parent=1 // pred_check
      _
    $region31: #{vit_caption_forward.7} parent=1 // pred_check_branch
      %185 = sbr.rel (0) target = $region33
    $region32: #{vit_caption_forward.7} parent=1 // pred_region
      _
    $region33: #{vit_caption_forward.7} parent=1 // pred_fallthru
      _
    %186 = vsyncpa [#allocation3], 1

// kernel: vit_caption_forward.5
$region0: #{vit_caption_forward.5}
  #allocation0 [shape = 'u32[]', space=smem, size = 0x4, offset = 0x4, fixed_abs, tag = 'smem constant byte address 0x4 - core index']
  #allocation1 [shape = 'u32[72,128]{1,0:T(1,128)}', space=vmem, size = 0x9000, scoped, tag = 'internal scratch']
  %s0 = inlined_call_operand.vmem [shape: f32[8,640], index: 0, kind: input, shape index: {}]
  %s1 = inlined_call_operand.hbm [shape: bf16[640,128], index: 1, kind: input, shape index: {}]
  %s2 = inlined_call_operand.vmem [shape: f32[1,128], index: 2, kind: input, shape index: {}]
  %s3 = inlined_call_operand.vmem [shape: f32[8,128], index: 3, kind: output, shape index: {}]
  %s4 = sld [smem:[#allocation0]]
  $region26: #{vit_caption_forward.5} parent=0
    _
  %s6 = ssub.s32 1, %s4
  %s7 = scalar_select 0, %s6, %s4
  $region1: #{vit_caption_forward.5} parent=0
    #allocation2 [shape = 'u8[163840]{0}', space=vmem, size = 0x28000, scoped, tag = 'input window, operand 1, single buffered']
    #allocation3 [shape = 's32[1]{0}', space=sflag, size = 0x4, scoped, tag = 'scoped memory for vit_caption_forward.5']
    %8 = vsyncpa [#allocation3], 0
    // Predicated region
    $region2: #{vit_caption_forward.5} parent=1 // pred_check
      _
    $region3: #{vit_caption_forward.5} parent=1 // pred_check_branch
      %10 = sbr.rel (0) target = $region5
    $region4: #{vit_caption_forward.5} parent=1 // pred_region
      _
    $region5: #{vit_caption_forward.5} parent=1 // pred_fallthru
      _
    // Predicated region
    $region6: #{vit_caption_forward.5} parent=1 // pred_check
      _
    $region7: #{vit_caption_forward.5} parent=1 // pred_check_branch
      %12 = sbr.rel (0) target = $region9
    $region8: #{vit_caption_forward.5} parent=1 // pred_region
      %14 = vsyncadd [#allocation3], 0
      %s15 = sshll.u32 %s1, 4
      %s16 = int_to_ptr.hbm [resolvable:$true] %s15
      %s17 = sshll.u32 [#allocation2], 4
      %s18 = int_to_ptr.vmem [resolvable:$true] %s17
      %23 = dma.hbm_to_vmem [thread:$0]  %s16, 5120, %s18, [#allocation3], 64, 64, 4
    $region9: #{vit_caption_forward.5} parent=1 // pred_fallthru
      _
    // Predicated region
    $region10: #{vit_caption_forward.5} parent=1 // pred_check
      _
    $region11: #{vit_caption_forward.5} parent=1 // pred_check_branch
      %25 = sbr.rel (0) target = $region13
    $region12: #{vit_caption_forward.5} parent=1 // pred_region
      _
    $region13: #{vit_caption_forward.5} parent=1 // pred_fallthru
      _
    // Predicated region
    $region14: #{vit_caption_forward.5} parent=1 // pred_check
      _
    $region15: #{vit_caption_forward.5} parent=1 // pred_check_branch
      %27 = sbr.rel (0) target = $region17
    $region16: #{vit_caption_forward.5} parent=1 // pred_region
      %29 = dma.done [#allocation3], 5120
    $region17: #{vit_caption_forward.5} parent=1 // pred_fallthru
      _
    %v30 = vld [vmem:[%s0] sm:$0xff]
    %v31 = vld [vmem:[%s0 + $0x8] sm:$0xff]
    %v32 = vld [vmem:[%s0 + $0x10] sm:$0xff]
    %v33 = vld [vmem:[%s0 + $0x18] sm:$0xff]
    %v34 = vld [vmem:[%s0 + $0x20] sm:$0xff]
    %v35 = vpack.c.bf16 %v30, %v30
    %v36 = vpack.c.bf16 %v31, %v31
    %v37 = vpack.c.bf16 %v32, %v32
    %v38 = vpack.c.bf16 %v33, %v33
    %v39 = vpack.c.bf16 %v34, %v34
    %v40 = vld [vmem:[#allocation2] sm:$0xf]
    %v41 = vld [vmem:[#allocation2 + $0x4] sm:$0xf]
    %v42 = vld [vmem:[#allocation2 + $0x8] sm:$0xf]
    %v43 = vld [vmem:[#allocation2 + $0xc] sm:$0xf]
    %v44 = vld [vmem:[#allocation2 + $0x10] sm:$0xf]
    %v45 = vld [vmem:[#allocation2 + $0x14] sm:$0xf]
    %v46 = vld [vmem:[#allocation2 + $0x18] sm:$0xf]
    %v47 = vld [vmem:[#allocation2 + $0x1c] sm:$0xf]
    %v48 = vld [vmem:[#allocation2 + $0x20] sm:$0xf]
    %v49 = vld [vmem:[#allocation2 + $0x24] sm:$0xf]
    %v50 = vld [vmem:[#allocation2 + $0x28] sm:$0xf]
    %v51 = vld [vmem:[#allocation2 + $0x2c] sm:$0xf]
    %v52 = vld [vmem:[#allocation2 + $0x30] sm:$0xf]
    %v53 = vld [vmem:[#allocation2 + $0x34] sm:$0xf]
    %v54 = vld [vmem:[#allocation2 + $0x38] sm:$0xf]
    %v55 = vld [vmem:[#allocation2 + $0x3c] sm:$0xf]
    %v56 = vld [vmem:[#allocation2 + $0x40] sm:$0xf]
    %v57 = vld [vmem:[#allocation2 + $0x44] sm:$0xf]
    %v58 = vld [vmem:[#allocation2 + $0x48] sm:$0xf]
    %v59 = vld [vmem:[#allocation2 + $0x4c] sm:$0xf]
    %v60 = vld [vmem:[#allocation2 + $0x50] sm:$0xf]
    %v61 = vld [vmem:[#allocation2 + $0x54] sm:$0xf]
    %v62 = vld [vmem:[#allocation2 + $0x58] sm:$0xf]
    %v63 = vld [vmem:[#allocation2 + $0x5c] sm:$0xf]
    %v64 = vld [vmem:[#allocation2 + $0x60] sm:$0xf]
    %v65 = vld [vmem:[#allocation2 + $0x64] sm:$0xf]
    %v66 = vld [vmem:[#allocation2 + $0x68] sm:$0xf]
    %v67 = vld [vmem:[#allocation2 + $0x6c] sm:$0xf]
    %v68 = vld [vmem:[#allocation2 + $0x70] sm:$0xf]
    %v69 = vld [vmem:[#allocation2 + $0x74] sm:$0xf]
    %v70 = vld [vmem:[#allocation2 + $0x78] sm:$0xf]
    %v71 = vld [vmem:[#allocation2 + $0x7c] sm:$0xf]
    %v72 = vld [vmem:[#allocation2 + $0x80] sm:$0xf]
    %v73 = vld [vmem:[#allocation2 + $0x84] sm:$0xf]
    %v74 = vld [vmem:[#allocation2 + $0x88] sm:$0xf]
    %v75 = vld [vmem:[#allocation2 + $0x8c] sm:$0xf]
    %v76 = vld [vmem:[#allocation2 + $0x90] sm:$0xf]
    %v77 = vld [vmem:[#allocation2 + $0x94] sm:$0xf]
    %v78 = vld [vmem:[#allocation2 + $0x98] sm:$0xf]
    %v79 = vld [vmem:[#allocation2 + $0x9c] sm:$0xf]
    %v80 = vld [vmem:[#allocation2 + $0xa0] sm:$0xf]
    %v81 = vld [vmem:[#allocation2 + $0xa4] sm:$0xf]
    %v82 = vld [vmem:[#allocation2 + $0xa8] sm:$0xf]
    %v83 = vld [vmem:[#allocation2 + $0xac] sm:$0xf]
    %v84 = vld [vmem:[#allocation2 + $0xb0] sm:$0xf]
    %v85 = vld [vmem:[#allocation2 + $0xb4] sm:$0xf]
    %v86 = vld [vmem:[#allocation2 + $0xb8] sm:$0xf]
    %v87 = vld [vmem:[#allocation2 + $0xbc] sm:$0xf]
    %v88 = vld [vmem:[#allocation2 + $0xc0] sm:$0xf]
    %v89 = vld [vmem:[#allocation2 + $0xc4] sm:$0xf]
    %v90 = vld [vmem:[#allocation2 + $0xc8] sm:$0xf]
    %v91 = vld [vmem:[#allocation2 + $0xcc] sm:$0xf]
    %v92 = vld [vmem:[#allocation2 + $0xd0] sm:$0xf]
    %v93 = vld [vmem:[#allocation2 + $0xd4] sm:$0xf]
    %v94 = vld [vmem:[#allocation2 + $0xd8] sm:$0xf]
    %v95 = vld [vmem:[#allocation2 + $0xdc] sm:$0xf]
    %v96 = vld [vmem:[#allocation2 + $0xe0] sm:$0xf]
    %v97 = vld [vmem:[#allocation2 + $0xe4] sm:$0xf]
    %v98 = vld [vmem:[#allocation2 + $0xe8] sm:$0xf]
    %v99 = vld [vmem:[#allocation2 + $0xec] sm:$0xf]
    %v100 = vld [vmem:[#allocation2 + $0xf0] sm:$0xf]
    %v101 = vld [vmem:[#allocation2 + $0xf4] sm:$0xf]
    %v102 = vld [vmem:[#allocation2 + $0xf8] sm:$0xf]
    %v103 = vld [vmem:[#allocation2 + $0xfc] sm:$0xf]
    %v104 = vld [vmem:[#allocation2 + $0x100] sm:$0xf]
    %v105 = vld [vmem:[#allocation2 + $0x104] sm:$0xf]
    %v106 = vld [vmem:[#allocation2 + $0x108] sm:$0xf]
    %v107 = vld [vmem:[#allocation2 + $0x10c] sm:$0xf]
    %v108 = vld [vmem:[#allocation2 + $0x110] sm:$0xf]
    %v109 = vld [vmem:[#allocation2 + $0x114] sm:$0xf]
    %v110 = vld [vmem:[#allocation2 + $0x118] sm:$0xf]
    %v111 = vld [vmem:[#allocation2 + $0x11c] sm:$0xf]
    %v112 = vld [vmem:[#allocation2 + $0x120] sm:$0xf]
    %v113 = vld [vmem:[#allocation2 + $0x124] sm:$0xf]
    %v114 = vld [vmem:[#allocation2 + $0x128] sm:$0xf]
    %v115 = vld [vmem:[#allocation2 + $0x12c] sm:$0xf]
    %v116 = vld [vmem:[#allocation2 + $0x130] sm:$0xf]
    %v117 = vld [vmem:[#allocation2 + $0x134] sm:$0xf]
    %v118 = vld [vmem:[#allocation2 + $0x138] sm:$0xf]
    %v119 = vld [vmem:[#allocation2 + $0x13c] sm:$0xf]
    %v120 = vld [vmem:[%s2] sm:$0x1]
    %v122 = vperm.slane %v120, 0
    %v204 = vunpack.c.l.b16 %v40
    %v205 = vunpack.c.l.b16 %v41
    %v206 = vunpack.c.l.b16 %v42
    %v207 = vunpack.c.l.b16 %v43
    %v208 = vunpack.c.l.b16 %v44
    %v209 = vunpack.c.l.b16 %v45
    %v210 = vunpack.c.l.b16 %v46
    %v211 = vunpack.c.l.b16 %v47
    %v212 = vunpack.c.l.b16 %v48
    %v213 = vunpack.c.l.b16 %v49
    %v214 = vunpack.c.l.b16 %v50
    %v215 = vunpack.c.l.b16 %v51
    %v216 = vunpack.c.l.b16 %v52
    %v217 = vunpack.c.l.b16 %v53
    %v218 = vunpack.c.l.b16 %v54
    %v219 = vunpack.c.l.b16 %v55
    %v220 = vunpack.c.l.b16 %v56
    %v221 = vunpack.c.l.b16 %v57
    %v222 = vunpack.c.l.b16 %v58
    %v223 = vunpack.c.l.b16 %v59
    %v224 = vunpack.c.l.b16 %v60
    %v225 = vunpack.c.l.b16 %v61
    %v226 = vunpack.c.l.b16 %v62
    %v227 = vunpack.c.l.b16 %v63
    %v228 = vunpack.c.l.b16 %v64
    %v229 = vunpack.c.l.b16 %v65
    %v230 = vunpack.c.l.b16 %v66
    %v231 = vunpack.c.l.b16 %v67
    %v232 = vunpack.c.l.b16 %v68
    %v233 = vunpack.c.l.b16 %v69
    %v234 = vunpack.c.l.b16 %v70
    %v235 = vunpack.c.l.b16 %v71
    %v236 = vunpack.c.l.b16 %v72
    %v237 = vunpack.c.l.b16 %v73
    %v238 = vunpack.c.l.b16 %v74
    %v239 = vunpack.c.l.b16 %v75
    %v240 = vunpack.c.l.b16 %v76
    %v241 = vunpack.c.l.b16 %v77
    %v242 = vunpack.c.l.b16 %v78
    %v243 = vunpack.c.l.b16 %v79
    %v244 = vunpack.c.l.b16 %v80
    %v245 = vunpack.c.l.b16 %v81
    %v246 = vunpack.c.l.b16 %v82
    %v247 = vunpack.c.l.b16 %v83
    %v248 = vunpack.c.l.b16 %v84
    %v249 = vunpack.c.l.b16 %v85
    %v250 = vunpack.c.l.b16 %v86
    %v251 = vunpack.c.l.b16 %v87
    %v252 = vunpack.c.l.b16 %v88
    %v253 = vunpack.c.l.b16 %v89
    %v254 = vunpack.c.l.b16 %v90
    %v255 = vunpack.c.l.b16 %v91
    %v256 = vunpack.c.l.b16 %v92
    %v257 = vunpack.c.l.b16 %v93
    %v258 = vunpack.c.l.b16 %v94
    %v259 = vunpack.c.l.b16 %v95
    %v260 = vunpack.c.l.b16 %v96
    %v261 = vunpack.c.l.b16 %v97
    %v262 = vunpack.c.l.b16 %v98
    %v263 = vunpack.c.l.b16 %v99
    %v264 = vunpack.c.l.b16 %v100
    %v265 = vunpack.c.l.b16 %v101
    %v266 = vunpack.c.l.b16 %v102
    %v267 = vunpack.c.l.b16 %v103
    %v268 = vunpack.c.l.b16 %v104
    %v269 = vunpack.c.l.b16 %v105
    %v270 = vunpack.c.l.b16 %v106
    %v271 = vunpack.c.l.b16 %v107
    %v272 = vunpack.c.l.b16 %v108
    %v273 = vunpack.c.l.b16 %v109
    %v274 = vunpack.c.l.b16 %v110
    %v275 = vunpack.c.l.b16 %v111
    %v276 = vunpack.c.l.b16 %v112
    %v277 = vunpack.c.l.b16 %v113
    %v278 = vunpack.c.l.b16 %v114
    %v279 = vunpack.c.l.b16 %v115
    %v280 = vunpack.c.l.b16 %v116
    %v281 = vunpack.c.l.b16 %v117
    %v282 = vunpack.c.l.b16 %v118
    %v283 = vunpack.c.l.b16 %v119
    %v284 = vpack.c.b16 %v205, %v204
    %v285 = vpack.c.b16 %v207, %v206
    %v286 = vpack.c.b16 %v209, %v208
    %v287 = vpack.c.b16 %v211, %v210
    %v288 = vpack.c.b16 %v213, %v212
    %v289 = vpack.c.b16 %v215, %v214
    %v290 = vpack.c.b16 %v217, %v216
    %v291 = vpack.c.b16 %v219, %v218
    %v292 = vpack.c.b16 %v221, %v220
    %v293 = vpack.c.b16 %v223, %v222
    %v294 = vpack.c.b16 %v225, %v224
    %v295 = vpack.c.b16 %v227, %v226
    %v296 = vpack.c.b16 %v229, %v228
    %v297 = vpack.c.b16 %v231, %v230
    %v298 = vpack.c.b16 %v233, %v232
    %v299 = vpack.c.b16 %v235, %v234
    %v300 = vpack.c.b16 %v237, %v236
    %v301 = vpack.c.b16 %v239, %v238
    %v302 = vpack.c.b16 %v241, %v240
    %v303 = vpack.c.b16 %v243, %v242
    %v304 = vpack.c.b16 %v245, %v244
    %v305 = vpack.c.b16 %v247, %v246
    %v306 = vpack.c.b16 %v249, %v248
    %v307 = vpack.c.b16 %v251, %v250
    %v308 = vpack.c.b16 %v253, %v252
    %v309 = vpack.c.b16 %v255, %v254
    %v310 = vpack.c.b16 %v257, %v256
    %v311 = vpack.c.b16 %v259, %v258
    %v312 = vpack.c.b16 %v261, %v260
    %v313 = vpack.c.b16 %v263, %v262
    %v314 = vpack.c.b16 %v265, %v264
    %v315 = vpack.c.b16 %v267, %v266
    %v316 = vpack.c.b16 %v269, %v268
    %v317 = vpack.c.b16 %v271, %v270
    %v318 = vpack.c.b16 %v273, %v272
    %v319 = vpack.c.b16 %v275, %v274
    %v320 = vpack.c.b16 %v277, %v276
    %v321 = vpack.c.b16 %v279, %v278
    %v322 = vpack.c.b16 %v281, %v280
    %v323 = vpack.c.b16 %v283, %v282
    %364 = vmatpush.bf16.msra.mxu0 %v291
    %365 = vmatpush.bf16.msra.mxu0 %v290
    %366 = vmatpush.bf16.msra.mxu0 %v289
    %367 = vmatpush.bf16.msra.mxu0 %v288
    %368 = vmatpush.bf16.msra.mxu0 %v287
    %369 = vmatpush.bf16.msra.mxu0 %v286
    %370 = vmatpush.bf16.msra.mxu0 %v285
    %371 = vmatpush.bf16.msra.mxu0 %v284
    %372 = vmatmul.bf16.gmra.mxu0 %v35
    %v373 = vpop.f32.mrf.mxu0
    %v374 = vadd.f32 %v122, %v373
    %v375 = vpop.f32.mrf.mxu0
    %376 = vdwg.mxu0
    %377 = vmatpush.bf16.msra.mxu0 %v299
    %378 = vmatpush.bf16.msra.mxu0 %v298
    %379 = vmatpush.bf16.msra.mxu0 %v297
    %380 = vmatpush.bf16.msra.mxu0 %v296
    %381 = vmatpush.bf16.msra.mxu0 %v295
    %382 = vmatpush.bf16.msra.mxu0 %v294
    %383 = vmatpush.bf16.msra.mxu0 %v293
    %384 = vmatpush.bf16.msra.mxu0 %v292
    %385 = vmatmul.bf16.gmra.mxu0 %v36
    %v386 = vpop.f32.mrf.mxu0
    %v387 = vadd.f32 %v374, %v386
    %v388 = vpop.f32.mrf.mxu0
    %389 = vdwg.mxu0
    %390 = vmatpush.bf16.msra.mxu0 %v307
    %391 = vmatpush.bf16.msra.mxu0 %v306
    %392 = vmatpush.bf16.msra.mxu0 %v305
    %393 = vmatpush.bf16.msra.mxu0 %v304
    %394 = vmatpush.bf16.msra.mxu0 %v303
    %395 = vmatpush.bf16.msra.mxu0 %v302
    %396 = vmatpush.bf16.msra.mxu0 %v301
    %397 = vmatpush.bf16.msra.mxu0 %v300
    %398 = vmatmul.bf16.gmra.mxu0 %v37
    %v399 = vpop.f32.mrf.mxu0
    %v400 = vadd.f32 %v387, %v399
    %v401 = vpop.f32.mrf.mxu0
    %402 = vdwg.mxu0
    %403 = vmatpush.bf16.msra.mxu0 %v315
    %404 = vmatpush.bf16.msra.mxu0 %v314
    %405 = vmatpush.bf16.msra.mxu0 %v313
    %406 = vmatpush.bf16.msra.mxu0 %v312
    %407 = vmatpush.bf16.msra.mxu0 %v311
    %408 = vmatpush.bf16.msra.mxu0 %v310
    %409 = vmatpush.bf16.msra.mxu0 %v309
    %410 = vmatpush.bf16.msra.mxu0 %v308
    %411 = vmatmul.bf16.gmra.mxu0 %v38
    %v412 = vpop.f32.mrf.mxu0
    %v413 = vadd.f32 %v400, %v412
    %v414 = vpop.f32.mrf.mxu0
    %415 = vdwg.mxu0
    %416 = vmatpush.bf16.msra.mxu0 %v323
    %417 = vmatpush.bf16.msra.mxu0 %v322
    %418 = vmatpush.bf16.msra.mxu0 %v321
    %419 = vmatpush.bf16.msra.mxu0 %v320
    %420 = vmatpush.bf16.msra.mxu0 %v319
    %421 = vmatpush.bf16.msra.mxu0 %v318
    %422 = vmatpush.bf16.msra.mxu0 %v317
    %423 = vmatpush.bf16.msra.mxu0 %v316
    %424 = vmatmul.bf16.gmra.mxu0 %v39
    %v425 = vpop.f32.mrf.mxu0
    %v426 = vadd.f32 %v413, %v425
    %v427 = vpop.f32.mrf.mxu0
    %428 = vdwg.mxu0
    %429 = vst [vmem:[%s3] sm:$0xff] %v426
    // Predicated region
    $region18: #{vit_caption_forward.5} parent=1 // pred_check
      _
    $region19: #{vit_caption_forward.5} parent=1 // pred_check_branch
      %431 = sbr.rel (0) target = $region21
    $region20: #{vit_caption_forward.5} parent=1 // pred_region
      _
    $region21: #{vit_caption_forward.5} parent=1 // pred_fallthru
      _
    // Predicated region
    $region22: #{vit_caption_forward.5} parent=1 // pred_check
      _
    $region23: #{vit_caption_forward.5} parent=1 // pred_check_branch
      %433 = sbr.rel (0) target = $region25
    $region24: #{vit_caption_forward.5} parent=1 // pred_region
      _
    $region25: #{vit_caption_forward.5} parent=1 // pred_fallthru
      _
    %434 = vsyncpa [#allocation3], 1

// kernel: vit_caption_forward.6
$region0: #{vit_caption_forward.6}
  #allocation0 [shape = 'u32[]', space=smem, size = 0x4, offset = 0x4, fixed_abs, tag = 'smem constant byte address 0x4 - core index']
  #allocation1 [shape = 'u32[72,128]{1,0:T(1,128)}', space=vmem, size = 0x9000, scoped, tag = 'internal scratch']
  %s0 = inlined_call_operand.vmem [shape: f32[2,8,128], index: 0, kind: input, shape index: {}]
  %s1 = inlined_call_operand.vmem [shape: f32[2,1,128], index: 1, kind: input, shape index: {}]
  %s2 = inlined_call_operand.vmem [shape: f32[2,1,128], index: 2, kind: input, shape index: {}]
  %s3 = inlined_call_operand.hbm [shape: bf16[2,128,384], index: 3, kind: input, shape index: {}]
  %s4 = inlined_call_operand.vmem [shape: f32[2,1,384], index: 4, kind: input, shape index: {}]
  %s5 = inlined_call_operand.vmem [shape: bf16[2,128,128], index: 5, kind: input, shape index: {}]
  %s6 = inlined_call_operand.vmem [shape: f32[2,1,128], index: 6, kind: input, shape index: {}]
  %s7 = inlined_call_operand.vmem [shape: f32[2,1,128], index: 7, kind: input, shape index: {}]
  %s8 = inlined_call_operand.vmem [shape: f32[2,1,128], index: 8, kind: input, shape index: {}]
  %s9 = inlined_call_operand.vmem [shape: bf16[2,128,512], index: 9, kind: input, shape index: {}]
  %s10 = inlined_call_operand.vmem [shape: f32[2,1,512], index: 10, kind: input, shape index: {}]
  %s11 = inlined_call_operand.vmem [shape: bf16[2,512,128], index: 11, kind: input, shape index: {}]
  %s12 = inlined_call_operand.vmem [shape: f32[2,1,128], index: 12, kind: input, shape index: {}]
  %s13 = inlined_call_operand.vmem [shape: f32[2,8,128], index: 13, kind: output, shape index: {}]
  %s14 = sld [smem:[#allocation0]]
  $region93: #{vit_caption_forward.6} parent=0
    _
  %s16 = ssub.s32 1, %s14
  %s17 = scalar_select 0, %s16, %s14
  $region1: #{vit_caption_forward.6} parent=0
    #allocation2 [shape = 'u8[196608]{0}', space=vmem, size = 0x30000, scoped, tag = 'input window, operand 3']
    #allocation3 [shape = 's32[2]{0}', space=sflag, size = 0x8, scoped, tag = 'scoped memory for vit_caption_forward.6']
    %18 = vsyncpa [#allocation3], 0
    %s19 = scalar_lea.sflag [#allocation3], 1
    %20 = vsyncpa %s19, 0
    loop: start=0, step=1, limit=6
    $region2: #{vit_caption_forward.6} parent=1 // loop_pre_header
      _
    $region3: #{vit_caption_forward.6} parent=1 // loop_header
      %s22 = sphi 0, %s26
      %p23 = scmp.ge.s32.totalorder %s22, 6
      %s29 = sphi 0, %s41
      %s30 = sphi 0, %s37
      %s31 = sphi 0, %s29
      %s32 = sphi 0, %s30
      %s33 = sphi 0, %s31
      %s34 = sphi 0, %s32
      %s44 = sphi 0, %s46
      %s47 = sphi 0, %s44
      %s48 = sphi 0, %s47
      %s64 = sphi 0, %s48
      %s70 = sphi 0, %s72
      %s73 = sphi 0, %s70
      %s74 = sphi 0, %s73
      %s90 = sphi 0, %s74
      %s96 = sphi 0, %s98
      %s99 = sphi 0, %s96
      %s100 = sphi 0, %s99
      %s116 = sphi 0, %s100
      %s122 = sphi 0, %s124
      %s125 = sphi 0, %s122
      %s126 = sphi 0, %s125
      %s142 = sphi 0, %s126
      %s148 = sphi 0, %s150
      %s151 = sphi 0, %s148
      %s152 = sphi 0, %s151
      %s168 = sphi 0, %s152
      %s174 = sphi 0, %s176
      %s177 = sphi 0, %s174
      %s178 = sphi 0, %s177
      %s194 = sphi 0, %s178
      %s200 = sphi 0, %s202
      %s203 = sphi 0, %s200
      %s204 = sphi 0, %s203
      %s220 = sphi 0, %s204
      %s226 = sphi 0, %s228
      %s229 = sphi 0, %s226
      %s230 = sphi 0, %s229
      %s246 = sphi 0, %s230
      %s252 = sphi 0, %s254
      %s255 = sphi 0, %s252
      %s256 = sphi 0, %s255
      %s272 = sphi 0, %s256
      %s278 = sphi 0, %s280
      %s281 = sphi 0, %s278
      %s282 = sphi 0, %s281
      %s298 = sphi 0, %s282
      %s304 = sphi 0, %s306
      %s307 = sphi 0, %s304
      %s308 = sphi 0, %s307
      %s324 = sphi 0, %s308
      %s330 = sphi 0, %s332
      %s333 = sphi 0, %s330
      %s334 = sphi 0, %s333
      %s350 = sphi 0, %s334
      %s356 = sphi 0, %s358
      %s359 = sphi 0, %s356
      %s360 = sphi 0, %s359
      %s376 = sphi 0, %s360
      %s382 = sphi 0, %s384
      %s385 = sphi 0, %s382
      %s386 = sphi 0, %s385
      %s402 = sphi 0, %s386
    $region4: #{vit_caption_forward.6} parent=1 // loop_header_branch
      %25 = sbr.rel (%p23) target = $region8
    $region5: #{vit_caption_forward.6} parent=1 // loop_body
      %s27 = ssub.s32 %s22, 1
      %s28 = ssub.s32 %s22, 2
      %s35 = sadd.s32 1, %s30
      %p36 = scmp.ge.s32.totalorder %s35, 2
      %s37 = scalar_select %p36, 0, %s35
      %s38 = sadd.s32 1, %s29
      %s39 = scalar_select %p36, %s38, %s29
      %p40 = scmp.ge.s32.totalorder %s39, 2
      %s41 = scalar_select %p40, 0, %s39
      %s42 = ssub.s32 %s29, %s41
      %p43 = scmp.eq.s32.totalorder %s42, 0
      %s45 = sadd.s32 %s44, 1
      %s46 = scalar_select %p43, %s44, %s45
      %p49 = pneg %p43
      %p50 = scmp.eq.s32.totalorder %s22, 3
      %p51 = por %p49, %p50
      %p52 = scmp.ne.s32.totalorder %s44, %s47
      %p53 = scmp.eq.s32.totalorder %s22, 0
      %p54 = por %p52, %p53
      %p55 = scmp.ne.s32.totalorder %s44, %s47
      %p56 = scmp.eq.s32.totalorder %s27, 3
      %p57 = por %p55, %p56
      %p58 = scmp.ne.s32.totalorder %s47, %s48
      %p59 = scmp.eq.s32.totalorder %s27, 0
      %p60 = por %p58, %p59
      %p61 = scmp.ne.s32.totalorder %s47, %s48
      %p62 = scmp.eq.s32.totalorder %s28, 3
      %p63 = por %p61, %p62
      %p65 = scmp.ne.s32.totalorder %s48, %s64
      %p66 = scmp.eq.s32.totalorder %s28, 0
      %p67 = por %p65, %p66
      %s68 = ssub.s32 %s30, %s37
      %p69 = scmp.eq.s32.totalorder %s68, 0
      %s71 = sadd.s32 %s70, 1
      %s72 = scalar_select %p69, %s70, %s71
      %p75 = pneg %p69
      %p76 = scmp.eq.s32.totalorder %s22, 3
      %p77 = por %p75, %p76
      %p78 = scmp.ne.s32.totalorder %s70, %s73
      %p79 = scmp.eq.s32.totalorder %s22, 0
      %p80 = por %p78, %p79
      %p81 = scmp.ne.s32.totalorder %s70, %s73
      %p82 = scmp.eq.s32.totalorder %s27, 3
      %p83 = por %p81, %p82
      %p84 = scmp.ne.s32.totalorder %s73, %s74
      %p85 = scmp.eq.s32.totalorder %s27, 0
      %p86 = por %p84, %p85
      %p87 = scmp.ne.s32.totalorder %s73, %s74
      %p88 = scmp.eq.s32.totalorder %s28, 3
      %p89 = por %p87, %p88
      %p91 = scmp.ne.s32.totalorder %s74, %s90
      %p92 = scmp.eq.s32.totalorder %s28, 0
      %p93 = por %p91, %p92
      %s94 = ssub.s32 %s30, %s37
      %p95 = scmp.eq.s32.totalorder %s94, 0
      %s97 = sadd.s32 %s96, 1
      %s98 = scalar_select %p95, %s96, %s97
      %p101 = pneg %p95
      %p102 = scmp.eq.s32.totalorder %s22, 3
      %p103 = por %p101, %p102
      %p104 = scmp.ne.s32.totalorder %s96, %s99
      %p105 = scmp.eq.s32.totalorder %s22, 0
      %p106 = por %p104, %p105
      %p107 = scmp.ne.s32.totalorder %s96, %s99
      %p108 = scmp.eq.s32.totalorder %s27, 3
      %p109 = por %p107, %p108
      %p110 = scmp.ne.s32.totalorder %s99, %s100
      %p111 = scmp.eq.s32.totalorder %s27, 0
      %p112 = por %p110, %p111
      %p113 = scmp.ne.s32.totalorder %s99, %s100
      %p114 = scmp.eq.s32.totalorder %s28, 3
      %p115 = por %p113, %p114
      %p117 = scmp.ne.s32.totalorder %s100, %s116
      %p118 = scmp.eq.s32.totalorder %s28, 0
      %p119 = por %p117, %p118
      %s120 = ssub.s32 %s30, %s37
      %p121 = scmp.eq.s32.totalorder %s120, 0
      %s123 = sadd.s32 %s122, 1
      %s124 = scalar_select %p121, %s122, %s123
      %p127 = pneg %p121
      %p128 = scmp.eq.s32.totalorder %s22, 3
      %p129 = por %p127, %p128
      %p130 = scmp.ne.s32.totalorder %s122, %s125
      %p131 = scmp.eq.s32.totalorder %s22, 0
      %p132 = por %p130, %p131
      %p133 = scmp.ne.s32.totalorder %s122, %s125
      %p134 = scmp.eq.s32.totalorder %s27, 3
      %p135 = por %p133, %p134
      %p136 = scmp.ne.s32.totalorder %s125, %s126
      %p137 = scmp.eq.s32.totalorder %s27, 0
      %p138 = por %p136, %p137
      %p139 = scmp.ne.s32.totalorder %s125, %s126
      %p140 = scmp.eq.s32.totalorder %s28, 3
      %p141 = por %p139, %p140
      %p143 = scmp.ne.s32.totalorder %s126, %s142
      %p144 = scmp.eq.s32.totalorder %s28, 0
      %p145 = por %p143, %p144
      %s146 = ssub.s32 %s30, %s37
      %p147 = scmp.eq.s32.totalorder %s146, 0
      %s149 = sadd.s32 %s148, 1
      %s150 = scalar_select %p147, %s148, %s149
      %p153 = pneg %p147
      %p154 = scmp.eq.s32.totalorder %s22, 3
      %p155 = por %p153, %p154
      %p156 = scmp.ne.s32.totalorder %s148, %s151
      %p157 = scmp.eq.s32.totalorder %s22, 0
      %p158 = por %p156, %p157
      %p159 = scmp.ne.s32.totalorder %s148, %s151
      %p160 = scmp.eq.s32.totalorder %s27, 3
      %p161 = por %p159, %p160
      %p162 = scmp.ne.s32.totalorder %s151, %s152
      %p163 = scmp.eq.s32.totalorder %s27, 0
      %p164 = por %p162, %p163
      %p165 = scmp.ne.s32.totalorder %s151, %s152
      %p166 = scmp.eq.s32.totalorder %s28, 3
      %p167 = por %p165, %p166
      %p169 = scmp.ne.s32.totalorder %s152, %s168
      %p170 = scmp.eq.s32.totalorder %s28, 0
      %p171 = por %p169, %p170
      %s172 = ssub.s32 %s30, %s37
      %p173 = scmp.eq.s32.totalorder %s172, 0
      %s175 = sadd.s32 %s174, 1
      %s176 = scalar_select %p173, %s174, %s175
      %p179 = pneg %p173
      %p180 = scmp.eq.s32.totalorder %s22, 3
      %p181 = por %p179, %p180
      %p182 = scmp.ne.s32.totalorder %s174, %s177
      %p183 = scmp.eq.s32.totalorder %s22, 0
      %p184 = por %p182, %p183
      %p185 = scmp.ne.s32.totalorder %s174, %s177
      %p186 = scmp.eq.s32.totalorder %s27, 3
      %p187 = por %p185, %p186
      %p188 = scmp.ne.s32.totalorder %s177, %s178
      %p189 = scmp.eq.s32.totalorder %s27, 0
      %p190 = por %p188, %p189
      %p191 = scmp.ne.s32.totalorder %s177, %s178
      %p192 = scmp.eq.s32.totalorder %s28, 3
      %p193 = por %p191, %p192
      %p195 = scmp.ne.s32.totalorder %s178, %s194
      %p196 = scmp.eq.s32.totalorder %s28, 0
      %p197 = por %p195, %p196
      %s198 = ssub.s32 %s30, %s37
      %p199 = scmp.eq.s32.totalorder %s198, 0
      %s201 = sadd.s32 %s200, 1
      %s202 = scalar_select %p199, %s200, %s201
      %p205 = pneg %p199
      %p206 = scmp.eq.s32.totalorder %s22, 3
      %p207 = por %p205, %p206
      %p208 = scmp.ne.s32.totalorder %s200, %s203
      %p209 = scmp.eq.s32.totalorder %s22, 0
      %p210 = por %p208, %p209
      %p211 = scmp.ne.s32.totalorder %s200, %s203
      %p212 = scmp.eq.s32.totalorder %s27, 3
      %p213 = por %p211, %p212
      %p214 = scmp.ne.s32.totalorder %s203, %s204
      %p215 = scmp.eq.s32.totalorder %s27, 0
      %p216 = por %p214, %p215
      %p217 = scmp.ne.s32.totalorder %s203, %s204
      %p218 = scmp.eq.s32.totalorder %s28, 3
      %p219 = por %p217, %p218
      %p221 = scmp.ne.s32.totalorder %s204, %s220
      %p222 = scmp.eq.s32.totalorder %s28, 0
      %p223 = por %p221, %p222
      %s224 = ssub.s32 %s30, %s37
      %p225 = scmp.eq.s32.totalorder %s224, 0
      %s227 = sadd.s32 %s226, 1
      %s228 = scalar_select %p225, %s226, %s227
      %p231 = pneg %p225
      %p232 = scmp.eq.s32.totalorder %s22, 3
      %p233 = por %p231, %p232
      %p234 = scmp.ne.s32.totalorder %s226, %s229
      %p235 = scmp.eq.s32.totalorder %s22, 0
      %p236 = por %p234, %p235
      %p237 = scmp.ne.s32.totalorder %s226, %s229
      %p238 = scmp.eq.s32.totalorder %s27, 3
      %p239 = por %p237, %p238
      %p240 = scmp.ne.s32.totalorder %s229, %s230
      %p241 = scmp.eq.s32.totalorder %s27, 0
      %p242 = por %p240, %p241
      %p243 = scmp.ne.s32.totalorder %s229, %s230
      %p244 = scmp.eq.s32.totalorder %s28, 3
      %p245 = por %p243, %p244
      %p247 = scmp.ne.s32.totalorder %s230, %s246
      %p248 = scmp.eq.s32.totalorder %s28, 0
      %p249 = por %p247, %p248
      %s250 = ssub.s32 %s30, %s37
      %p251 = scmp.eq.s32.totalorder %s250, 0
      %s253 = sadd.s32 %s252, 1
      %s254 = scalar_select %p251, %s252, %s253
      %p257 = pneg %p251
      %p258 = scmp.eq.s32.totalorder %s22, 3
      %p259 = por %p257, %p258
      %p260 = scmp.ne.s32.totalorder %s252, %s255
      %p261 = scmp.eq.s32.totalorder %s22, 0
      %p262 = por %p260, %p261
      %p263 = scmp.ne.s32.totalorder %s252, %s255
      %p264 = scmp.eq.s32.totalorder %s27, 3
      %p265 = por %p263, %p264
      %p266 = scmp.ne.s32.totalorder %s255, %s256
      %p267 = scmp.eq.s32.totalorder %s27, 0
      %p268 = por %p266, %p267
      %p269 = scmp.ne.s32.totalorder %s255, %s256
      %p270 = scmp.eq.s32.totalorder %s28, 3
      %p271 = por %p269, %p270
      %p273 = scmp.ne.s32.totalorder %s256, %s272
      %p274 = scmp.eq.s32.totalorder %s28, 0
      %p275 = por %p273, %p274
      %s276 = ssub.s32 %s30, %s37
      %p277 = scmp.eq.s32.totalorder %s276, 0
      %s279 = sadd.s32 %s278, 1
      %s280 = scalar_select %p277, %s278, %s279
      %p283 = pneg %p277
      %p284 = scmp.eq.s32.totalorder %s22, 3
      %p285 = por %p283, %p284
      %p286 = scmp.ne.s32.totalorder %s278, %s281
      %p287 = scmp.eq.s32.totalorder %s22, 0
      %p288 = por %p286, %p287
      %p289 = scmp.ne.s32.totalorder %s278, %s281
      %p290 = scmp.eq.s32.totalorder %s27, 3
      %p291 = por %p289, %p290
      %p292 = scmp.ne.s32.totalorder %s281, %s282
      %p293 = scmp.eq.s32.totalorder %s27, 0
      %p294 = por %p292, %p293
      %p295 = scmp.ne.s32.totalorder %s281, %s282
      %p296 = scmp.eq.s32.totalorder %s28, 3
      %p297 = por %p295, %p296
      %p299 = scmp.ne.s32.totalorder %s282, %s298
      %p300 = scmp.eq.s32.totalorder %s28, 0
      %p301 = por %p299, %p300
      %s302 = ssub.s32 %s30, %s37
      %p303 = scmp.eq.s32.totalorder %s302, 0
      %s305 = sadd.s32 %s304, 1
      %s306 = scalar_select %p303, %s304, %s305
      %p309 = pneg %p303
      %p310 = scmp.eq.s32.totalorder %s22, 3
      %p311 = por %p309, %p310
      %p312 = scmp.ne.s32.totalorder %s304, %s307
      %p313 = scmp.eq.s32.totalorder %s22, 0
      %p314 = por %p312, %p313
      %p315 = scmp.ne.s32.totalorder %s304, %s307
      %p316 = scmp.eq.s32.totalorder %s27, 3
      %p317 = por %p315, %p316
      %p318 = scmp.ne.s32.totalorder %s307, %s308
      %p319 = scmp.eq.s32.totalorder %s27, 0
      %p320 = por %p318, %p319
      %p321 = scmp.ne.s32.totalorder %s307, %s308
      %p322 = scmp.eq.s32.totalorder %s28, 3
      %p323 = por %p321, %p322
      %p325 = scmp.ne.s32.totalorder %s308, %s324
      %p326 = scmp.eq.s32.totalorder %s28, 0
      %p327 = por %p325, %p326
      %s328 = ssub.s32 %s30, %s37
      %p329 = scmp.eq.s32.totalorder %s328, 0
      %s331 = sadd.s32 %s330, 1
      %s332 = scalar_select %p329, %s330, %s331
      %p335 = pneg %p329
      %p336 = scmp.eq.s32.totalorder %s22, 3
      %p337 = por %p335, %p336
      %p338 = scmp.ne.s32.totalorder %s330, %s333
      %p339 = scmp.eq.s32.totalorder %s22, 0
      %p340 = por %p338, %p339
      %p341 = scmp.ne.s32.totalorder %s330, %s333
      %p342 = scmp.eq.s32.totalorder %s27, 3
      %p343 = por %p341, %p342
      %p344 = scmp.ne.s32.totalorder %s333, %s334
      %p345 = scmp.eq.s32.totalorder %s27, 0
      %p346 = por %p344, %p345
      %p347 = scmp.ne.s32.totalorder %s333, %s334
      %p348 = scmp.eq.s32.totalorder %s28, 3
      %p349 = por %p347, %p348
      %p351 = scmp.ne.s32.totalorder %s334, %s350
      %p352 = scmp.eq.s32.totalorder %s28, 0
      %p353 = por %p351, %p352
      %s354 = ssub.s32 %s30, %s37
      %p355 = scmp.eq.s32.totalorder %s354, 0
      %s357 = sadd.s32 %s356, 1
      %s358 = scalar_select %p355, %s356, %s357
      %p361 = pneg %p355
      %p362 = scmp.eq.s32.totalorder %s22, 3
      %p363 = por %p361, %p362
      %p364 = scmp.ne.s32.totalorder %s356, %s359
      %p365 = scmp.eq.s32.totalorder %s22, 0
      %p366 = por %p364, %p365
      %p367 = scmp.ne.s32.totalorder %s356, %s359
      %p368 = scmp.eq.s32.totalorder %s27, 3
      %p369 = por %p367, %p368
      %p370 = scmp.ne.s32.totalorder %s359, %s360
      %p371 = scmp.eq.s32.totalorder %s27, 0
      %p372 = por %p370, %p371
      %p373 = scmp.ne.s32.totalorder %s359, %s360
      %p374 = scmp.eq.s32.totalorder %s28, 3
      %p375 = por %p373, %p374
      %p377 = scmp.ne.s32.totalorder %s360, %s376
      %p378 = scmp.eq.s32.totalorder %s28, 0
      %p379 = por %p377, %p378
      %s380 = ssub.s32 %s29, %s41
      %p381 = scmp.eq.s32.totalorder %s380, 0
      %s383 = sadd.s32 %s382, 1
      %s384 = scalar_select %p381, %s382, %s383
      %p387 = pneg %p381
      %p388 = scmp.eq.s32.totalorder %s22, 3
      %p389 = por %p387, %p388
      %p390 = scmp.ne.s32.totalorder %s382, %s385
      %p391 = scmp.eq.s32.totalorder %s22, 0
      %p392 = por %p390, %p391
      %p393 = scmp.ne.s32.totalorder %s382, %s385
      %p394 = scmp.eq.s32.totalorder %s27, 3
      %p395 = por %p393, %p394
      %p396 = scmp.ne.s32.totalorder %s385, %s386
      %p397 = scmp.eq.s32.totalorder %s27, 0
      %p398 = por %p396, %p397
      %p399 = scmp.ne.s32.totalorder %s385, %s386
      %p400 = scmp.eq.s32.totalorder %s28, 3
      %p401 = por %p399, %p400
      %p403 = scmp.ne.s32.totalorder %s386, %s402
      %p404 = scmp.eq.s32.totalorder %s28, 0
      %p405 = por %p403, %p404
      %p406 = scmp.le.s32.totalorder 1, %s22
      %p407 = scmp.lt.s32.totalorder %s22, 5
      %p408 = pnand %p406, %p407
      %p409 = pneg %p408
      // Predicated region
      $region9: #{vit_caption_forward.6} parent=5 // pred_check
        _
      $region10: #{vit_caption_forward.6} parent=5 // pred_check_branch
        %411 = sbr.rel (%p408) target = $region12
      $region11: #{vit_caption_forward.6} parent=5 // pred_region
        %s412 = ssub.s32 %s22, 1
      $region12: #{vit_caption_forward.6} parent=5 // pred_fallthru
        _
      %p413 = scmp.lt.s32.totalorder %s22, 4
      // Predicated region
      $region13: #{vit_caption_forward.6} parent=5 // pred_check
        %p414 = pneg %p413
      $region14: #{vit_caption_forward.6} parent=5 // pred_check_branch
        %416 = sbr.rel (%p414) target = $region16
      $region15: #{vit_caption_forward.6} parent=5 // pred_region
        // Predicated region
        $region17: #{vit_caption_forward.6} parent=15 // pred_check
          %p417 = pneg %p54
        $region18: #{vit_caption_forward.6} parent=15 // pred_check_branch
          %419 = sbr.rel (%p417) target = $region20
        $region19: #{vit_caption_forward.6} parent=15 // pred_region
          %p420 = scmp.lt.s32.totalorder %s29, 1
          %s421 = scalar_select %p420, %s29, 1
          %s422 = smul.addr %s421, 8
          %s423 = scalar_lea.vmem %s0, %s422
        $region20: #{vit_caption_forward.6} parent=15 // pred_fallthru
          _
        // Predicated region
        $region21: #{vit_caption_forward.6} parent=15 // pred_check
          %p424 = pneg %p80
        $region22: #{vit_caption_forward.6} parent=15 // pred_check_branch
          %426 = sbr.rel (%p424) target = $region24
        $region23: #{vit_caption_forward.6} parent=15 // pred_region
          %p427 = scmp.lt.s32.totalorder %s30, 1
          %s428 = scalar_select %p427, %s30, 1
          %s429 = scalar_lea.vmem %s1, %s428
        $region24: #{vit_caption_forward.6} parent=15 // pred_fallthru
          _
        // Predicated region
        $region25: #{vit_caption_forward.6} parent=15 // pred_check
          %p430 = pneg %p106
        $region26: #{vit_caption_forward.6} parent=15 // pred_check_branch
          %432 = sbr.rel (%p430) target = $region28
        $region27: #{vit_caption_forward.6} parent=15 // pred_region
          %p433 = scmp.lt.s32.totalorder %s30, 1
          %s434 = scalar_select %p433, %s30, 1
          %s435 = scalar_lea.vmem %s2, %s434
        $region28: #{vit_caption_forward.6} parent=15 // pred_fallthru
          _
        // Predicated region
        $region29: #{vit_caption_forward.6} parent=15 // pred_check
          %p436 = pneg %p132
        $region30: #{vit_caption_forward.6} parent=15 // pred_check_branch
          %438 = sbr.rel (%p436) target = $region32
        $region31: #{vit_caption_forward.6} parent=15 // pred_region
          %s439 = sand.u32 %s122, 1
          %s440 = scalar_lea.sflag [#allocation3], %s439
          %s441 = sand.u32 %s122, 1
          %s442 = smul.addr %s441, 192
          %s443 = scalar_lea.vmem [#allocation2], %s442
          %445 = vsyncadd %s440, 0
          %s446 = smul.addr %s30, 48
          %s447 = smul.addr %s446, 4
          %s448 = scalar_lea.hbm %s3, %s447
          %s449 = sshll.u32 %s448, 4
          %s450 = int_to_ptr.hbm [resolvable:$true] %s449
          %s451 = sshll.u32 %s443, 4
          %s452 = int_to_ptr.vmem [resolvable:$true] %s451
          %457 = dma.hbm_to_vmem [thread:$0]  %s450, 3072, %s452, %s440, 192, 192, 12
        $region32: #{vit_caption_forward.6} parent=15 // pred_fallthru
          _
        // Predicated region
        $region33: #{vit_caption_forward.6} parent=15 // pred_check
          %p458 = pneg %p158
        $region34: #{vit_caption_forward.6} parent=15 // pred_check_branch
          %460 = sbr.rel (%p458) target = $region36
        $region35: #{vit_caption_forward.6} parent=15 // pred_region
          %p461 = scmp.lt.s32.totalorder %s30, 1
          %s462 = scalar_select %p461, %s30, 1
          %s463 = smul.addr %s462, 3
          %s464 = scalar_lea.vmem %s4, %s463
        $region36: #{vit_caption_forward.6} parent=15 // pred_fallthru
          _
        // Predicated region
        $region37: #{vit_caption_forward.6} parent=15 // pred_check
          %p465 = pneg %p184
        $region38: #{vit_caption_forward.6} parent=15 // pred_check_branch
          %467 = sbr.rel (%p465) target = $region40
        $region39: #{vit_caption_forward.6} parent=15 // pred_region
          %p468 = scmp.lt.s32.totalorder %s30, 1
          %s469 = scalar_select %p468, %s30, 1
          %s470 = smul.addr %s469, 16
          %s471 = smul.addr %s470, 4
          %s472 = scalar_lea.vmem %s5, %s471
        $region40: #{vit_caption_forward.6} parent=15 // pred_fallthru
          _
        // Predicated region
        $region41: #{vit_caption_forward.6} parent=15 // pred_check
          %p473 = pneg %p210
        $region42: #{vit_caption_forward.6} parent=15 // pred_check_branch
          %475 = sbr.rel (%p473) target = $region44
        $region43: #{vit_caption_forward.6} parent=15 // pred_region
          %p476 = scmp.lt.s32.totalorder %s30, 1
          %s477 = scalar_select %p476, %s30, 1
          %s478 = scalar_lea.vmem %s6, %s477
        $region44: #{vit_caption_forward.6} parent=15 // pred_fallthru
          _
        // Predicated region
        $region45: #{vit_caption_forward.6} parent=15 // pred_check
          %p479 = pneg %p236
        $region46: #{vit_caption_forward.6} parent=15 // pred_check_branch
          %481 = sbr.rel (%p479) target = $region48
        $region47: #{vit_caption_forward.6} parent=15 // pred_region
          %p482 = scmp.lt.s32.totalorder %s30, 1
          %s483 = scalar_select %p482, %s30, 1
          %s484 = scalar_lea.vmem %s7, %s483
        $region48: #{vit_caption_forward.6} parent=15 // pred_fallthru
          _
        // Predicated region
        $region49: #{vit_caption_forward.6} parent=15 // pred_check
          %p485 = pneg %p262
        $region50: #{vit_caption_forward.6} parent=15 // pred_check_branch
          %487 = sbr.rel (%p485) target = $region52
        $region51: #{vit_caption_forward.6} parent=15 // pred_region
          %p488 = scmp.lt.s32.totalorder %s30, 1
          %s489 = scalar_select %p488, %s30, 1
          %s490 = scalar_lea.vmem %s8, %s489
        $region52: #{vit_caption_forward.6} parent=15 // pred_fallthru
          _
        // Predicated region
        $region53: #{vit_caption_forward.6} parent=15 // pred_check
          %p491 = pneg %p288
        $region54: #{vit_caption_forward.6} parent=15 // pred_check_branch
          %493 = sbr.rel (%p491) target = $region56
        $region55: #{vit_caption_forward.6} parent=15 // pred_region
          %p494 = scmp.lt.s32.totalorder %s30, 1
          %s495 = scalar_select %p494, %s30, 1
          %s496 = smul.addr %s495, 64
          %s497 = smul.addr %s496, 4
          %s498 = scalar_lea.vmem %s9, %s497
        $region56: #{vit_caption_forward.6} parent=15 // pred_fallthru
          _
        // Predicated region
        $region57: #{vit_caption_forward.6} parent=15 // pred_check
          %p499 = pneg %p314
        $region58: #{vit_caption_forward.6} parent=15 // pred_check_branch
          %501 = sbr.rel (%p499) target = $region60
        $region59: #{vit_caption_forward.6} parent=15 // pred_region
          %p502 = scmp.lt.s32.totalorder %s30, 1
          %s503 = scalar_select %p502, %s30, 1
          %s504 = smul.addr %s503, 4
          %s505 = scalar_lea.vmem %s10, %s504
        $region60: #{vit_caption_forward.6} parent=15 // pred_fallthru
          _
        // Predicated region
        $region61: #{vit_caption_forward.6} parent=15 // pred_check
          %p506 = pneg %p340
        $region62: #{vit_caption_forward.6} parent=15 // pred_check_branch
          %508 = sbr.rel (%p506) target = $region64
        $region63: #{vit_caption_forward.6} parent=15 // pred_region
          %p509 = scmp.lt.s32.totalorder %s30, 1
          %s510 = scalar_select %p509, %s30, 1
          %s511 = smul.addr %s510, 64
          %s512 = smul.addr %s511, 4
          %s513 = scalar_lea.vmem %s11, %s512
        $region64: #{vit_caption_forward.6} parent=15 // pred_fallthru
          _
        // Predicated region
        $region65: #{vit_caption_forward.6} parent=15 // pred_check
          %p514 = pneg %p366
        $region66: #{vit_caption_forward.6} parent=15 // pred_check_branch
          %516 = sbr.rel (%p514) target = $region68
        $region67: #{vit_caption_forward.6} parent=15 // pred_region
          %p517 = scmp.lt.s32.totalorder %s30, 1
          %s518 = scalar_select %p517, %s30, 1
          %s519 = scalar_lea.vmem %s12, %s518
        $region68: #{vit_caption_forward.6} parent=15 // pred_fallthru
          _
      $region16: #{vit_caption_forward.6} parent=5 // pred_fallthru
        _
      %p520 = scmp.le.s32.totalorder 1, %s22
      %p521 = scmp.lt.s32.totalorder %s22, 5
      %p522 = pnand %p520, %p521
      %p523 = pneg %p522
      // Predicated region
      $region69: #{vit_caption_forward.6} parent=5 // pred_check
        _
      $region70: #{vit_caption_forward.6} parent=5 // pred_check_branch
        %525 = sbr.rel (%p522) target = $region72
      $region71: #{vit_caption_forward.6} parent=5 // pred_region
        %s526 = ssub.s32 %s22, 1
        %s527 = sand.u32 %s125, 1
        %s528 = scalar_lea.sflag [#allocation3], %s527
        %s529 = sand.u32 %s125, 1
        %s530 = smul.addr %s529, 192
        %s531 = scalar_lea.vmem [#allocation2], %s530
        // Predicated region
        $region73: #{vit_caption_forward.6} parent=71 // pred_check
          %p532 = pneg %p138
        $region74: #{vit_caption_forward.6} parent=71 // pred_check_branch
          %534 = sbr.rel (%p532) target = $region76
        $region75: #{vit_caption_forward.6} parent=71 // pred_region
          %536 = dma.done %s528, 3072
        $region76: #{vit_caption_forward.6} parent=71 // pred_fallthru
          _
        %p537 = scmp.lt.s32.totalorder %s31, 1
        %s538 = scalar_select %p537, %s31, 1
        %s539 = smul.addr %s538, 8
        %s540 = scalar_lea.vmem %s0, %s539
        %p541 = pneg %p60
        %p542 = pneg %p57
        %p543 = scmp.lt.s32.totalorder %s32, 1
        %s544 = scalar_select %p543, %s32, 1
        %s545 = scalar_lea.vmem %s1, %s544
        %p546 = pneg %p86
        %p547 = pneg %p83
        %p548 = scmp.lt.s32.totalorder %s32, 1
        %s549 = scalar_select %p548, %s32, 1
        %s550 = scalar_lea.vmem %s2, %s549
        %p551 = pneg %p112
        %p552 = pneg %p109
        %s553 = sand.u32 %s125, 1
        %s554 = scalar_lea.sflag [#allocation3], %s553
        %s555 = sand.u32 %s125, 1
        %s556 = smul.addr %s555, 192
        %s557 = scalar_lea.vmem [#allocation2], %s556
        %p558 = pneg %p138
        %p559 = pneg %p135
        %p560 = scmp.lt.s32.totalorder %s32, 1
        %s561 = scalar_select %p560, %s32, 1
        %s562 = smul.addr %s561, 3
        %s563 = scalar_lea.vmem %s4, %s562
        %p564 = pneg %p164
        %p565 = pneg %p161
        %p566 = scmp.lt.s32.totalorder %s32, 1
        %s567 = scalar_select %p566, %s32, 1
        %s568 = smul.addr %s567, 16
        %s569 = smul.addr %s568, 4
        %s570 = scalar_lea.vmem %s5, %s569
        %p571 = pneg %p190
        %p572 = pneg %p187
        %p573 = scmp.lt.s32.totalorder %s32, 1
        %s574 = scalar_select %p573, %s32, 1
        %s575 = scalar_lea.vmem %s6, %s574
        %p576 = pneg %p216
        %p577 = pneg %p213
        %p578 = scmp.lt.s32.totalorder %s32, 1
        %s579 = scalar_select %p578, %s32, 1
        %s580 = scalar_lea.vmem %s7, %s579
        %p581 = pneg %p242
        %p582 = pneg %p239
        %p583 = scmp.lt.s32.totalorder %s32, 1
        %s584 = scalar_select %p583, %s32, 1
        %s585 = scalar_lea.vmem %s8, %s584
        %p586 = pneg %p268
        %p587 = pneg %p265
        %p588 = scmp.lt.s32.totalorder %s32, 1
        %s589 = scalar_select %p588, %s32, 1
        %s590 = smul.addr %s589, 64
        %s591 = smul.addr %s590, 4
        %s592 = scalar_lea.vmem %s9, %s591
        %p593 = pneg %p294
        %p594 = pneg %p291
        %p595 = scmp.lt.s32.totalorder %s32, 1
        %s596 = scalar_select %p595, %s32, 1
        %s597 = smul.addr %s596, 4
        %s598 = scalar_lea.vmem %s10, %s597
        %p599 = pneg %p320
        %p600 = pneg %p317
        %p601 = scmp.lt.s32.totalorder %s32, 1
        %s602 = scalar_select %p601, %s32, 1
        %s603 = smul.addr %s602, 64
        %s604 = smul.addr %s603, 4
        %s605 = scalar_lea.vmem %s11, %s604
        %p606 = pneg %p346
        %p607 = pneg %p343
        %p608 = scmp.lt.s32.totalorder %s32, 1
        %s609 = scalar_select %p608, %s32, 1
        %s610 = scalar_lea.vmem %s12, %s609
        %p611 = pneg %p372
        %p612 = pneg %p369
        %p613 = pneg %p398
        %p614 = pneg %p395
        %p615 = scmp.lt.s32.totalorder %s31, 1
        %s616 = scalar_select %p615, %s31, 1
        %s617 = smul.addr %s616, 8
        %s618 = scalar_lea.vmem %s13, %s617
        %p619 = scmp.lt.s32.totalorder %s31, 1
        %s620 = scalar_select %p619, %s31, 1
        %s621 = smul.addr %s620, 8
        %s622 = scalar_lea.vmem %s0, %s621
        %p623 = scmp.lt.s32.totalorder %s32, 1
        %s624 = scalar_select %p623, %s32, 1
        %s625 = scalar_lea.vmem %s1, %s624
        %p626 = scmp.lt.s32.totalorder %s32, 1
        %s627 = scalar_select %p626, %s32, 1
        %s628 = scalar_lea.vmem %s2, %s627
        %p629 = scmp.lt.s32.totalorder %s32, 1
        %s630 = scalar_select %p629, %s32, 1
        %s631 = smul.addr %s630, 3
        %s632 = scalar_lea.vmem %s4, %s631
        %p633 = scmp.lt.s32.totalorder %s32, 1
        %s634 = scalar_select %p633, %s32, 1
        %s635 = smul.addr %s634, 16
        %s636 = smul.addr %s635, 4
        %s637 = scalar_lea.vmem %s5, %s636
        %p638 = scmp.lt.s32.totalorder %s32, 1
        %s639 = scalar_select %p638, %s32, 1
        %s640 = scalar_lea.vmem %s6, %s639
        %p641 = scmp.lt.s32.totalorder %s32, 1
        %s642 = scalar_select %p641, %s32, 1
        %s643 = scalar_lea.vmem %s7, %s642
        %p644 = scmp.lt.s32.totalorder %s32, 1
        %s645 = scalar_select %p644, %s32, 1
        %s646 = scalar_lea.vmem %s8, %s645
        %p647 = scmp.lt.s32.totalorder %s32, 1
        %s648 = scalar_select %p647, %s32, 1
        %s649 = smul.addr %s648, 64
        %s650 = smul.addr %s649, 4
        %s651 = scalar_lea.vmem %s9, %s650
        %p652 = scmp.lt.s32.totalorder %s32, 1
        %s653 = scalar_select %p652, %s32, 1
        %s654 = smul.addr %s653, 4
        %s655 = scalar_lea.vmem %s10, %s654
        %p656 = scmp.lt.s32.totalorder %s32, 1
        %s657 = scalar_select %p656, %s32, 1
        %s658 = smul.addr %s657, 64
        %s659 = smul.addr %s658, 4
        %s660 = scalar_lea.vmem %s11, %s659
        %p661 = scmp.lt.s32.totalorder %s32, 1
        %s662 = scalar_select %p661, %s32, 1
        %s663 = scalar_lea.vmem %s12, %s662
        %p664 = scmp.lt.s32.totalorder %s31, 1
        %s665 = scalar_select %p664, %s31, 1
        %s666 = smul.addr %s665, 8
        %s667 = scalar_lea.vmem %s13, %s666
        %p669 = scmp.eq.s32.totalorder %s32, 0
        // Predicated region
        $region77: #{vit_caption_forward.6} parent=71 // pred_check
          %p670 = pneg %p669
        $region78: #{vit_caption_forward.6} parent=71 // pred_check_branch
          %672 = sbr.rel (%p670) target = $region80
        $region79: #{vit_caption_forward.6} parent=71 // pred_region
          %v673 = vld [vmem:[%s622] sm:$0xff]
          %674 = vst [vmem:[%s667] sm:$0xff] %v673
        $region80: #{vit_caption_forward.6} parent=71 // pred_fallthru
          _
        %v675 = vld [vmem:[%s667] sm:$0xff]
        %v676 = vlaneseq
        %v677 = vand.u32 %v676, 127
        %vm678 = vcmp.lt.s32.totalorder %v677, 5
        %v679 = vsel %vm678, 0.0, -1e+30
        %v680 = vld [vmem:[%s625] sm:$0x1]
        %v681 = vld [vmem:[%s628] sm:$0x1]
        %682 = vadd.xlane.f32.xlu0 %v675
        %v683 = vpop.xlane.xlu0 %682
        %v684 = vrcp.pop 128.0
        %v685 = vmul.f32 128.0, %v684
        %v686 = vsub.f32 1.0, %v685
        %v687 = vmul.f32 %v684, %v686
        %v688 = vadd.f32 %v684, %v687
        %vm689 = vweird.f32 %v684
        %v690 = vsel %vm689, %v684, %v688
        %v691 = vmul.f32 %v683, %v690
        %v692 = vsub.f32 %v675, %v691
        %v693 = vmul.f32 %v692, %v692
        %694 = vadd.xlane.f32.xlu0 %v693
        %v695 = vpop.xlane.xlu0 %694
        %v696 = vmul.f32 %v695, %v690
        %v697 = vadd.f32 %v696, 1e-05
        %v698 = vrsqrt.pop %v697
        %v699 = vmul.f32 %v698, %v697
        %v700 = vmul.f32 %v699, %v698
        %v701 = vmul.f32 0.5, %v700
        %v702 = vsub.f32 1.5, %v701
        %v703 = vmul.f32 %v698, %v702
        %vm704 = vweird.f32 %v697
        %vm705 = vweird.f32 %v698
        %vm706 = vmor %vm704, %vm705
        %v707 = vsel %vm706, %v698, %v703
        %v708 = vmul.f32 %v692, %v707
        %v710 = vperm.slane %v680, 0
        %v712 = vmul.f32 %v708, %v710
        %v714 = vperm.slane %v681, 0
        %v716 = vadd.f32 %v712, %v714
        %v717 = vpack.c.bf16 %v716, %v716
        %v718 = vld [vmem:[%s531] sm:$0xff]
        %v719 = vld [vmem:[%s531 + $0x8] sm:$0xf]
        %v720 = vld [vmem:[%s531 + $0xc] sm:$0xff]
        %v721 = vld [vmem:[%s531 + $0x14] sm:$0xf]
        %v722 = vld [vmem:[%s531 + $0x18] sm:$0xff]
        %v723 = vld [vmem:[%s531 + $0x20] sm:$0xf]
        %v724 = vld [vmem:[%s531 + $0x24] sm:$0xff]
        %v725 = vld [vmem:[%s531 + $0x2c] sm:$0xf]
        %v726 = vld [vmem:[%s531 + $0x30] sm:$0xff]
        %v727 = vld [vmem:[%s531 + $0x38] sm:$0xf]
        %v728 = vld [vmem:[%s531 + $0x3c] sm:$0xff]
        %v729 = vld [vmem:[%s531 + $0x44] sm:$0xf]
        %v730 = vld [vmem:[%s531 + $0x48] sm:$0xff]
        %v731 = vld [vmem:[%s531 + $0x50] sm:$0xf]
        %v732 = vld [vmem:[%s531 + $0x54] sm:$0xff]
        %v733 = vld [vmem:[%s531 + $0x5c] sm:$0xf]
        %v734 = vld [vmem:[%s531 + $0x60] sm:$0xff]
        %v735 = vld [vmem:[%s531 + $0x68] sm:$0xf]
        %v736 = vld [vmem:[%s531 + $0x6c] sm:$0xff]
        %v737 = vld [vmem:[%s531 + $0x74] sm:$0xf]
        %v738 = vld [vmem:[%s531 + $0x78] sm:$0xff]
        %v739 = vld [vmem:[%s531 + $0x80] sm:$0xf]
        %v740 = vld [vmem:[%s531 + $0x84] sm:$0xff]
        %v741 = vld [vmem:[%s531 + $0x8c] sm:$0xf]
        %v742 = vld [vmem:[%s531 + $0x90] sm:$0xff]
        %v743 = vld [vmem:[%s531 + $0x98] sm:$0xf]
        %v744 = vld [vmem:[%s531 + $0x9c] sm:$0xff]
        %v745 = vld [vmem:[%s531 + $0xa4] sm:$0xf]
        %v746 = vld [vmem:[%s531 + $0xa8] sm:$0xff]
        %v747 = vld [vmem:[%s531 + $0xb0] sm:$0xf]
        %v748 = vld [vmem:[%s531 + $0xb4] sm:$0xff]
        %v749 = vld [vmem:[%s531 + $0xbc] sm:$0xf]
        %v750 = vld [vmem:[%s632] sm:$0x7]
        %v752 = vperm.slane %v750, 0
        %v753 = vperm.slane %v750, 1
        %v754 = vperm.slane %v750, 2
        %v790 = vunpack.c.l.b16 %v718
        %v791 = vunpack.c.h.b16 %v718
        %v792 = vunpack.c.l.b16 %v719
        %v793 = vunpack.c.l.b16 %v720
        %v794 = vunpack.c.h.b16 %v720
        %v795 = vunpack.c.l.b16 %v721
        %v796 = vunpack.c.l.b16 %v722
        %v797 = vunpack.c.h.b16 %v722
        %v798 = vunpack.c.l.b16 %v723
        %v799 = vunpack.c.l.b16 %v724
        %v800 = vunpack.c.h.b16 %v724
        %v801 = vunpack.c.l.b16 %v725
        %v802 = vunpack.c.l.b16 %v726
        %v803 = vunpack.c.h.b16 %v726
        %v804 = vunpack.c.l.b16 %v727
        %v805 = vunpack.c.l.b16 %v728
        %v806 = vunpack.c.h.b16 %v728
        %v807 = vunpack.c.l.b16 %v729
        %v808 = vunpack.c.l.b16 %v730
        %v809 = vunpack.c.h.b16 %v730
        %v810 = vunpack.c.l.b16 %v731
        %v811 = vunpack.c.l.b16 %v732
        %v812 = vunpack.c.h.b16 %v732
        %v813 = vunpack.c.l.b16 %v733
        %v814 = vunpack.c.l.b16 %v734
        %v815 = vunpack.c.h.b16 %v734
        %v816 = vunpack.c.l.b16 %v735
        %v817 = vunpack.c.l.b16 %v736
        %v818 = vunpack.c.h.b16 %v736
        %v819 = vunpack.c.l.b16 %v737
        %v820 = vunpack.c.l.b16 %v738
        %v821 = vunpack.c.h.b16 %v738
        %v822 = vunpack.c.l.b16 %v739
        %v823 = vunpack.c.l.b16 %v740
        %v824 = vunpack.c.h.b16 %v740
        %v825 = vunpack.c.l.b16 %v741
        %v826 = vunpack.c.l.b16 %v742
        %v827 = vunpack.c.h.b16 %v742
        %v828 = vunpack.c.l.b16 %v743
        %v829 = vunpack.c.l.b16 %v744
        %v830 = vunpack.c.h.b16 %v744
        %v831 = vunpack.c.l.b16 %v745
        %v832 = vunpack.c.l.b16 %v746
        %v833 = vunpack.c.h.b16 %v746
        %v834 = vunpack.c.l.b16 %v747
        %v835 = vunpack.c.l.b16 %v748
        %v836 = vunpack.c.h.b16 %v748
        %v837 = vunpack.c.l.b16 %v749
        %v838 = vpack.c.b16 %v793, %v790
        %v839 = vpack.c.b16 %v794, %v791
        %v840 = vpack.c.b16 %v795, %v792
        %v841 = vpack.c.b16 %v799, %v796
        %v842 = vpack.c.b16 %v800, %v797
        %v843 = vpack.c.b16 %v801, %v798
        %v844 = vpack.c.b16 %v805, %v802
        %v845 = vpack.c.b16 %v806, %v803
        %v846 = vpack.c.b16 %v807, %v804
        %v847 = vpack.c.b16 %v811, %v808
        %v848 = vpack.c.b16 %v812, %v809
        %v849 = vpack.c.b16 %v813, %v810
        %v850 = vpack.c.b16 %v817, %v814
        %v851 = vpack.c.b16 %v818, %v815
        %v852 = vpack.c.b16 %v819, %v816
        %v853 = vpack.c.b16 %v823, %v820
        %v854 = vpack.c.b16 %v824, %v821
        %v855 = vpack.c.b16 %v825, %v822
        %v856 = vpack.c.b16 %v829, %v826
        %v857 = vpack.c.b16 %v830, %v827
        %v858 = vpack.c.b16 %v831, %v828
        %v859 = vpack.c.b16 %v835, %v832
        %v860 = vpack.c.b16 %v836, %v833
        %v861 = vpack.c.b16 %v837, %v834
        %886 = vmatpush.bf16.msra.mxu0 %v859
        %887 = vmatpush.bf16.msra.mxu0 %v856
        %888 = vmatpush.bf16.msra.mxu0 %v853
        %889 = vmatpush.bf16.msra.mxu0 %v850
        %890 = vmatpush.bf16.msra.mxu0 %v847
        %891 = vmatpush.bf16.msra.mxu0 %v844
        %892 = vmatpush.bf16.msra.mxu0 %v841
        %893 = vmatpush.bf16.msra.mxu0 %v838
        %894 = vmatmul.bf16.gmra.mxu0 %v717
        %v895 = vpop.f32.mrf.mxu0
        %v896 = vadd.f32 %v752, %v895
        %v897 = vpop.f32.mrf.mxu0
        %898 = vdwg.mxu0
        %899 = vmatpush.bf16.msra.mxu0 %v860
        %900 = vmatpush.bf16.msra.mxu0 %v857
        %901 = vmatpush.bf16.msra.mxu0 %v854
        %902 = vmatpush.bf16.msra.mxu0 %v851
        %903 = vmatpush.bf16.msra.mxu0 %v848
        %904 = vmatpush.bf16.msra.mxu0 %v845
        %905 = vmatpush.bf16.msra.mxu0 %v842
        %906 = vmatpush.bf16.msra.mxu0 %v839
        %907 = vmatmul.bf16.gmra.mxu0 %v717
        %v908 = vpop.f32.mrf.mxu0
        %v909 = vadd.f32 %v753, %v908
        %v910 = vpop.f32.mrf.mxu0
        %911 = vdwg.mxu0
        %912 = vmatpush.bf16.msra.mxu0 %v861
        %913 = vmatpush.bf16.msra.mxu0 %v858
        %914 = vmatpush.bf16.msra.mxu0 %v855
        %915 = vmatpush.bf16.msra.mxu0 %v852
        %916 = vmatpush.bf16.msra.mxu0 %v849
        %917 = vmatpush.bf16.msra.mxu0 %v846
        %918 = vmatpush.bf16.msra.mxu0 %v843
        %919 = vmatpush.bf16.msra.mxu0 %v840
        %920 = vmatmul.bf16.gmra.mxu0 %v717
        %v921 = vpop.f32.mrf.mxu0
        %v922 = vadd.f32 %v754, %v921
        %v923 = vpop.f32.mrf.mxu0
        %924 = vdwg.mxu0
        %v925 = vpack.c.bf16 %v896, %v896
        %927 = vrot.lane.b32.xlu0 %v925, 96
        %v928 = vpop.permute.xlu0 %927
        %929 = vrot.lane.b32.xlu0 %v925, 64
        %v930 = vpop.permute.xlu0 %929
        %931 = vrot.lane.b32.xlu0 %v925, 32
        %v932 = vpop.permute.xlu0 %931
        %v933 = vpack.c.bf16 %v909, %v909
        %935 = vrot.lane.b32.xlu0 %v933, 96
        %v936 = vpop.permute.xlu0 %935
        %937 = vrot.lane.b32.xlu0 %v933, 64
        %v938 = vpop.permute.xlu0 %937
        %939 = vrot.lane.b32.xlu0 %v933, 32
        %v940 = vpop.permute.xlu0 %939
        %v941 = vpack.c.bf16 %v922, %v922
        %943 = vrot.lane.b32.xlu0 %v941, 96
        %v944 = vpop.permute.xlu0 %943
        %945 = vrot.lane.b32.xlu0 %v941, 64
        %v946 = vpop.permute.xlu0 %945
        %947 = vrot.lane.b32.xlu0 %v941, 32
        %v948 = vpop.permute.xlu0 %947
        %vm949 = vcmask 261120
        %v951 = vsel %vm949, %v925, 0
        %v954 = vsel %vm949, %v933, 0
        %956 = vmatpush.bf16.xpose.msra.mxu0 0
        %957 = vmatpush.bf16.xpose.msra.mxu0 0
        %958 = vmatpush.bf16.xpose.msra.mxu0 0
        %959 = vmatpush.bf16.xpose.msra.mxu0 0
        %960 = vmatpush.bf16.xpose.msra.mxu0 0
        %961 = vmatpush.bf16.xpose.msra.mxu0 0
        %962 = vmatpush.bf16.xpose.msra.mxu0 0
        %963 = vmatpush.bf16.xpose.msra.mxu0 %v954
        %964 = vmatmul.bf16.gmra.mxu0 %v951
        %v965 = vpop.f32.mrf.mxu0
        %v966 = vadd.f32 0.0, %v965
        %v967 = vpop.f32.mrf.mxu0
        %968 = vdwg.mxu0
        %v970 = vsel %vm949, %v928, 0
        %v973 = vsel %vm949, %v936, 0
        %975 = vmatpush.bf16.xpose.msra.mxu0 0
        %976 = vmatpush.bf16.xpose.msra.mxu0 0
        %977 = vmatpush.bf16.xpose.msra.mxu0 0
        %978 = vmatpush.bf16.xpose.msra.mxu0 0
        %979 = vmatpush.bf16.xpose.msra.mxu0 0
        %980 = vmatpush.bf16.xpose.msra.mxu0 0
        %981 = vmatpush.bf16.xpose.msra.mxu0 0
        %982 = vmatpush.bf16.xpose.msra.mxu0 %v973
        %983 = vmatmul.bf16.gmra.mxu0 %v970
        %v984 = vpop.f32.mrf.mxu0
        %v985 = vadd.f32 0.0, %v984
        %v986 = vpop.f32.mrf.mxu0
        %987 = vdwg.mxu0
        %v989 = vsel %vm949, %v930, 0
        %v992 = vsel %vm949, %v938, 0
        %994 = vmatpush.bf16.xpose.msra.mxu0 0
        %995 = vmatpush.bf16.xpose.msra.mxu0 0
        %996 = vmatpush.bf16.xpose.msra.mxu0 0
        %997 = vmatpush.bf16.xpose.msra.mxu0 0
        %998 = vmatpush.bf16.xpose.msra.mxu0 0
        %999 = vmatpush.bf16.xpose.msra.mxu0 0
        %1000 = vmatpush.bf16.xpose.msra.mxu0 0
        %1001 = vmatpush.bf16.xpose.msra.mxu0 %v992
        %1002 = vmatmul.bf16.gmra.mxu0 %v989
        %v1003 = vpop.f32.mrf.mxu0
        %v1004 = vadd.f32 0.0, %v1003
        %v1005 = vpop.f32.mrf.mxu0
        %1006 = vdwg.mxu0
        %v1008 = vsel %vm949, %v932, 0
        %v1011 = vsel %vm949, %v940, 0
        %1013 = vmatpush.bf16.xpose.msra.mxu0 0
        %1014 = vmatpush.bf16.xpose.msra.mxu0 0
        %1015 = vmatpush.bf16.xpose.msra.mxu0 0
        %1016 = vmatpush.bf16.xpose.msra.mxu0 0
        %1017 = vmatpush.bf16.xpose.msra.mxu0 0
        %1018 = vmatpush.bf16.xpose.msra.mxu0 0
        %1019 = vmatpush.bf16.xpose.msra.mxu0 0
        %1020 = vmatpush.bf16.xpose.msra.mxu0 %v1011
        %1021 = vmatmul.bf16.gmra.mxu0 %v1008
        %v1022 = vpop.f32.mrf.mxu0
        %v1023 = vadd.f32 0.0, %v1022
        %v1024 = vpop.f32.mrf.mxu0
        %1025 = vdwg.mxu0
        %v1026 = vmul.f32 %v966, 0.17677669
        %v1027 = vmul.f32 %v985, 0.17677669
        %v1028 = vmul.f32 %v1004, 0.17677669
        %v1029 = vmul.f32 %v1023, 0.17677669
        %v1030 = vadd.f32 %v1026, %v679
        %v1031 = vadd.f32 %v1027, %v679
        %v1032 = vadd.f32 %v1028, %v679
        %v1033 = vadd.f32 %v1029, %v679
        %vm1034 = vcmask 64512
        %v1035 = vsel %vm1034, %v1030, -inf
        %1036 = vmax.xlane.f32.xlu0 %v1035
        %v1037 = vpop.xlane.xlu0 %1036
        %v1038 = vsel %vm1034, %v1031, -inf
        %1039 = vmax.xlane.f32.xlu0 %v1038
        %v1040 = vpop.xlane.xlu0 %1039
        %v1041 = vsel %vm1034, %v1032, -inf
        %1042 = vmax.xlane.f32.xlu0 %v1041
        %v1043 = vpop.xlane.xlu0 %1042
        %v1044 = vsel %vm1034, %v1033, -inf
        %1045 = vmax.xlane.f32.xlu0 %v1044
        %v1046 = vpop.xlane.xlu0 %1045
        %v1047 = vsub.f32 %v1030, %v1037
        %v1048 = vsub.f32 %v1031, %v1040
        %v1049 = vsub.f32 %v1032, %v1043
        %v1050 = vsub.f32 %v1033, %v1046
        %v1051 = vmul.f32 %v1047, 1.442695
        %v1052 = vpow.pop %v1051
        %v1053 = vmul.f32 %v1048, 1.442695
        %v1054 = vpow.pop %v1053
        %v1055 = vmul.f32 %v1049, 1.442695
        %v1056 = vpow.pop %v1055
        %v1057 = vmul.f32 %v1050, 1.442695
        %v1058 = vpow.pop %v1057
        %v1059 = vsel %vm1034, %v1052, 0.0
        %1060 = vadd.xlane.f32.xlu0 %v1059
        %v1061 = vpop.xlane.xlu0 %1060
        %v1062 = vsel %vm1034, %v1054, 0.0
        %1063 = vadd.xlane.f32.xlu0 %v1062
        %v1064 = vpop.xlane.xlu0 %1063
        %v1065 = vsel %vm1034, %v1056, 0.0
        %1066 = vadd.xlane.f32.xlu0 %v1065
        %v1067 = vpop.xlane.xlu0 %1066
        %v1068 = vsel %vm1034, %v1058, 0.0
        %1069 = vadd.xlane.f32.xlu0 %v1068
        %v1070 = vpop.xlane.xlu0 %1069
        %v1071 = vrcp.pop %v1061
        %v1072 = vrcp.pop %v1064
        %v1073 = vrcp.pop %v1067
        %v1074 = vrcp.pop %v1070
        %v1075 = vmul.f32 %v1052, %v1071
        %v1076 = vmul.f32 %v1054, %v1072
        %v1077 = vmul.f32 %v1056, %v1073
        %v1078 = vmul.f32 %v1058, %v1074
        %v1079 = vpack.c.bf16 %v1075, %v1075
        %v1080 = vpack.c.bf16 %v1076, %v1076
        %v1081 = vpack.c.bf16 %v1077, %v1077
        %v1082 = vpack.c.bf16 %v1078, %v1078
        %v1084 = vsel %vm1034, %v1079, 0
        %vm1086 = vcmask 1043456
        %v1088 = vsel %vm1086, %v941, 0
        %1090 = vmatpush.bf16.msra.mxu0 0
        %1091 = vmatpush.bf16.msra.mxu0 0
        %1092 = vmatpush.bf16.msra.mxu0 0
        %1093 = vmatpush.bf16.msra.mxu0 0
        %1094 = vmatpush.bf16.msra.mxu0 0
        %1095 = vmatpush.bf16.msra.mxu0 0
        %1096 = vmatpush.bf16.msra.mxu0 0
        %1097 = vmatpush.bf16.msra.mxu0 %v1088
        %1098 = vmatmul.bf16.gmra.mxu0 %v1084
        %v1099 = vpop.f32.mrf.mxu0
        %v1100 = vadd.f32 0.0, %v1099
        %v1101 = vpop.f32.mrf.mxu0
        %1102 = vdwg.mxu0
        %v1104 = vsel %vm1034, %v1080, 0
        %v1107 = vsel %vm1086, %v944, 0
        %1109 = vmatpush.bf16.msra.mxu0 0
        %1110 = vmatpush.bf16.msra.mxu0 0
        %1111 = vmatpush.bf16.msra.mxu0 0
        %1112 = vmatpush.bf16.msra.mxu0 0
        %1113 = vmatpush.bf16.msra.mxu0 0
        %1114 = vmatpush.bf16.msra.mxu0 0
        %1115 = vmatpush.bf16.msra.mxu0 0
        %1116 = vmatpush.bf16.msra.mxu0 %v1107
        %1117 = vmatmul.bf16.gmra.mxu0 %v1104
        %v1118 = vpop.f32.mrf.mxu0
        %v1119 = vadd.f32 0.0, %v1118
        %v1120 = vpop.f32.mrf.mxu0
        %1121 = vdwg.mxu0
        %v1123 = vsel %vm1034, %v1081, 0
        %v1126 = vsel %vm1086, %v946, 0
        %1128 = vmatpush.bf16.msra.mxu0 0
        %1129 = vmatpush.bf16.msra.mxu0 0
        %1130 = vmatpush.bf16.msra.mxu0 0
        %1131 = vmatpush.bf16.msra.mxu0 0
        %1132 = vmatpush.bf16.msra.mxu0 0
        %1133 = vmatpush.bf16.msra.mxu0 0
        %1134 = vmatpush.bf16.msra.mxu0 0
        %1135 = vmatpush.bf16.msra.mxu0 %v1126
        %1136 = vmatmul.bf16.gmra.mxu0 %v1123
        %v1137 = vpop.f32.mrf.mxu0
        %v1138 = vadd.f32 0.0, %v1137
        %v1139 = vpop.f32.mrf.mxu0
        %1140 = vdwg.mxu0
        %v1142 = vsel %vm1034, %v1082, 0
        %v1145 = vsel %vm1086, %v948, 0
        %1147 = vmatpush.bf16.msra.mxu0 0
        %1148 = vmatpush.bf16.msra.mxu0 0
        %1149 = vmatpush.bf16.msra.mxu0 0
        %1150 = vmatpush.bf16.msra.mxu0 0
        %1151 = vmatpush.bf16.msra.mxu0 0
        %1152 = vmatpush.bf16.msra.mxu0 0
        %1153 = vmatpush.bf16.msra.mxu0 0
        %1154 = vmatpush.bf16.msra.mxu0 %v1145
        %1155 = vmatmul.bf16.gmra.mxu0 %v1142
        %v1156 = vpop.f32.mrf.mxu0
        %v1157 = vadd.f32 0.0, %v1156
        %v1158 = vpop.f32.mrf.mxu0
        %1159 = vdwg.mxu0
        %1161 = vrot.lane.b32.xlu0 %v1119, 32
        %v1162 = vpop.permute.xlu0 %1161
        %1165 = vrot.lane.b32.xlu0 %v1138, 64
        %v1166 = vpop.permute.xlu0 %1165
        %1169 = vrot.lane.b32.xlu0 %v1157, 96
        %v1170 = vpop.permute.xlu0 %1169
        %v1172 = vsel %vm949, %v1100, %v1162
        %vm1173 = vcmask 523264
        %v1174 = vsel %vm1173, %v1172, %v1166
        %vm1175 = vcmask 785408
        %v1176 = vsel %vm1175, %v1174, %v1170
        %v1177 = vpack.c.bf16 %v1176, %v1176
        %v1178 = vld [vmem:[%s637] sm:$0xf]
        %v1179 = vld [vmem:[%s637 + $0x4] sm:$0xf]
        %v1180 = vld [vmem:[%s637 + $0x8] sm:$0xf]
        %v1181 = vld [vmem:[%s637 + $0xc] sm:$0xf]
        %v1182 = vld [vmem:[%s637 + $0x10] sm:$0xf]
        %v1183 = vld [vmem:[%s637 + $0x14] sm:$0xf]
        %v1184 = vld [vmem:[%s637 + $0x18] sm:$0xf]
        %v1185 = vld [vmem:[%s637 + $0x1c] sm:$0xf]
        %v1186 = vld [vmem:[%s637 + $0x20] sm:$0xf]
        %v1187 = vld [vmem:[%s637 + $0x24] sm:$0xf]
        %v1188 = vld [vmem:[%s637 + $0x28] sm:$0xf]
        %v1189 = vld [vmem:[%s637 + $0x2c] sm:$0xf]
        %v1190 = vld [vmem:[%s637 + $0x30] sm:$0xf]
        %v1191 = vld [vmem:[%s637 + $0x34] sm:$0xf]
        %v1192 = vld [vmem:[%s637 + $0x38] sm:$0xf]
        %v1193 = vld [vmem:[%s637 + $0x3c] sm:$0xf]
        %v1210 = vunpack.c.l.b16 %v1178
        %v1211 = vunpack.c.l.b16 %v1179
        %v1212 = vunpack.c.l.b16 %v1180
        %v1213 = vunpack.c.l.b16 %v1181
        %v1214 = vunpack.c.l.b16 %v1182
        %v1215 = vunpack.c.l.b16 %v1183
        %v1216 = vunpack.c.l.b16 %v1184
        %v1217 = vunpack.c.l.b16 %v1185
        %v1218 = vunpack.c.l.b16 %v1186
        %v1219 = vunpack.c.l.b16 %v1187
        %v1220 = vunpack.c.l.b16 %v1188
        %v1221 = vunpack.c.l.b16 %v1189
        %v1222 = vunpack.c.l.b16 %v1190
        %v1223 = vunpack.c.l.b16 %v1191
        %v1224 = vunpack.c.l.b16 %v1192
        %v1225 = vunpack.c.l.b16 %v1193
        %v1226 = vpack.c.b16 %v1211, %v1210
        %v1227 = vpack.c.b16 %v1213, %v1212
        %v1228 = vpack.c.b16 %v1215, %v1214
        %v1229 = vpack.c.b16 %v1217, %v1216
        %v1230 = vpack.c.b16 %v1219, %v1218
        %v1231 = vpack.c.b16 %v1221, %v1220
        %v1232 = vpack.c.b16 %v1223, %v1222
        %v1233 = vpack.c.b16 %v1225, %v1224
        %1242 = vmatpush.bf16.msra.mxu0 %v1233
        %1243 = vmatpush.bf16.msra.mxu0 %v1232
        %1244 = vmatpush.bf16.msra.mxu0 %v1231
        %1245 = vmatpush.bf16.msra.mxu0 %v1230
        %1246 = vmatpush.bf16.msra.mxu0 %v1229
        %1247 = vmatpush.bf16.msra.mxu0 %v1228
        %1248 = vmatpush.bf16.msra.mxu0 %v1227
        %1249 = vmatpush.bf16.msra.mxu0 %v1226
        %1250 = vmatmul.bf16.gmra.mxu0 %v1177
        %v1251 = vpop.f32.mrf.mxu0
        %v1252 = vadd.f32 0.0, %v1251
        %v1253 = vpop.f32.mrf.mxu0
        %1254 = vdwg.mxu0
        %v1255 = vadd.f32 %v675, %v1252
        %v1256 = vld [vmem:[%s640] sm:$0x1]
        %v1258 = vperm.slane %v1256, 0
        %v1260 = vadd.f32 %v1255, %v1258
        %v1261 = vld [vmem:[%s643] sm:$0x1]
        %v1262 = vld [vmem:[%s646] sm:$0x1]
        %1263 = vadd.xlane.f32.xlu0 %v1260
        %v1264 = vpop.xlane.xlu0 %1263
        %v1265 = vmul.f32 %v1264, %v690
        %v1266 = vsub.f32 %v1260, %v1265
        %v1267 = vmul.f32 %v1266, %v1266
        %1268 = vadd.xlane.f32.xlu0 %v1267
        %v1269 = vpop.xlane.xlu0 %1268
        %v1270 = vmul.f32 %v1269, %v690
        %v1271 = vadd.f32 %v1270, 1e-05
        %v1272 = vrsqrt.pop %v1271
        %v1273 = vmul.f32 %v1272, %v1271
        %v1274 = vmul.f32 %v1273, %v1272
        %v1275 = vmul.f32 0.5, %v1274
        %v1276 = vsub.f32 1.5, %v1275
        %v1277 = vmul.f32 %v1272, %v1276
        %vm1278 = vweird.f32 %v1271
        %vm1279 = vweird.f32 %v1272
        %vm1280 = vmor %vm1278, %vm1279
        %v1281 = vsel %vm1280, %v1272, %v1277
        %v1282 = vmul.f32 %v1266, %v1281
        %v1284 = vperm.slane %v1261, 0
        %v1286 = vmul.f32 %v1282, %v1284
        %v1288 = vperm.slane %v1262, 0
        %v1290 = vadd.f32 %v1286, %v1288
        %v1291 = vpack.c.bf16 %v1290, %v1290
        %v1292 = vld [vmem:[%s651] sm:$0xff]
        %v1293 = vld [vmem:[%s651 + $0x8] sm:$0xff]
        %v1294 = vld [vmem:[%s651 + $0x10] sm:$0xff]
        %v1295 = vld [vmem:[%s651 + $0x18] sm:$0xff]
        %v1296 = vld [vmem:[%s651 + $0x20] sm:$0xff]
        %v1297 = vld [vmem:[%s651 + $0x28] sm:$0xff]
        %v1298 = vld [vmem:[%s651 + $0x30] sm:$0xff]
        %v1299 = vld [vmem:[%s651 + $0x38] sm:$0xff]
        %v1300 = vld [vmem:[%s651 + $0x40] sm:$0xff]
        %v1301 = vld [vmem:[%s651 + $0x48] sm:$0xff]
        %v1302 = vld [vmem:[%s651 + $0x50] sm:$0xff]
        %v1303 = vld [vmem:[%s651 + $0x58] sm:$0xff]
        %v1304 = vld [vmem:[%s651 + $0x60] sm:$0xff]
        %v1305 = vld [vmem:[%s651 + $0x68] sm:$0xff]
        %v1306 = vld [vmem:[%s651 + $0x70] sm:$0xff]
        %v1307 = vld [vmem:[%s651 + $0x78] sm:$0xff]
        %v1308 = vld [vmem:[%s651 + $0x80] sm:$0xff]
        %v1309 = vld [vmem:[%s651 + $0x88] sm:$0xff]
        %v1310 = vld [vmem:[%s651 + $0x90] sm:$0xff]
        %v1311 = vld [vmem:[%s651 + $0x98] sm:$0xff]
        %v1312 = vld [vmem:[%s651 + $0xa0] sm:$0xff]
        %v1313 = vld [vmem:[%s651 + $0xa8] sm:$0xff]
        %v1314 = vld [vmem:[%s651 + $0xb0] sm:$0xff]
        %v1315 = vld [vmem:[%s651 + $0xb8] sm:$0xff]
        %v1316 = vld [vmem:[%s651 + $0xc0] sm:$0xff]
        %v1317 = vld [vmem:[%s651 + $0xc8] sm:$0xff]
        %v1318 = vld [vmem:[%s651 + $0xd0] sm:$0xff]
        %v1319 = vld [vmem:[%s651 + $0xd8] sm:$0xff]
        %v1320 = vld [vmem:[%s651 + $0xe0] sm:$0xff]
        %v1321 = vld [vmem:[%s651 + $0xe8] sm:$0xff]
        %v1322 = vld [vmem:[%s651 + $0xf0] sm:$0xff]
        %v1323 = vld [vmem:[%s651 + $0xf8] sm:$0xff]
        %v1324 = vld [vmem:[%s655] sm:$0xf]
        %v1326 = vperm.slane %v1324, 0
        %v1327 = vperm.slane %v1324, 1
        %v1328 = vperm.slane %v1324, 2
        %v1329 = vperm.slane %v1324, 3
        %v1366 = vunpack.c.l.b16 %v1292
        %v1367 = vunpack.c.h.b16 %v1292
        %v1368 = vunpack.c.l.b16 %v1293
        %v1369 = vunpack.c.h.b16 %v1293
        %v1370 = vunpack.c.l.b16 %v1294
        %v1371 = vunpack.c.h.b16 %v1294
        %v1372 = vunpack.c.l.b16 %v1295
        %v1373 = vunpack.c.h.b16 %v1295
        %v1374 = vunpack.c.l.b16 %v1296
        %v1375 = vunpack.c.h.b16 %v1296
        %v1376 = vunpack.c.l.b16 %v1297
        %v1377 = vunpack.c.h.b16 %v1297
        %v1378 = vunpack.c.l.b16 %v1298
        %v1379 = vunpack.c.h.b16 %v1298
        %v1380 = vunpack.c.l.b16 %v1299
        %v1381 = vunpack.c.h.b16 %v1299
        %v1382 = vunpack.c.l.b16 %v1300
        %v1383 = vunpack.c.h.b16 %v1300
        %v1384 = vunpack.c.l.b16 %v1301
        %v1385 = vunpack.c.h.b16 %v1301
        %v1386 = vunpack.c.l.b16 %v1302
        %v1387 = vunpack.c.h.b16 %v1302
        %v1388 = vunpack.c.l.b16 %v1303
        %v1389 = vunpack.c.h.b16 %v1303
        %v1390 = vunpack.c.l.b16 %v1304
        %v1391 = vunpack.c.h.b16 %v1304
        %v1392 = vunpack.c.l.b16 %v1305
        %v1393 = vunpack.c.h.b16 %v1305
        %v1394 = vunpack.c.l.b16 %v1306
        %v1395 = vunpack.c.h.b16 %v1306
        %v1396 = vunpack.c.l.b16 %v1307
        %v1397 = vunpack.c.h.b16 %v1307
        %v1398 = vunpack.c.l.b16 %v1308
        %v1399 = vunpack.c.h.b16 %v1308
        %v1400 = vunpack.c.l.b16 %v1309
        %v1401 = vunpack.c.h.b16 %v1309
        %v1402 = vunpack.c.l.b16 %v1310
        %v1403 = vunpack.c.h.b16 %v1310
        %v1404 = vunpack.c.l.b16 %v1311
        %v1405 = vunpack.c.h.b16 %v1311
        %v1406 = vunpack.c.l.b16 %v1312
        %v1407 = vunpack.c.h.b16 %v1312
        %v1408 = vunpack.c.l.b16 %v1313
        %v1409 = vunpack.c.h.b16 %v1313
        %v1410 = vunpack.c.l.b16 %v1314
        %v1411 = vunpack.c.h.b16 %v1314
        %v1412 = vunpack.c.l.b16 %v1315
        %v1413 = vunpack.c.h.b16 %v1315
        %v1414 = vunpack.c.l.b16 %v1316
        %v1415 = vunpack.c.h.b16 %v1316
        %v1416 = vunpack.c.l.b16 %v1317
        %v1417 = vunpack.c.h.b16 %v1317
        %v1418 = vunpack.c.l.b16 %v1318
        %v1419 = vunpack.c.h.b16 %v1318
        %v1420 = vunpack.c.l.b16 %v1319
        %v1421 = vunpack.c.h.b16 %v1319
        %v1422 = vunpack.c.l.b16 %v1320
        %v1423 = vunpack.c.h.b16 %v1320
        %v1424 = vunpack.c.l.b16 %v1321
        %v1425 = vunpack.c.h.b16 %v1321
        %v1426 = vunpack.c.l.b16 %v1322
        %v1427 = vunpack.c.h.b16 %v1322
        %v1428 = vunpack.c.l.b16 %v1323
        %v1429 = vunpack.c.h.b16 %v1323
        %v1430 = vpack.c.b16 %v1370, %v1366
        %v1431 = vpack.c.b16 %v1371, %v1367
        %v1432 = vpack.c.b16 %v1372, %v1368
        %v1433 = vpack.c.b16 %v1373, %v1369
        %v1434 = vpack.c.b16 %v1378, %v1374
        %v1435 = vpack.c.b16 %v1379, %v1375
        %v1436 = vpack.c.b16 %v1380, %v1376
        %v1437 = vpack.c.b16 %v1381, %v1377
        %v1438 = vpack.c.b16 %v1386, %v1382
        %v1439 = vpack.c.b16 %v1387, %v1383
        %v1440 = vpack.c.b16 %v1388, %v1384
        %v1441 = vpack.c.b16 %v1389, %v1385
        %v1442 = vpack.c.b16 %v1394, %v1390
        %v1443 = vpack.c.b16 %v1395, %v1391
        %v1444 = vpack.c.b16 %v1396, %v1392
        %v1445 = vpack.c.b16 %v1397, %v1393
        %v1446 = vpack.c.b16 %v1402, %v1398
        %v1447 = vpack.c.b16 %v1403, %v1399
        %v1448 = vpack.c.b16 %v1404, %v1400
        %v1449 = vpack.c.b16 %v1405, %v1401
        %v1450 = vpack.c.b16 %v1410, %v1406
        %v1451 = vpack.c.b16 %v1411, %v1407
        %v1452 = vpack.c.b16 %v1412, %v1408
        %v1453 = vpack.c.b16 %v1413, %v1409
        %v1454 = vpack.c.b16 %v1418, %v1414
        %v1455 = vpack.c.b16 %v1419, %v1415
        %v1456 = vpack.c.b16 %v1420, %v1416
        %v1457 = vpack.c.b16 %v1421, %v1417
        %v1458 = vpack.c.b16 %v1426, %v1422
        %v1459 = vpack.c.b16 %v1427, %v1423
        %v1460 = vpack.c.b16 %v1428, %v1424
        %v1461 = vpack.c.b16 %v1429, %v1425
        %1494 = vmatpush.bf16.msra.mxu0 %v1458
        %1495 = vmatpush.bf16.msra.mxu0 %v1454
        %1496 = vmatpush.bf16.msra.mxu0 %v1450
        %1497 = vmatpush.bf16.msra.mxu0 %v1446
        %1498 = vmatpush.bf16.msra.mxu0 %v1442
        %1499 = vmatpush.bf16.msra.mxu0 %v1438
        %1500 = vmatpush.bf16.msra.mxu0 %v1434
        %1501 = vmatpush.bf16.msra.mxu0 %v1430
        %1502 = vmatmul.bf16.gmra.mxu0 %v1291
        %v1503 = vpop.f32.mrf.mxu0
        %v1504 = vadd.f32 %v1326, %v1503
        %v1505 = vpop.f32.mrf.mxu0
        %1506 = vdwg.mxu0
        %1507 = vmatpush.bf16.msra.mxu0 %v1459
        %1508 = vmatpush.bf16.msra.mxu0 %v1455
        %1509 = vmatpush.bf16.msra.mxu0 %v1451
        %1510 = vmatpush.bf16.msra.mxu0 %v1447
        %1511 = vmatpush.bf16.msra.mxu0 %v1443
        %1512 = vmatpush.bf16.msra.mxu0 %v1439
        %1513 = vmatpush.bf16.msra.mxu0 %v1435
        %1514 = vmatpush.bf16.msra.mxu0 %v1431
        %1515 = vmatmul.bf16.gmra.mxu0 %v1291
        %v1516 = vpop.f32.mrf.mxu0
        %v1517 = vadd.f32 %v1327, %v1516
        %v1518 = vpop.f32.mrf.mxu0
        %1519 = vdwg.mxu0
        %1520 = vmatpush.bf16.msra.mxu0 %v1460
        %1521 = vmatpush.bf16.msra.mxu0 %v1456
        %1522 = vmatpush.bf16.msra.mxu0 %v1452
        %1523 = vmatpush.bf16.msra.mxu0 %v1448
        %1524 = vmatpush.bf16.msra.mxu0 %v1444
        %1525 = vmatpush.bf16.msra.mxu0 %v1440
        %1526 = vmatpush.bf16.msra.mxu0 %v1436
        %1527 = vmatpush.bf16.msra.mxu0 %v1432
        %1528 = vmatmul.bf16.gmra.mxu0 %v1291
        %v1529 = vpop.f32.mrf.mxu0
        %v1530 = vadd.f32 %v1328, %v1529
        %v1531 = vpop.f32.mrf.mxu0
        %1532 = vdwg.mxu0
        %1533 = vmatpush.bf16.msra.mxu0 %v1461
        %1534 = vmatpush.bf16.msra.mxu0 %v1457
        %1535 = vmatpush.bf16.msra.mxu0 %v1453
        %1536 = vmatpush.bf16.msra.mxu0 %v1449
        %1537 = vmatpush.bf16.msra.mxu0 %v1445
        %1538 = vmatpush.bf16.msra.mxu0 %v1441
        %1539 = vmatpush.bf16.msra.mxu0 %v1437
        %1540 = vmatpush.bf16.msra.mxu0 %v1433
        %1541 = vmatmul.bf16.gmra.mxu0 %v1291
        %v1542 = vpop.f32.mrf.mxu0
        %v1543 = vadd.f32 %v1329, %v1542
        %v1544 = vpop.f32.mrf.mxu0
        %1545 = vdwg.mxu0
        %v1546 = vmul.f32 %v1504, 0.5
        %v1547 = vmul.f32 %v1517, 0.5
        %v1548 = vmul.f32 %v1530, 0.5
        %v1549 = vmul.f32 %v1543, 0.5
        %v1550 = vmul.f32 %v1504, 0.044715
        %v1551 = vmul.f32 %v1517, 0.044715
        %v1552 = vmul.f32 %v1530, 0.044715
        %v1553 = vmul.f32 %v1543, 0.044715
        %v1554 = vmul.f32 %v1550, %v1504
        %v1555 = vmul.f32 %v1551, %v1517
        %v1556 = vmul.f32 %v1552, %v1530
        %v1557 = vmul.f32 %v1553, %v1543
        %v1558 = vmul.f32 %v1554, %v1504
        %v1559 = vmul.f32 %v1555, %v1517
        %v1560 = vmul.f32 %v1556, %v1530
        %v1561 = vmul.f32 %v1557, %v1543
        %v1562 = vadd.f32 %v1504, %v1558
        %v1563 = vadd.f32 %v1517, %v1559
        %v1564 = vadd.f32 %v1530, %v1560
        %v1565 = vadd.f32 %v1543, %v1561
        %v1566 = vmul.f32 %v1562, 0.7978846
        %v1567 = vmul.f32 %v1563, 0.7978846
        %v1568 = vmul.f32 %v1564, 0.7978846
        %v1569 = vmul.f32 %v1565, 0.7978846
        %v1570 = vtanh.pop %v1566
        %v1571 = vtanh.pop %v1567
        %v1572 = vtanh.pop %v1568
        %v1573 = vtanh.pop %v1569
        %v1574 = vadd.f32 %v1570, 1.0
        %v1575 = vadd.f32 %v1571, 1.0
        %v1576 = vadd.f32 %v1572, 1.0
        %v1577 = vadd.f32 %v1573, 1.0
        %v1578 = vmul.f32 %v1546, %v1574
        %v1579 = vmul.f32 %v1547, %v1575
        %v1580 = vmul.f32 %v1548, %v1576
        %v1581 = vmul.f32 %v1549, %v1577
        %v1582 = vpack.c.bf16 %v1578, %v1578
        %v1583 = vpack.c.bf16 %v1579, %v1579
        %v1584 = vpack.c.bf16 %v1580, %v1580
        %v1585 = vpack.c.bf16 %v1581, %v1581
        %v1586 = vld [vmem:[%s660] sm:$0xf]
        %v1587 = vld [vmem:[%s660 + $0x4] sm:$0xf]
        %v1588 = vld [vmem:[%s660 + $0x8] sm:$0xf]
        %v1589 = vld [vmem:[%s660 + $0xc] sm:$0xf]
        %v1590 = vld [vmem:[%s660 + $0x10] sm:$0xf]
        %v1591 = vld [vmem:[%s660 + $0x14] sm:$0xf]
        %v1592 = vld [vmem:[%s660 + $0x18] sm:$0xf]
        %v1593 = vld [vmem:[%s660 + $0x1c] sm:$0xf]
        %v1594 = vld [vmem:[%s660 + $0x20] sm:$0xf]
        %v1595 = vld [vmem:[%s660 + $0x24] sm:$0xf]
        %v1596 = vld [vmem:[%s660 + $0x28] sm:$0xf]
        %v1597 = vld [vmem:[%s660 + $0x2c] sm:$0xf]
        %v1598 = vld [vmem:[%s660 + $0x30] sm:$0xf]
        %v1599 = vld [vmem:[%s660 + $0x34] sm:$0xf]
        %v1600 = vld [vmem:[%s660 + $0x38] sm:$0xf]
        %v1601 = vld [vmem:[%s660 + $0x3c] sm:$0xf]
        %v1602 = vld [vmem:[%s660 + $0x40] sm:$0xf]
        %v1603 = vld [vmem:[%s660 + $0x44] sm:$0xf]
        %v1604 = vld [vmem:[%s660 + $0x48] sm:$0xf]
        %v1605 = vld [vmem:[%s660 + $0x4c] sm:$0xf]
        %v1606 = vld [vmem:[%s660 + $0x50] sm:$0xf]
        %v1607 = vld [vmem:[%s660 + $0x54] sm:$0xf]
        %v1608 = vld [vmem:[%s660 + $0x58] sm:$0xf]
        %v1609 = vld [vmem:[%s660 + $0x5c] sm:$0xf]
        %v1610 = vld [vmem:[%s660 + $0x60] sm:$0xf]
        %v1611 = vld [vmem:[%s660 + $0x64] sm:$0xf]
        %v1612 = vld [vmem:[%s660 + $0x68] sm:$0xf]
        %v1613 = vld [vmem:[%s660 + $0x6c] sm:$0xf]
        %v1614 = vld [vmem:[%s660 + $0x70] sm:$0xf]
        %v1615 = vld [vmem:[%s660 + $0x74] sm:$0xf]
        %v1616 = vld [vmem:[%s660 + $0x78] sm:$0xf]
        %v1617 = vld [vmem:[%s660 + $0x7c] sm:$0xf]
        %v1618 = vld [vmem:[%s660 + $0x80] sm:$0xf]
        %v1619 = vld [vmem:[%s660 + $0x84] sm:$0xf]
        %v1620 = vld [vmem:[%s660 + $0x88] sm:$0xf]
        %v1621 = vld [vmem:[%s660 + $0x8c] sm:$0xf]
        %v1622 = vld [vmem:[%s660 + $0x90] sm:$0xf]
        %v1623 = vld [vmem:[%s660 + $0x94] sm:$0xf]
        %v1624 = vld [vmem:[%s660 + $0x98] sm:$0xf]
        %v1625 = vld [vmem:[%s660 + $0x9c] sm:$0xf]
        %v1626 = vld [vmem:[%s660 + $0xa0] sm:$0xf]
        %v1627 = vld [vmem:[%s660 + $0xa4] sm:$0xf]
        %v1628 = vld [vmem:[%s660 + $0xa8] sm:$0xf]
        %v1629 = vld [vmem:[%s660 + $0xac] sm:$0xf]
        %v1630 = vld [vmem:[%s660 + $0xb0] sm:$0xf]
        %v1631 = vld [vmem:[%s660 + $0xb4] sm:$0xf]
        %v1632 = vld [vmem:[%s660 + $0xb8] sm:$0xf]
        %v1633 = vld [vmem:[%s660 + $0xbc] sm:$0xf]
        %v1634 = vld [vmem:[%s660 + $0xc0] sm:$0xf]
        %v1635 = vld [vmem:[%s660 + $0xc4] sm:$0xf]
        %v1636 = vld [vmem:[%s660 + $0xc8] sm:$0xf]
        %v1637 = vld [vmem:[%s660 + $0xcc] sm:$0xf]
        %v1638 = vld [vmem:[%s660 + $0xd0] sm:$0xf]
        %v1639 = vld [vmem:[%s660 + $0xd4] sm:$0xf]
        %v1640 = vld [vmem:[%s660 + $0xd8] sm:$0xf]
        %v1641 = vld [vmem:[%s660 + $0xdc] sm:$0xf]
        %v1642 = vld [vmem:[%s660 + $0xe0] sm:$0xf]
        %v1643 = vld [vmem:[%s660 + $0xe4] sm:$0xf]
        %v1644 = vld [vmem:[%s660 + $0xe8] sm:$0xf]
        %v1645 = vld [vmem:[%s660 + $0xec] sm:$0xf]
        %v1646 = vld [vmem:[%s660 + $0xf0] sm:$0xf]
        %v1647 = vld [vmem:[%s660 + $0xf4] sm:$0xf]
        %v1648 = vld [vmem:[%s660 + $0xf8] sm:$0xf]
        %v1649 = vld [vmem:[%s660 + $0xfc] sm:$0xf]
        %v1650 = vld [vmem:[%s663] sm:$0x1]
        %v1652 = vperm.slane %v1650, 0
        %v1718 = vunpack.c.l.b16 %v1586
        %v1719 = vunpack.c.l.b16 %v1587
        %v1720 = vunpack.c.l.b16 %v1588
        %v1721 = vunpack.c.l.b16 %v1589
        %v1722 = vunpack.c.l.b16 %v1590
        %v1723 = vunpack.c.l.b16 %v1591
        %v1724 = vunpack.c.l.b16 %v1592
        %v1725 = vunpack.c.l.b16 %v1593
        %v1726 = vunpack.c.l.b16 %v1594
        %v1727 = vunpack.c.l.b16 %v1595
        %v1728 = vunpack.c.l.b16 %v1596
        %v1729 = vunpack.c.l.b16 %v1597
        %v1730 = vunpack.c.l.b16 %v1598
        %v1731 = vunpack.c.l.b16 %v1599
        %v1732 = vunpack.c.l.b16 %v1600
        %v1733 = vunpack.c.l.b16 %v1601
        %v1734 = vunpack.c.l.b16 %v1602
        %v1735 = vunpack.c.l.b16 %v1603
        %v1736 = vunpack.c.l.b16 %v1604
        %v1737 = vunpack.c.l.b16 %v1605
        %v1738 = vunpack.c.l.b16 %v1606
        %v1739 = vunpack.c.l.b16 %v1607
        %v1740 = vunpack.c.l.b16 %v1608
        %v1741 = vunpack.c.l.b16 %v1609
        %v1742 = vunpack.c.l.b16 %v1610
        %v1743 = vunpack.c.l.b16 %v1611
        %v1744 = vunpack.c.l.b16 %v1612
        %v1745 = vunpack.c.l.b16 %v1613
        %v1746 = vunpack.c.l.b16 %v1614
        %v1747 = vunpack.c.l.b16 %v1615
        %v1748 = vunpack.c.l.b16 %v1616
        %v1749 = vunpack.c.l.b16 %v1617
        %v1750 = vunpack.c.l.b16 %v1618
        %v1751 = vunpack.c.l.b16 %v1619
        %v1752 = vunpack.c.l.b16 %v1620
        %v1753 = vunpack.c.l.b16 %v1621
        %v1754 = vunpack.c.l.b16 %v1622
        %v1755 = vunpack.c.l.b16 %v1623
        %v1756 = vunpack.c.l.b16 %v1624
        %v1757 = vunpack.c.l.b16 %v1625
        %v1758 = vunpack.c.l.b16 %v1626
        %v1759 = vunpack.c.l.b16 %v1627
        %v1760 = vunpack.c.l.b16 %v1628
        %v1761 = vunpack.c.l.b16 %v1629
        %v1762 = vunpack.c.l.b16 %v1630
        %v1763 = vunpack.c.l.b16 %v1631
        %v1764 = vunpack.c.l.b16 %v1632
        %v1765 = vunpack.c.l.b16 %v1633
        %v1766 = vunpack.c.l.b16 %v1634
        %v1767 = vunpack.c.l.b16 %v1635
        %v1768 = vunpack.c.l.b16 %v1636
        %v1769 = vunpack.c.l.b16 %v1637
        %v1770 = vunpack.c.l.b16 %v1638
        %v1771 = vunpack.c.l.b16 %v1639
        %v1772 = vunpack.c.l.b16 %v1640
        %v1773 = vunpack.c.l.b16 %v1641
        %v1774 = vunpack.c.l.b16 %v1642
        %v1775 = vunpack.c.l.b16 %v1643
        %v1776 = vunpack.c.l.b16 %v1644
        %v1777 = vunpack.c.l.b16 %v1645
        %v1778 = vunpack.c.l.b16 %v1646
        %v1779 = vunpack.c.l.b16 %v1647
        %v1780 = vunpack.c.l.b16 %v1648
        %v1781 = vunpack.c.l.b16 %v1649
        %v1782 = vpack.c.b16 %v1719, %v1718
        %v1783 = vpack.c.b16 %v1721, %v1720
        %v1784 = vpack.c.b16 %v1723, %v1722
        %v1785 = vpack.c.b16 %v1725, %v1724
        %v1786 = vpack.c.b16 %v1727, %v1726
        %v1787 = vpack.c.b16 %v1729, %v1728
        %v1788 = vpack.c.b16 %v1731, %v1730
        %v1789 = vpack.c.b16 %v1733, %v1732
        %v1790 = vpack.c.b16 %v1735, %v1734
        %v1791 = vpack.c.b16 %v1737, %v1736
        %v1792 = vpack.c.b16 %v1739, %v1738
        %v1793 = vpack.c.b16 %v1741, %v1740
        %v1794 = vpack.c.b16 %v1743, %v1742
        %v1795 = vpack.c.b16 %v1745, %v1744
        %v1796 = vpack.c.b16 %v1747, %v1746
        %v1797 = vpack.c.b16 %v1749, %v1748
        %v1798 = vpack.c.b16 %v1751, %v1750
        %v1799 = vpack.c.b16 %v1753, %v1752
        %v1800 = vpack.c.b16 %v1755, %v1754
        %v1801 = vpack.c.b16 %v1757, %v1756
        %v1802 = vpack.c.b16 %v1759, %v1758
        %v1803 = vpack.c.b16 %v1761, %v1760
        %v1804 = vpack.c.b16 %v1763, %v1762
        %v1805 = vpack.c.b16 %v1765, %v1764
        %v1806 = vpack.c.b16 %v1767, %v1766
        %v1807 = vpack.c.b16 %v1769, %v1768
        %v1808 = vpack.c.b16 %v1771, %v1770
        %v1809 = vpack.c.b16 %v1773, %v1772
        %v1810 = vpack.c.b16 %v1775, %v1774
        %v1811 = vpack.c.b16 %v1777, %v1776
        %v1812 = vpack.c.b16 %v1779, %v1778
        %v1813 = vpack.c.b16 %v1781, %v1780
        %1846 = vmatpush.bf16.msra.mxu0 %v1789
        %1847 = vmatpush.bf16.msra.mxu0 %v1788
        %1848 = vmatpush.bf16.msra.mxu0 %v1787
        %1849 = vmatpush.bf16.msra.mxu0 %v1786
        %1850 = vmatpush.bf16.msra.mxu0 %v1785
        %1851 = vmatpush.bf16.msra.mxu0 %v1784
        %1852 = vmatpush.bf16.msra.mxu0 %v1783
        %1853 = vmatpush.bf16.msra.mxu0 %v1782
        %1854 = vmatmul.bf16.gmra.mxu0 %v1582
        %v1855 = vpop.f32.mrf.mxu0
        %v1856 = vadd.f32 %v1652, %v1855
        %v1857 = vpop.f32.mrf.mxu0
        %1858 = vdwg.mxu0
        %1859 = vmatpush.bf16.msra.mxu0 %v1797
        %1860 = vmatpush.bf16.msra.mxu0 %v1796
        %1861 = vmatpush.bf16.msra.mxu0 %v1795
        %1862 = vmatpush.bf16.msra.mxu0 %v1794
        %1863 = vmatpush.bf16.msra.mxu0 %v1793
        %1864 = vmatpush.bf16.msra.mxu0 %v1792
        %1865 = vmatpush.bf16.msra.mxu0 %v1791
        %1866 = vmatpush.bf16.msra.mxu0 %v1790
        %1867 = vmatmul.bf16.gmra.mxu0 %v1583
        %v1868 = vpop.f32.mrf.mxu0
        %v1869 = vadd.f32 %v1856, %v1868
        %v1870 = vpop.f32.mrf.mxu0
        %1871 = vdwg.mxu0
        %1872 = vmatpush.bf16.msra.mxu0 %v1805
        %1873 = vmatpush.bf16.msra.mxu0 %v1804
        %1874 = vmatpush.bf16.msra.mxu0 %v1803
        %1875 = vmatpush.bf16.msra.mxu0 %v1802
        %1876 = vmatpush.bf16.msra.mxu0 %v1801
        %1877 = vmatpush.bf16.msra.mxu0 %v1800
        %1878 = vmatpush.bf16.msra.mxu0 %v1799
        %1879 = vmatpush.bf16.msra.mxu0 %v1798
        %1880 = vmatmul.bf16.gmra.mxu0 %v1584
        %v1881 = vpop.f32.mrf.mxu0
        %v1882 = vadd.f32 %v1869, %v1881
        %v1883 = vpop.f32.mrf.mxu0
        %1884 = vdwg.mxu0
        %1885 = vmatpush.bf16.msra.mxu0 %v1813
        %1886 = vmatpush.bf16.msra.mxu0 %v1812
        %1887 = vmatpush.bf16.msra.mxu0 %v1811
        %1888 = vmatpush.bf16.msra.mxu0 %v1810
        %1889 = vmatpush.bf16.msra.mxu0 %v1809
        %1890 = vmatpush.bf16.msra.mxu0 %v1808
        %1891 = vmatpush.bf16.msra.mxu0 %v1807
        %1892 = vmatpush.bf16.msra.mxu0 %v1806
        %1893 = vmatmul.bf16.gmra.mxu0 %v1585
        %v1894 = vpop.f32.mrf.mxu0
        %v1895 = vadd.f32 %v1882, %v1894
        %v1896 = vpop.f32.mrf.mxu0
        %1897 = vdwg.mxu0
        %v1898 = vadd.f32 %v1260, %v1895
        %1899 = vst [vmem:[%s667] sm:$0xff] %v1898
        %p1900 = scmp.lt.s32.totalorder %s31, 1
        %s1901 = scalar_select %p1900, %s31, 1
        %s1902 = smul.addr %s1901, 8
        %s1903 = scalar_lea.vmem %s13, %s1902
        // Predicated region
        $region81: #{vit_caption_forward.6} parent=71 // pred_check
          %p1904 = pneg %p395
        $region82: #{vit_caption_forward.6} parent=71 // pred_check_branch
          %1906 = sbr.rel (%p1904) target = $region84
        $region83: #{vit_caption_forward.6} parent=71 // pred_region
          _
        $region84: #{vit_caption_forward.6} parent=71 // pred_fallthru
          _
      $region72: #{vit_caption_forward.6} parent=5 // pred_fallthru
        _
      %p1907 = scmp.le.s32.totalorder 2, %s22
      // Predicated region
      $region85: #{vit_caption_forward.6} parent=5 // pred_check
        %p1908 = pneg %p1907
      $region86: #{vit_caption_forward.6} parent=5 // pred_check_branch
        %1910 = sbr.rel (%p1908) target = $region88
      $region87: #{vit_caption_forward.6} parent=5 // pred_region
        %s1911 = ssub.s32 %s22, 2
        // Predicated region
        $region89: #{vit_caption_forward.6} parent=87 // pred_check
          %p1912 = pneg %p401
        $region90: #{vit_caption_forward.6} parent=87 // pred_check_branch
          %1914 = sbr.rel (%p1912) target = $region92
        $region91: #{vit_caption_forward.6} parent=87 // pred_region
          %p1915 = scmp.lt.s32.totalorder %s33, 1
          %s1916 = scalar_select %p1915, %s33, 1
          %s1917 = smul.addr %s1916, 8
          %s1918 = scalar_lea.vmem %s13, %s1917
        $region92: #{vit_caption_forward.6} parent=87 // pred_fallthru
          _
      $region88: #{vit_caption_forward.6} parent=5 // pred_fallthru
        _
    $region6: #{vit_caption_forward.6} parent=1 // loop_footer
      %s26 = sadd.s32 1, %s22
    $region7: #{vit_caption_forward.6} parent=1 // loop_footer_branch
      %21 = sbr.rel target = $region3
    $region8: #{vit_caption_forward.6} parent=1 // loop_exit
      _
    %1919 = vsyncpa [#allocation3], 1
    %s1920 = scalar_lea.sflag [#allocation3], 1
    %1921 = vsyncpa %s1920, 1

// kernel: vit_caption_forward.9
$region0: #{vit_caption_forward.9}
  #allocation0 [shape = 'u32[]', space=smem, size = 0x4, offset = 0x4, fixed_abs, tag = 'smem constant byte address 0x4 - core index']
  #allocation1 [shape = 'u32[72,128]{1,0:T(1,128)}', space=vmem, size = 0x9000, scoped, tag = 'internal scratch']
  %s0 = inlined_call_operand.vmem [shape: f32[32,128], index: 0, kind: input, shape index: {}]
  %s1 = inlined_call_operand.vmem [shape: f32[1,128], index: 1, kind: input, shape index: {}]
  %s2 = inlined_call_operand.vmem [shape: f32[1,128], index: 2, kind: input, shape index: {}]
  %s3 = inlined_call_operand.vmem [shape: bf16[128,256], index: 3, kind: input, shape index: {}]
  %s4 = inlined_call_operand.vmem [shape: f32[32,256], index: 4, kind: output, shape index: {}]
  %s5 = sld [smem:[#allocation0]]
  $region124: #{vit_caption_forward.9} parent=0
    _
  %s7 = ssub.s32 1, %s5
  %s8 = scalar_select 0, %s7, %s5
  $region1: #{vit_caption_forward.9} parent=0
    #allocation2 [shape = 'u8[65536]{0}', space=vmem, size = 0x10000, scoped, tag = 'input window, operand 3']
    #allocation3 [shape = 'u8[32768]{0}', space=vmem, size = 0x8000, scoped, tag = 'output window, operand 0']
    loop: start=0, step=1, limit=4
    $region2: #{vit_caption_forward.9} parent=1 // loop_pre_header
      _
    $region3: #{vit_caption_forward.9} parent=1 // loop_header
      %s10 = sphi 0, %s14
      %p11 = scmp.ge.s32.totalorder %s10, 4
      %s18 = sphi 0, %s18
      %s20 = sphi 0, %s18
      %s21 = sphi 0, %s20
      %s35 = sphi 0, %s21
      %s39 = sphi 0, %s39
      %s41 = sphi 0, %s39
      %s42 = sphi 0, %s41
      %s56 = sphi 0, %s42
      %s60 = sphi 0, %s60
      %s62 = sphi 0, %s60
      %s63 = sphi 0, %s62
      %s77 = sphi 0, %s63
      %s83 = sphi 0, %s85
      %s86 = sphi 0, %s83
      %s87 = sphi 0, %s86
      %s103 = sphi 0, %s87
      %s109 = sphi 0, %s111
      %s112 = sphi 0, %s109
      %s113 = sphi 0, %s112
      %s129 = sphi 0, %s113
    $region4: #{vit_caption_forward.9} parent=1 // loop_header_branch
      %13 = sbr.rel (%p11) target = $region8
    $region5: #{vit_caption_forward.9} parent=1 // loop_body
      %s15 = ssub.s32 %s10, 1
      %s16 = ssub.s32 %s10, 2
      %s17 = sadd.s32 %s10, 1
      %s19 = sadd.s32 %s18, 1
      %p22 = scmp.eq.s32.totalorder %s10, 1
      %p23 = scmp.ne.s32.totalorder %s18, %s20
      %p24 = scmp.eq.s32.totalorder %s10, 0
      %p25 = por %p23, %p24
      %p26 = scmp.ne.s32.totalorder %s18, %s20
      %p27 = scmp.eq.s32.totalorder %s15, 1
      %p28 = por %p26, %p27
      %p29 = scmp.ne.s32.totalorder %s20, %s21
      %p30 = scmp.eq.s32.totalorder %s15, 0
      %p31 = por %p29, %p30
      %p32 = scmp.ne.s32.totalorder %s20, %s21
      %p33 = scmp.eq.s32.totalorder %s16, 1
      %p34 = por %p32, %p33
      %p36 = scmp.ne.s32.totalorder %s21, %s35
      %p37 = scmp.eq.s32.totalorder %s16, 0
      %p38 = por %p36, %p37
      %s40 = sadd.s32 %s39, 1
      %p43 = scmp.eq.s32.totalorder %s10, 1
      %p44 = scmp.ne.s32.totalorder %s39, %s41
      %p45 = scmp.eq.s32.totalorder %s10, 0
      %p46 = por %p44, %p45
      %p47 = scmp.ne.s32.totalorder %s39, %s41
      %p48 = scmp.eq.s32.totalorder %s15, 1
      %p49 = por %p47, %p48
      %p50 = scmp.ne.s32.totalorder %s41, %s42
      %p51 = scmp.eq.s32.totalorder %s15, 0
      %p52 = por %p50, %p51
      %p53 = scmp.ne.s32.totalorder %s41, %s42
      %p54 = scmp.eq.s32.totalorder %s16, 1
      %p55 = por %p53, %p54
      %p57 = scmp.ne.s32.totalorder %s42, %s56
      %p58 = scmp.eq.s32.totalorder %s16, 0
      %p59 = por %p57, %p58
      %s61 = sadd.s32 %s60, 1
      %p64 = scmp.eq.s32.totalorder %s10, 1
      %p65 = scmp.ne.s32.totalorder %s60, %s62
      %p66 = scmp.eq.s32.totalorder %s10, 0
      %p67 = por %p65, %p66
      %p68 = scmp.ne.s32.totalorder %s60, %s62
      %p69 = scmp.eq.s32.totalorder %s15, 1
      %p70 = por %p68, %p69
      %p71 = scmp.ne.s32.totalorder %s62, %s63
      %p72 = scmp.eq.s32.totalorder %s15, 0
      %p73 = por %p71, %p72
      %p74 = scmp.ne.s32.totalorder %s62, %s63
      %p75 = scmp.eq.s32.totalorder %s16, 1
      %p76 = por %p74, %p75
      %p78 = scmp.ne.s32.totalorder %s63, %s77
      %p79 = scmp.eq.s32.totalorder %s16, 0
      %p80 = por %p78, %p79
      %s81 = ssub.s32 %s10, %s17
      %p82 = scmp.eq.s32.totalorder %s81, 0
      %s84 = sadd.s32 %s83, 1
      %s85 = scalar_select %p82, %s83, %s84
      %p88 = pneg %p82
      %p89 = scmp.eq.s32.totalorder %s10, 1
      %p90 = por %p88, %p89
      %p91 = scmp.ne.s32.totalorder %s83, %s86
      %p92 = scmp.eq.s32.totalorder %s10, 0
      %p93 = por %p91, %p92
      %p94 = scmp.ne.s32.totalorder %s83, %s86
      %p95 = scmp.eq.s32.totalorder %s15, 1
      %p96 = por %p94, %p95
      %p97 = scmp.ne.s32.totalorder %s86, %s87
      %p98 = scmp.eq.s32.totalorder %s15, 0
      %p99 = por %p97, %p98
      %p100 = scmp.ne.s32.totalorder %s86, %s87
      %p101 = scmp.eq.s32.totalorder %s16, 1
      %p102 = por %p100, %p101
      %p104 = scmp.ne.s32.totalorder %s87, %s103
      %p105 = scmp.eq.s32.totalorder %s16, 0
      %p106 = por %p104, %p105
      %s107 = ssub.s32 %s10, %s17
      %p108 = scmp.eq.s32.totalorder %s107, 0
      %s110 = sadd.s32 %s109, 1
      %s111 = scalar_select %p108, %s109, %s110
      %p114 = pneg %p108
      %p115 = scmp.eq.s32.totalorder %s10, 1
      %p116 = por %p114, %p115
      %p117 = scmp.ne.s32.totalorder %s109, %s112
      %p118 = scmp.eq.s32.totalorder %s10, 0
      %p119 = por %p117, %p118
      %p120 = scmp.ne.s32.totalorder %s109, %s112
      %p121 = scmp.eq.s32.totalorder %s15, 1
      %p122 = por %p120, %p121
      %p123 = scmp.ne.s32.totalorder %s112, %s113
      %p124 = scmp.eq.s32.totalorder %s15, 0
      %p125 = por %p123, %p124
      %p126 = scmp.ne.s32.totalorder %s112, %s113
      %p127 = scmp.eq.s32.totalorder %s16, 1
      %p128 = por %p126, %p127
      %p130 = scmp.ne.s32.totalorder %s113, %s129
      %p131 = scmp.eq.s32.totalorder %s16, 0
      %p132 = por %p130, %p131
      %p133 = scmp.le.s32.totalorder 1, %s10
      %p134 = scmp.lt.s32.totalorder %s10, 3
      %p135 = pnand %p133, %p134
      %p136 = pneg %p135
      // Predicated region
      $region9: #{vit_caption_forward.9} parent=5 // pred_check
        _
      $region10: #{vit_caption_forward.9} parent=5 // pred_check_branch
        %138 = sbr.rel (%p135) target = $region12
      $region11: #{vit_caption_forward.9} parent=5 // pred_region
        %s139 = ssub.s32 %s10, 1
        // Predicated region
        $region13: #{vit_caption_forward.9} parent=11 // pred_check
          %p140 = pneg %p31
        $region14: #{vit_caption_forward.9} parent=11 // pred_check_branch
          %142 = sbr.rel (%p140) target = $region16
        $region15: #{vit_caption_forward.9} parent=11 // pred_region
          _
        $region16: #{vit_caption_forward.9} parent=11 // pred_fallthru
          _
        // Predicated region
        $region17: #{vit_caption_forward.9} parent=11 // pred_check
          %p143 = pneg %p52
        $region18: #{vit_caption_forward.9} parent=11 // pred_check_branch
          %145 = sbr.rel (%p143) target = $region20
        $region19: #{vit_caption_forward.9} parent=11 // pred_region
          _
        $region20: #{vit_caption_forward.9} parent=11 // pred_fallthru
          _
        // Predicated region
        $region21: #{vit_caption_forward.9} parent=11 // pred_check
          %p146 = pneg %p73
        $region22: #{vit_caption_forward.9} parent=11 // pred_check_branch
          %148 = sbr.rel (%p146) target = $region24
        $region23: #{vit_caption_forward.9} parent=11 // pred_region
          _
        $region24: #{vit_caption_forward.9} parent=11 // pred_fallthru
          _
      $region12: #{vit_caption_forward.9} parent=5 // pred_fallthru
        _
      %p149 = scmp.lt.s32.totalorder %s10, 2
      // Predicated region
      $region25: #{vit_caption_forward.9} parent=5 // pred_check
        %p150 = pneg %p149
      $region26: #{vit_caption_forward.9} parent=5 // pred_check_branch
        %152 = sbr.rel (%p150) target = $region28
      $region27: #{vit_caption_forward.9} parent=5 // pred_region
        // Predicated region
        $region29: #{vit_caption_forward.9} parent=27 // pred_check
          %p153 = pneg %p93
        $region30: #{vit_caption_forward.9} parent=27 // pred_check_branch
          %155 = sbr.rel (%p153) target = $region32
        $region31: #{vit_caption_forward.9} parent=27 // pred_region
          %s156 = sand.u32 %s83, 1
          %s157 = sand.u32 %s83, 1
          %s158 = smul.addr %s157, 64
          %s159 = scalar_lea.vmem [#allocation2], %s158
          %s160 = smul.addr %s10, 4
          %s161 = scalar_lea.vmem %s3, %s160
          // Predicated region
          $region33: #{vit_caption_forward.9} parent=31 // pred_check
            _
          $region34: #{vit_caption_forward.9} parent=31 // pred_check_branch
            %163 = sbr.rel (0) target = $region36
          $region35: #{vit_caption_forward.9} parent=31 // pred_region
            // Predicated region
            $region37: #{vit_caption_forward.9} parent=35 // pred_check
              _
            $region38: #{vit_caption_forward.9} parent=35 // pred_check_branch
              %165 = sbr.rel target = $region40
            $region39: #{vit_caption_forward.9} parent=35 // pred_region
              // Predicated region
              $region52: #{vit_caption_forward.9} parent=39 // pred_check
                _
              $region53: #{vit_caption_forward.9} parent=39 // pred_check_branch
                %211 = sbr.rel (0) target = $region55
              $region54: #{vit_caption_forward.9} parent=39 // pred_region
                loop: start=0, step=1, limit=1
                $region56: #{vit_caption_forward.9} parent=54 // loop_pre_header
                  _
                $region57: #{vit_caption_forward.9} parent=54 // loop_header
                  %s213 = sphi 0, %s217
                  %p214 = scmp.ge.s32.totalorder %s213, 1
                  %s218 = sphi %s161, %s161
                  %s219 = sphi %s159, %s159
                $region58: #{vit_caption_forward.9} parent=54 // loop_header_branch
                  %216 = sbr.rel (%p214) target = $region62
                $region59: #{vit_caption_forward.9} parent=54 // loop_body
                  _
                $region60: #{vit_caption_forward.9} parent=54 // loop_footer
                  %s217 = sadd.s32 1, %s213
                $region61: #{vit_caption_forward.9} parent=54 // loop_footer_branch
                  %212 = sbr.rel target = $region57
                $region62: #{vit_caption_forward.9} parent=54 // loop_exit
                  _
                %s221 = ssub.s32 16, 1
                loop: start=0, step=1, limit=1
                $region63: #{vit_caption_forward.9} parent=54 // loop_pre_header
                  _
                $region64: #{vit_caption_forward.9} parent=54 // loop_header
                  %s223 = sphi 0, %s227
                  %p224 = scmp.ge.s32.totalorder %s223, 1
                  %s228 = sphi %s161, %s161
                  %s229 = sphi %s159, %s159
                $region65: #{vit_caption_forward.9} parent=54 // loop_header_branch
                  %226 = sbr.rel (%p224) target = $region69
                $region66: #{vit_caption_forward.9} parent=54 // loop_body
                  %v230 = vld [vmem:[%s228] sm:%s221]
                  %231 = vst [vmem:[%s229] sm:%s221] %v230
                  %v232 = vld [vmem:[%s228 + $0x8] sm:%s221]
                  %233 = vst [vmem:[%s229 + $0x4] sm:%s221] %v232
                  %v234 = vld [vmem:[%s228 + $0x10] sm:%s221]
                  %235 = vst [vmem:[%s229 + $0x8] sm:%s221] %v234
                  %v236 = vld [vmem:[%s228 + $0x18] sm:%s221]
                  %237 = vst [vmem:[%s229 + $0xc] sm:%s221] %v236
                  %v238 = vld [vmem:[%s228 + $0x20] sm:%s221]
                  %239 = vst [vmem:[%s229 + $0x10] sm:%s221] %v238
                  %v240 = vld [vmem:[%s228 + $0x28] sm:%s221]
                  %241 = vst [vmem:[%s229 + $0x14] sm:%s221] %v240
                  %v242 = vld [vmem:[%s228 + $0x30] sm:%s221]
                  %243 = vst [vmem:[%s229 + $0x18] sm:%s221] %v242
                  %v244 = vld [vmem:[%s228 + $0x38] sm:%s221]
                  %245 = vst [vmem:[%s229 + $0x1c] sm:%s221] %v244
                  %v246 = vld [vmem:[%s228 + $0x40] sm:%s221]
                  %247 = vst [vmem:[%s229 + $0x20] sm:%s221] %v246
                  %v248 = vld [vmem:[%s228 + $0x48] sm:%s221]
                  %249 = vst [vmem:[%s229 + $0x24] sm:%s221] %v248
                  %v250 = vld [vmem:[%s228 + $0x50] sm:%s221]
                  %251 = vst [vmem:[%s229 + $0x28] sm:%s221] %v250
                  %v252 = vld [vmem:[%s228 + $0x58] sm:%s221]
                  %253 = vst [vmem:[%s229 + $0x2c] sm:%s221] %v252
                  %v254 = vld [vmem:[%s228 + $0x60] sm:%s221]
                  %255 = vst [vmem:[%s229 + $0x30] sm:%s221] %v254
                  %v256 = vld [vmem:[%s228 + $0x68] sm:%s221]
                  %257 = vst [vmem:[%s229 + $0x34] sm:%s221] %v256
                  %v258 = vld [vmem:[%s228 + $0x70] sm:%s221]
                  %259 = vst [vmem:[%s229 + $0x38] sm:%s221] %v258
                  %v260 = vld [vmem:[%s228 + $0x78] sm:%s221]
                  %261 = vst [vmem:[%s229 + $0x3c] sm:%s221] %v260
                $region67: #{vit_caption_forward.9} parent=54 // loop_footer
                  %s227 = sadd.s32 1, %s223
                $region68: #{vit_caption_forward.9} parent=54 // loop_footer_branch
                  %222 = sbr.rel target = $region64
                $region69: #{vit_caption_forward.9} parent=54 // loop_exit
                  _
              $region55: #{vit_caption_forward.9} parent=39 // pred_fallthru
                _
            $region40: #{vit_caption_forward.9} parent=35 // pred_fallthru
              _
            // Predicated region
            $region41: #{vit_caption_forward.9} parent=35 // pred_check
              _
            $region42: #{vit_caption_forward.9} parent=35 // pred_check_branch
              %167 = sbr.rel (0) target = $region44
            $region43: #{vit_caption_forward.9} parent=35 // pred_region
              %s169 = ssub.s32 16, 1
              loop: start=0, step=1, limit=1
              $region45: #{vit_caption_forward.9} parent=43 // loop_pre_header
                _
              $region46: #{vit_caption_forward.9} parent=43 // loop_header
                %s171 = sphi 0, %s175
                %p172 = scmp.ge.s32.totalorder %s171, 1
                %s176 = sphi %s161, %s161
                %s177 = sphi %s159, %s159
              $region47: #{vit_caption_forward.9} parent=43 // loop_header_branch
                %174 = sbr.rel (%p172) target = $region51
              $region48: #{vit_caption_forward.9} parent=43 // loop_body
                %v178 = vld [vmem:[%s176] sm:%s169]
                %179 = vst [vmem:[%s177] sm:%s169] %v178
                %v180 = vld [vmem:[%s176 + $0x8] sm:%s169]
                %181 = vst [vmem:[%s177 + $0x4] sm:%s169] %v180
                %v182 = vld [vmem:[%s176 + $0x10] sm:%s169]
                %183 = vst [vmem:[%s177 + $0x8] sm:%s169] %v182
                %v184 = vld [vmem:[%s176 + $0x18] sm:%s169]
                %185 = vst [vmem:[%s177 + $0xc] sm:%s169] %v184
                %v186 = vld [vmem:[%s176 + $0x20] sm:%s169]
                %187 = vst [vmem:[%s177 + $0x10] sm:%s169] %v186
                %v188 = vld [vmem:[%s176 + $0x28] sm:%s169]
                %189 = vst [vmem:[%s177 + $0x14] sm:%s169] %v188
                %v190 = vld [vmem:[%s176 + $0x30] sm:%s169]
                %191 = vst [vmem:[%s177 + $0x18] sm:%s169] %v190
                %v192 = vld [vmem:[%s176 + $0x38] sm:%s169]
                %193 = vst [vmem:[%s177 + $0x1c] sm:%s169] %v192
                %v194 = vld [vmem:[%s176 + $0x40] sm:%s169]
                %195 = vst [vmem:[%s177 + $0x20] sm:%s169] %v194
                %v196 = vld [vmem:[%s176 + $0x48] sm:%s169]
                %197 = vst [vmem:[%s177 + $0x24] sm:%s169] %v196
                %v198 = vld [vmem:[%s176 + $0x50] sm:%s169]
                %199 = vst [vmem:[%s177 + $0x28] sm:%s169] %v198
                %v200 = vld [vmem:[%s176 + $0x58] sm:%s169]
                %201 = vst [vmem:[%s177 + $0x2c] sm:%s169] %v200
                %v202 = vld [vmem:[%s176 + $0x60] sm:%s169]
                %203 = vst [vmem:[%s177 + $0x30] sm:%s169] %v202
                %v204 = vld [vmem:[%s176 + $0x68] sm:%s169]
                %205 = vst [vmem:[%s177 + $0x34] sm:%s169] %v204
                %v206 = vld [vmem:[%s176 + $0x70] sm:%s169]
                %207 = vst [vmem:[%s177 + $0x38] sm:%s169] %v206
                %v208 = vld [vmem:[%s176 + $0x78] sm:%s169]
                %209 = vst [vmem:[%s177 + $0x3c] sm:%s169] %v208
              $region49: #{vit_caption_forward.9} parent=43 // loop_footer
                %s175 = sadd.s32 1, %s171
              $region50: #{vit_caption_forward.9} parent=43 // loop_footer_branch
                %170 = sbr.rel target = $region46
              $region51: #{vit_caption_forward.9} parent=43 // loop_exit
                _
            $region44: #{vit_caption_forward.9} parent=35 // pred_fallthru
              _
          $region36: #{vit_caption_forward.9} parent=31 // pred_fallthru
            _
          %262 = vnop
        $region32: #{vit_caption_forward.9} parent=27 // pred_fallthru
          _
      $region28: #{vit_caption_forward.9} parent=5 // pred_fallthru
        _
      %p263 = scmp.le.s32.totalorder 1, %s10
      %p264 = scmp.lt.s32.totalorder %s10, 3
      %p265 = pnand %p263, %p264
      %p266 = pneg %p265
      // Predicated region
      $region70: #{vit_caption_forward.9} parent=5 // pred_check
        _
      $region71: #{vit_caption_forward.9} parent=5 // pred_check_branch
        %268 = sbr.rel (%p265) target = $region73
      $region72: #{vit_caption_forward.9} parent=5 // pred_region
        %s269 = ssub.s32 %s10, 1
        %s270 = sand.u32 %s86, 1
        %s271 = sand.u32 %s86, 1
        %s272 = smul.addr %s271, 64
        %s273 = scalar_lea.vmem [#allocation2], %s272
        // Predicated region
        $region74: #{vit_caption_forward.9} parent=72 // pred_check
          %p274 = pneg %p99
        $region75: #{vit_caption_forward.9} parent=72 // pred_check_branch
          %276 = sbr.rel (%p274) target = $region77
        $region76: #{vit_caption_forward.9} parent=72 // pred_region
          _
        $region77: #{vit_caption_forward.9} parent=72 // pred_fallthru
          _
        %p277 = pneg %p31
        %p278 = pneg %p28
        %p279 = pneg %p52
        %p280 = pneg %p49
        %p281 = pneg %p73
        %p282 = pneg %p70
        %s283 = sand.u32 %s86, 1
        %s284 = sand.u32 %s86, 1
        %s285 = smul.addr %s284, 64
        %s286 = scalar_lea.vmem [#allocation2], %s285
        %p287 = pneg %p99
        %p288 = pneg %p96
        %p289 = pneg %p125
        %p290 = pneg %p122
        %s291 = sand.u32 %s112, 1
        %s292 = sand.u32 %s112, 1
        %s293 = smul.addr %s292, 32
        %s294 = scalar_lea.vmem [#allocation3], %s293
        %v295 = vld [vmem:[%s0] sm:$0xff]
        %v296 = vld [vmem:[%s0 + $0x8] sm:$0xff]
        %v297 = vld [vmem:[%s0 + $0x10] sm:$0xff]
        %v298 = vld [vmem:[%s0 + $0x18] sm:$0xff]
        %v299 = vld [vmem:[%s1] sm:$0x1]
        %v300 = vld [vmem:[%s2] sm:$0x1]
        %301 = vadd.xlane.f32.xlu0 %v295
        %v302 = vpop.xlane.xlu0 %301
        %303 = vadd.xlane.f32.xlu0 %v296
        %v304 = vpop.xlane.xlu0 %303
        %305 = vadd.xlane.f32.xlu0 %v297
        %v306 = vpop.xlane.xlu0 %305
        %307 = vadd.xlane.f32.xlu0 %v298
        %v308 = vpop.xlane.xlu0 %307
        %v309 = vrcp.pop 128.0
        %v310 = vmul.f32 128.0, %v309
        %v311 = vsub.f32 1.0, %v310
        %v312 = vmul.f32 %v309, %v311
        %v313 = vadd.f32 %v309, %v312
        %vm314 = vweird.f32 %v309
        %v315 = vsel %vm314, %v309, %v313
        %v316 = vmul.f32 %v302, %v315
        %v317 = vmul.f32 %v304, %v315
        %v318 = vmul.f32 %v306, %v315
        %v319 = vmul.f32 %v308, %v315
        %v320 = vsub.f32 %v295, %v316
        %v321 = vsub.f32 %v296, %v317
        %v322 = vsub.f32 %v297, %v318
        %v323 = vsub.f32 %v298, %v319
        %v324 = vmul.f32 %v320, %v320
        %v325 = vmul.f32 %v321, %v321
        %v326 = vmul.f32 %v322, %v322
        %v327 = vmul.f32 %v323, %v323
        %328 = vadd.xlane.f32.xlu0 %v324
        %v329 = vpop.xlane.xlu0 %328
        %330 = vadd.xlane.f32.xlu0 %v325
        %v331 = vpop.xlane.xlu0 %330
        %332 = vadd.xlane.f32.xlu0 %v326
        %v333 = vpop.xlane.xlu0 %332
        %334 = vadd.xlane.f32.xlu0 %v327
        %v335 = vpop.xlane.xlu0 %334
        %v336 = vmul.f32 %v329, %v315
        %v337 = vmul.f32 %v331, %v315
        %v338 = vmul.f32 %v333, %v315
        %v339 = vmul.f32 %v335, %v315
        %v340 = vadd.f32 %v336, 1e-05
        %v341 = vadd.f32 %v337, 1e-05
        %v342 = vadd.f32 %v338, 1e-05
        %v343 = vadd.f32 %v339, 1e-05
        %v344 = vrsqrt.pop %v340
        %v345 = vmul.f32 %v344, %v340
        %v346 = vmul.f32 %v345, %v344
        %v347 = vmul.f32 0.5, %v346
        %v348 = vsub.f32 1.5, %v347
        %v349 = vmul.f32 %v344, %v348
        %vm350 = vweird.f32 %v340
        %vm351 = vweird.f32 %v344
        %vm352 = vmor %vm350, %vm351
        %v353 = vsel %vm352, %v344, %v349
        %v354 = vrsqrt.pop %v341
        %v355 = vmul.f32 %v354, %v341
        %v356 = vmul.f32 %v355, %v354
        %v357 = vmul.f32 0.5, %v356
        %v358 = vsub.f32 1.5, %v357
        %v359 = vmul.f32 %v354, %v358
        %vm360 = vweird.f32 %v341
        %vm361 = vweird.f32 %v354
        %vm362 = vmor %vm360, %vm361
        %v363 = vsel %vm362, %v354, %v359
        %v364 = vrsqrt.pop %v342
        %v365 = vmul.f32 %v364, %v342
        %v366 = vmul.f32 %v365, %v364
        %v367 = vmul.f32 0.5, %v366
        %v368 = vsub.f32 1.5, %v367
        %v369 = vmul.f32 %v364, %v368
        %vm370 = vweird.f32 %v342
        %vm371 = vweird.f32 %v364
        %vm372 = vmor %vm370, %vm371
        %v373 = vsel %vm372, %v364, %v369
        %v374 = vrsqrt.pop %v343
        %v375 = vmul.f32 %v374, %v343
        %v376 = vmul.f32 %v375, %v374
        %v377 = vmul.f32 0.5, %v376
        %v378 = vsub.f32 1.5, %v377
        %v379 = vmul.f32 %v374, %v378
        %vm380 = vweird.f32 %v343
        %vm381 = vweird.f32 %v374
        %vm382 = vmor %vm380, %vm381
        %v383 = vsel %vm382, %v374, %v379
        %v384 = vmul.f32 %v320, %v353
        %v385 = vmul.f32 %v321, %v363
        %v386 = vmul.f32 %v322, %v373
        %v387 = vmul.f32 %v323, %v383
        %v389 = vperm.slane %v299, 0
        %v391 = vmul.f32 %v384, %v389
        %v392 = vmul.f32 %v385, %v389
        %v393 = vmul.f32 %v386, %v389
        %v394 = vmul.f32 %v387, %v389
        %v396 = vperm.slane %v300, 0
        %v398 = vadd.f32 %v391, %v396
        %v399 = vadd.f32 %v392, %v396
        %v400 = vadd.f32 %v393, %v396
        %v401 = vadd.f32 %v394, %v396
        %v402 = vpack.c.bf16 %v399, %v398
        %v403 = vpack.c.bf16 %v401, %v400
        %v404 = vld [vmem:[%s273] sm:$0xf]
        %v405 = vld [vmem:[%s273 + $0x4] sm:$0xf]
        %v406 = vld [vmem:[%s273 + $0x8] sm:$0xf]
        %v407 = vld [vmem:[%s273 + $0xc] sm:$0xf]
        %v408 = vld [vmem:[%s273 + $0x10] sm:$0xf]
        %v409 = vld [vmem:[%s273 + $0x14] sm:$0xf]
        %v410 = vld [vmem:[%s273 + $0x18] sm:$0xf]
        %v411 = vld [vmem:[%s273 + $0x1c] sm:$0xf]
        %v412 = vld [vmem:[%s273 + $0x20] sm:$0xf]
        %v413 = vld [vmem:[%s273 + $0x24] sm:$0xf]
        %v414 = vld [vmem:[%s273 + $0x28] sm:$0xf]
        %v415 = vld [vmem:[%s273 + $0x2c] sm:$0xf]
        %v416 = vld [vmem:[%s273 + $0x30] sm:$0xf]
        %v417 = vld [vmem:[%s273 + $0x34] sm:$0xf]
        %v418 = vld [vmem:[%s273 + $0x38] sm:$0xf]
        %v419 = vld [vmem:[%s273 + $0x3c] sm:$0xf]
        %v436 = vunpack.c.l.b16 %v404
        %v437 = vunpack.c.l.b16 %v405
        %v438 = vunpack.c.l.b16 %v406
        %v439 = vunpack.c.l.b16 %v407
        %v440 = vunpack.c.l.b16 %v408
        %v441 = vunpack.c.l.b16 %v409
        %v442 = vunpack.c.l.b16 %v410
        %v443 = vunpack.c.l.b16 %v411
        %v444 = vunpack.c.l.b16 %v412
        %v445 = vunpack.c.l.b16 %v413
        %v446 = vunpack.c.l.b16 %v414
        %v447 = vunpack.c.l.b16 %v415
        %v448 = vunpack.c.l.b16 %v416
        %v449 = vunpack.c.l.b16 %v417
        %v450 = vunpack.c.l.b16 %v418
        %v451 = vunpack.c.l.b16 %v419
        %v452 = vpack.c.b16 %v437, %v436
        %v453 = vpack.c.b16 %v439, %v438
        %v454 = vpack.c.b16 %v441, %v440
        %v455 = vpack.c.b16 %v443, %v442
        %v456 = vpack.c.b16 %v445, %v444
        %v457 = vpack.c.b16 %v447, %v446
        %v458 = vpack.c.b16 %v449, %v448
        %v459 = vpack.c.b16 %v451, %v450
        %468 = vmatpush.bf16.msra.mxu0 %v459
        %469 = vmatpush.bf16.msra.mxu0 %v458
        %470 = vmatpush.bf16.msra.mxu0 %v457
        %471 = vmatpush.bf16.msra.mxu0 %v456
        %472 = vmatpush.bf16.msra.mxu0 %v455
        %473 = vmatpush.bf16.msra.mxu0 %v454
        %474 = vmatpush.bf16.msra.mxu0 %v453
        %475 = vmatpush.bf16.msra.mxu0 %v452
        %476 = vmatmul.bf16.gmra.mxu0 %v402
        %v477 = vpop.f32.mrf.mxu0
        %v478 = vadd.f32 0.0, %v477
        %v479 = vpop.f32.mrf.mxu0
        %v480 = vadd.f32 0.0, %v479
        %481 = vmatmul.bf16.gmra.mxu0 %v403
        %v482 = vpop.f32.mrf.mxu0
        %v483 = vadd.f32 0.0, %v482
        %v484 = vpop.f32.mrf.mxu0
        %v485 = vadd.f32 0.0, %v484
        %486 = vdwg.mxu0
        %487 = vst [vmem:[%s294] sm:$0xff] %v478
        %488 = vst [vmem:[%s294 + $0x8] sm:$0xff] %v480
        %489 = vst [vmem:[%s294 + $0x10] sm:$0xff] %v483
        %490 = vst [vmem:[%s294 + $0x18] sm:$0xff] %v485
        %s491 = sand.u32 %s112, 1
        %s492 = sand.u32 %s112, 1
        %s493 = smul.addr %s492, 32
        %s494 = scalar_lea.vmem [#allocation3], %s493
        // Predicated region
        $region78: #{vit_caption_forward.9} parent=72 // pred_check
          %p495 = pneg %p122
        $region79: #{vit_caption_forward.9} parent=72 // pred_check_branch
          %497 = sbr.rel (%p495) target = $region81
        $region80: #{vit_caption_forward.9} parent=72 // pred_region
          %s498 = smul.addr %s15, 8
          %s499 = scalar_lea.vmem %s4, %s498
          // Predicated region
          $region82: #{vit_caption_forward.9} parent=80 // pred_check
            _
          $region83: #{vit_caption_forward.9} parent=80 // pred_check_branch
            %501 = sbr.rel (0) target = $region85
          $region84: #{vit_caption_forward.9} parent=80 // pred_region
            // Predicated region
            $region86: #{vit_caption_forward.9} parent=84 // pred_check
              _
            $region87: #{vit_caption_forward.9} parent=84 // pred_check_branch
              %503 = sbr.rel (0) target = $region89
            $region88: #{vit_caption_forward.9} parent=84 // pred_region
              // Predicated region
              $region101: #{vit_caption_forward.9} parent=88 // pred_check
                _
              $region102: #{vit_caption_forward.9} parent=88 // pred_check_branch
                %525 = sbr.rel (0) target = $region104
              $region103: #{vit_caption_forward.9} parent=88 // pred_region
                loop: start=0, step=1, limit=1
                $region105: #{vit_caption_forward.9} parent=103 // loop_pre_header
                  _
                $region106: #{vit_caption_forward.9} parent=103 // loop_header
                  %s527 = sphi 0, %s531
                  %p528 = scmp.ge.s32.totalorder %s527, 1
                  %s532 = sphi %s494, %s494
                  %s533 = sphi %s499, %s499
                $region107: #{vit_caption_forward.9} parent=103 // loop_header_branch
                  %530 = sbr.rel (%p528) target = $region111
                $region108: #{vit_caption_forward.9} parent=103 // loop_body
                  %v534 = vld [vmem:[%s532] sm:$0xff]
                  %535 = vst [vmem:[%s533] sm:$0xff] %v534
                  %v536 = vld [vmem:[%s532 + $0x8] sm:$0xff]
                  %537 = vst [vmem:[%s533 + $0x10] sm:$0xff] %v536
                  %v538 = vld [vmem:[%s532 + $0x10] sm:$0xff]
                  %539 = vst [vmem:[%s533 + $0x20] sm:$0xff] %v538
                  %v540 = vld [vmem:[%s532 + $0x18] sm:$0xff]
                  %541 = vst [vmem:[%s533 + $0x30] sm:$0xff] %v540
                $region109: #{vit_caption_forward.9} parent=103 // loop_footer
                  %s531 = sadd.s32 1, %s527
                $region110: #{vit_caption_forward.9} parent=103 // loop_footer_branch
                  %526 = sbr.rel target = $region106
                $region111: #{vit_caption_forward.9} parent=103 // loop_exit
                  _
              $region104: #{vit_caption_forward.9} parent=88 // pred_fallthru
                _
              // Predicated region
              $region112: #{vit_caption_forward.9} parent=88 // pred_check
                _
              $region113: #{vit_caption_forward.9} parent=88 // pred_check_branch
                %543 = sbr.rel target = $region115
              $region114: #{vit_caption_forward.9} parent=88 // pred_region
                _
              $region115: #{vit_caption_forward.9} parent=88 // pred_fallthru
                _
            $region89: #{vit_caption_forward.9} parent=84 // pred_fallthru
              _
            // Predicated region
            $region90: #{vit_caption_forward.9} parent=84 // pred_check
              _
            $region91: #{vit_caption_forward.9} parent=84 // pred_check_branch
              %505 = sbr.rel target = $region93
            $region92: #{vit_caption_forward.9} parent=84 // pred_region
              %s507 = ssub.s32 256, 1
              loop: start=0, step=1, limit=1
              $region94: #{vit_caption_forward.9} parent=92 // loop_pre_header
                _
              $region95: #{vit_caption_forward.9} parent=92 // loop_header
                %s509 = sphi 0, %s513
                %p510 = scmp.ge.s32.totalorder %s509, 1
                %s514 = sphi %s494, %s494
                %s515 = sphi %s499, %s499
              $region96: #{vit_caption_forward.9} parent=92 // loop_header_branch
                %512 = sbr.rel (%p510) target = $region100
              $region97: #{vit_caption_forward.9} parent=92 // loop_body
                %v516 = vld [vmem:[%s514] sm:%s507]
                %517 = vst [vmem:[%s515] sm:%s507] %v516
                %v518 = vld [vmem:[%s514 + $0x8] sm:%s507]
                %519 = vst [vmem:[%s515 + $0x10] sm:%s507] %v518
                %v520 = vld [vmem:[%s514 + $0x10] sm:%s507]
                %521 = vst [vmem:[%s515 + $0x20] sm:%s507] %v520
                %v522 = vld [vmem:[%s514 + $0x18] sm:%s507]
                %523 = vst [vmem:[%s515 + $0x30] sm:%s507] %v522
              $region98: #{vit_caption_forward.9} parent=92 // loop_footer
                %s513 = sadd.s32 1, %s509
              $region99: #{vit_caption_forward.9} parent=92 // loop_footer_branch
                %508 = sbr.rel target = $region95
              $region100: #{vit_caption_forward.9} parent=92 // loop_exit
                _
            $region93: #{vit_caption_forward.9} parent=84 // pred_fallthru
              _
          $region85: #{vit_caption_forward.9} parent=80 // pred_fallthru
            _
          %544 = vnop
        $region81: #{vit_caption_forward.9} parent=72 // pred_fallthru
          _
      $region73: #{vit_caption_forward.9} parent=5 // pred_fallthru
        _
      %p545 = scmp.le.s32.totalorder 2, %s10
      // Predicated region
      $region116: #{vit_caption_forward.9} parent=5 // pred_check
        %p546 = pneg %p545
      $region117: #{vit_caption_forward.9} parent=5 // pred_check_branch
        %548 = sbr.rel (%p546) target = $region119
      $region118: #{vit_caption_forward.9} parent=5 // pred_region
        %s549 = ssub.s32 %s10, 2
        // Predicated region
        $region120: #{vit_caption_forward.9} parent=118 // pred_check
          %p550 = pneg %p128
        $region121: #{vit_caption_forward.9} parent=118 // pred_check_branch
          %552 = sbr.rel (%p550) target = $region123
        $region122: #{vit_caption_forward.9} parent=118 // pred_region
          %s553 = sand.u32 %s113, 1
          %s554 = sand.u32 %s113, 1
          %s555 = smul.addr %s554, 32
          %s556 = scalar_lea.vmem [#allocation3], %s555
        $region123: #{vit_caption_forward.9} parent=118 // pred_fallthru
          _
      $region119: #{vit_caption_forward.9} parent=5 // pred_fallthru
        _
    $region6: #{vit_caption_forward.9} parent=1 // loop_footer
      %s14 = sadd.s32 1, %s10
    $region7: #{vit_caption_forward.9} parent=1 // loop_footer_branch
      %9 = sbr.rel target = $region3
    $region8: #{vit_caption_forward.9} parent=1 // loop_exit
      _

// kernel: vit_caption_forward.8
$region0: #{vit_caption_forward.8}
  #allocation0 [shape = 'u32[]', space=smem, size = 0x4, offset = 0x4, fixed_abs, tag = 'smem constant byte address 0x4 - core index']
  #allocation1 [shape = 'u32[72,128]{1,0:T(1,128)}', space=vmem, size = 0x9000, scoped, tag = 'internal scratch']
  %s0 = inlined_call_operand.vmem [shape: f32[2,16,128], index: 0, kind: input, shape index: {}]
  %s1 = inlined_call_operand.vmem [shape: f32[2,1,128], index: 1, kind: input, shape index: {}]
  %s2 = inlined_call_operand.vmem [shape: f32[2,1,128], index: 2, kind: input, shape index: {}]
  %s3 = inlined_call_operand.hbm [shape: bf16[2,128,384], index: 3, kind: input, shape index: {}]
  %s4 = inlined_call_operand.vmem [shape: f32[2,1,384], index: 4, kind: input, shape index: {}]
  %s5 = inlined_call_operand.vmem [shape: bf16[2,128,128], index: 5, kind: input, shape index: {}]
  %s6 = inlined_call_operand.vmem [shape: f32[2,1,128], index: 6, kind: input, shape index: {}]
  %s7 = inlined_call_operand.vmem [shape: f32[2,1,128], index: 7, kind: input, shape index: {}]
  %s8 = inlined_call_operand.vmem [shape: f32[2,1,128], index: 8, kind: input, shape index: {}]
  %s9 = inlined_call_operand.vmem [shape: bf16[2,128,512], index: 9, kind: input, shape index: {}]
  %s10 = inlined_call_operand.vmem [shape: f32[2,1,512], index: 10, kind: input, shape index: {}]
  %s11 = inlined_call_operand.hbm [shape: bf16[2,512,128], index: 11, kind: input, shape index: {}]
  %s12 = inlined_call_operand.vmem [shape: f32[2,1,128], index: 12, kind: input, shape index: {}]
  %s13 = inlined_call_operand.vmem [shape: f32[2,16,128], index: 13, kind: output, shape index: {}]
  %s14 = sld [smem:[#allocation0]]
  $region97: #{vit_caption_forward.8} parent=0
    _
  %s16 = ssub.s32 1, %s14
  %s17 = scalar_select 0, %s16, %s14
  $region1: #{vit_caption_forward.8} parent=0
    #allocation2 [shape = 'u8[196608]{0}', space=vmem, size = 0x30000, scoped, tag = 'input window, operand 3']
    #allocation3 [shape = 's32[2]{0}', space=sflag, size = 0x8, scoped, tag = 'scoped memory for vit_caption_forward.8']
    #allocation4 [shape = 'u8[262144]{0}', space=vmem, size = 0x40000, scoped, tag = 'input window, operand 11']
    #allocation5 [shape = 's32[2]{0}', space=sflag, size = 0x8, scoped, tag = 'scoped memory for vit_caption_forward.8']
    %18 = vsyncpa [#allocation3], 0
    %s19 = scalar_lea.sflag [#allocation3], 1
    %20 = vsyncpa %s19, 0
    %21 = vsyncpa [#allocation5], 0
    %s22 = scalar_lea.sflag [#allocation5], 1
    %23 = vsyncpa %s22, 0
    loop: start=0, step=1, limit=6
    $region2: #{vit_caption_forward.8} parent=1 // loop_pre_header
      _
    $region3: #{vit_caption_forward.8} parent=1 // loop_header
      %s25 = sphi 0, %s29
      %p26 = scmp.ge.s32.totalorder %s25, 6
      %s32 = sphi 0, %s44
      %s33 = sphi 0, %s40
      %s34 = sphi 0, %s32
      %s35 = sphi 0, %s33
      %s36 = sphi 0, %s34
      %s37 = sphi 0, %s35
      %s47 = sphi 0, %s49
      %s50 = sphi 0, %s47
      %s51 = sphi 0, %s50
      %s67 = sphi 0, %s51
      %s73 = sphi 0, %s75
      %s76 = sphi 0, %s73
      %s77 = sphi 0, %s76
      %s93 = sphi 0, %s77
      %s99 = sphi 0, %s101
      %s102 = sphi 0, %s99
      %s103 = sphi 0, %s102
      %s119 = sphi 0, %s103
      %s125 = sphi 0, %s127
      %s128 = sphi 0, %s125
      %s129 = sphi 0, %s128
      %s145 = sphi 0, %s129
      %s151 = sphi 0, %s153
      %s154 = sphi 0, %s151
      %s155 = sphi 0, %s154
      %s171 = sphi 0, %s155
      %s177 = sphi 0, %s179
      %s180 = sphi 0, %s177
      %s181 = sphi 0, %s180
      %s197 = sphi 0, %s181
      %s203 = sphi 0, %s205
      %s206 = sphi 0, %s203
      %s207 = sphi 0, %s206
      %s223 = sphi 0, %s207
      %s229 = sphi 0, %s231
      %s232 = sphi 0, %s229
      %s233 = sphi 0, %s232
      %s249 = sphi 0, %s233
      %s255 = sphi 0, %s257
      %s258 = sphi 0, %s255
      %s259 = sphi 0, %s258
      %s275 = sphi 0, %s259
      %s281 = sphi 0, %s283
      %s284 = sphi 0, %s281
      %s285 = sphi 0, %s284
      %s301 = sphi 0, %s285
      %s307 = sphi 0, %s309
      %s310 = sphi 0, %s307
      %s311 = sphi 0, %s310
      %s327 = sphi 0, %s311
      %s333 = sphi 0, %s335
      %s336 = sphi 0, %s333
      %s337 = sphi 0, %s336
      %s353 = sphi 0, %s337
      %s359 = sphi 0, %s361
      %s362 = sphi 0, %s359
      %s363 = sphi 0, %s362
      %s379 = sphi 0, %s363
      %s385 = sphi 0, %s387
      %s388 = sphi 0, %s385
      %s389 = sphi 0, %s388
      %s405 = sphi 0, %s389
    $region4: #{vit_caption_forward.8} parent=1 // loop_header_branch
      %28 = sbr.rel (%p26) target = $region8
    $region5: #{vit_caption_forward.8} parent=1 // loop_body
      %s30 = ssub.s32 %s25, 1
      %s31 = ssub.s32 %s25, 2
      %s38 = sadd.s32 1, %s33
      %p39 = scmp.ge.s32.totalorder %s38, 2
      %s40 = scalar_select %p39, 0, %s38
      %s41 = sadd.s32 1, %s32
      %s42 = scalar_select %p39, %s41, %s32
      %p43 = scmp.ge.s32.totalorder %s42, 2
      %s44 = scalar_select %p43, 0, %s42
      %s45 = ssub.s32 %s32, %s44
      %p46 = scmp.eq.s32.totalorder %s45, 0
      %s48 = sadd.s32 %s47, 1
      %s49 = scalar_select %p46, %s47, %s48
      %p52 = pneg %p46
      %p53 = scmp.eq.s32.totalorder %s25, 3
      %p54 = por %p52, %p53
      %p55 = scmp.ne.s32.totalorder %s47, %s50
      %p56 = scmp.eq.s32.totalorder %s25, 0
      %p57 = por %p55, %p56
      %p58 = scmp.ne.s32.totalorder %s47, %s50
      %p59 = scmp.eq.s32.totalorder %s30, 3
      %p60 = por %p58, %p59
      %p61 = scmp.ne.s32.totalorder %s50, %s51
      %p62 = scmp.eq.s32.totalorder %s30, 0
      %p63 = por %p61, %p62
      %p64 = scmp.ne.s32.totalorder %s50, %s51
      %p65 = scmp.eq.s32.totalorder %s31, 3
      %p66 = por %p64, %p65
      %p68 = scmp.ne.s32.totalorder %s51, %s67
      %p69 = scmp.eq.s32.totalorder %s31, 0
      %p70 = por %p68, %p69
      %s71 = ssub.s32 %s33, %s40
      %p72 = scmp.eq.s32.totalorder %s71, 0
      %s74 = sadd.s32 %s73, 1
      %s75 = scalar_select %p72, %s73, %s74
      %p78 = pneg %p72
      %p79 = scmp.eq.s32.totalorder %s25, 3
      %p80 = por %p78, %p79
      %p81 = scmp.ne.s32.totalorder %s73, %s76
      %p82 = scmp.eq.s32.totalorder %s25, 0
      %p83 = por %p81, %p82
      %p84 = scmp.ne.s32.totalorder %s73, %s76
      %p85 = scmp.eq.s32.totalorder %s30, 3
      %p86 = por %p84, %p85
      %p87 = scmp.ne.s32.totalorder %s76, %s77
      %p88 = scmp.eq.s32.totalorder %s30, 0
      %p89 = por %p87, %p88
      %p90 = scmp.ne.s32.totalorder %s76, %s77
      %p91 = scmp.eq.s32.totalorder %s31, 3
      %p92 = por %p90, %p91
      %p94 = scmp.ne.s32.totalorder %s77, %s93
      %p95 = scmp.eq.s32.totalorder %s31, 0
      %p96 = por %p94, %p95
      %s97 = ssub.s32 %s33, %s40
      %p98 = scmp.eq.s32.totalorder %s97, 0
      %s100 = sadd.s32 %s99, 1
      %s101 = scalar_select %p98, %s99, %s100
      %p104 = pneg %p98
      %p105 = scmp.eq.s32.totalorder %s25, 3
      %p106 = por %p104, %p105
      %p107 = scmp.ne.s32.totalorder %s99, %s102
      %p108 = scmp.eq.s32.totalorder %s25, 0
      %p109 = por %p107, %p108
      %p110 = scmp.ne.s32.totalorder %s99, %s102
      %p111 = scmp.eq.s32.totalorder %s30, 3
      %p112 = por %p110, %p111
      %p113 = scmp.ne.s32.totalorder %s102, %s103
      %p114 = scmp.eq.s32.totalorder %s30, 0
      %p115 = por %p113, %p114
      %p116 = scmp.ne.s32.totalorder %s102, %s103
      %p117 = scmp.eq.s32.totalorder %s31, 3
      %p118 = por %p116, %p117
      %p120 = scmp.ne.s32.totalorder %s103, %s119
      %p121 = scmp.eq.s32.totalorder %s31, 0
      %p122 = por %p120, %p121
      %s123 = ssub.s32 %s33, %s40
      %p124 = scmp.eq.s32.totalorder %s123, 0
      %s126 = sadd.s32 %s125, 1
      %s127 = scalar_select %p124, %s125, %s126
      %p130 = pneg %p124
      %p131 = scmp.eq.s32.totalorder %s25, 3
      %p132 = por %p130, %p131
      %p133 = scmp.ne.s32.totalorder %s125, %s128
      %p134 = scmp.eq.s32.totalorder %s25, 0
      %p135 = por %p133, %p134
      %p136 = scmp.ne.s32.totalorder %s125, %s128
      %p137 = scmp.eq.s32.totalorder %s30, 3
      %p138 = por %p136, %p137
      %p139 = scmp.ne.s32.totalorder %s128, %s129
      %p140 = scmp.eq.s32.totalorder %s30, 0
      %p141 = por %p139, %p140
      %p142 = scmp.ne.s32.totalorder %s128, %s129
      %p143 = scmp.eq.s32.totalorder %s31, 3
      %p144 = por %p142, %p143
      %p146 = scmp.ne.s32.totalorder %s129, %s145
      %p147 = scmp.eq.s32.totalorder %s31, 0
      %p148 = por %p146, %p147
      %s149 = ssub.s32 %s33, %s40
      %p150 = scmp.eq.s32.totalorder %s149, 0
      %s152 = sadd.s32 %s151, 1
      %s153 = scalar_select %p150, %s151, %s152
      %p156 = pneg %p150
      %p157 = scmp.eq.s32.totalorder %s25, 3
      %p158 = por %p156, %p157
      %p159 = scmp.ne.s32.totalorder %s151, %s154
      %p160 = scmp.eq.s32.totalorder %s25, 0
      %p161 = por %p159, %p160
      %p162 = scmp.ne.s32.totalorder %s151, %s154
      %p163 = scmp.eq.s32.totalorder %s30, 3
      %p164 = por %p162, %p163
      %p165 = scmp.ne.s32.totalorder %s154, %s155
      %p166 = scmp.eq.s32.totalorder %s30, 0
      %p167 = por %p165, %p166
      %p168 = scmp.ne.s32.totalorder %s154, %s155
      %p169 = scmp.eq.s32.totalorder %s31, 3
      %p170 = por %p168, %p169
      %p172 = scmp.ne.s32.totalorder %s155, %s171
      %p173 = scmp.eq.s32.totalorder %s31, 0
      %p174 = por %p172, %p173
      %s175 = ssub.s32 %s33, %s40
      %p176 = scmp.eq.s32.totalorder %s175, 0
      %s178 = sadd.s32 %s177, 1
      %s179 = scalar_select %p176, %s177, %s178
      %p182 = pneg %p176
      %p183 = scmp.eq.s32.totalorder %s25, 3
      %p184 = por %p182, %p183
      %p185 = scmp.ne.s32.totalorder %s177, %s180
      %p186 = scmp.eq.s32.totalorder %s25, 0
      %p187 = por %p185, %p186
      %p188 = scmp.ne.s32.totalorder %s177, %s180
      %p189 = scmp.eq.s32.totalorder %s30, 3
      %p190 = por %p188, %p189
      %p191 = scmp.ne.s32.totalorder %s180, %s181
      %p192 = scmp.eq.s32.totalorder %s30, 0
      %p193 = por %p191, %p192
      %p194 = scmp.ne.s32.totalorder %s180, %s181
      %p195 = scmp.eq.s32.totalorder %s31, 3
      %p196 = por %p194, %p195
      %p198 = scmp.ne.s32.totalorder %s181, %s197
      %p199 = scmp.eq.s32.totalorder %s31, 0
      %p200 = por %p198, %p199
      %s201 = ssub.s32 %s33, %s40
      %p202 = scmp.eq.s32.totalorder %s201, 0
      %s204 = sadd.s32 %s203, 1
      %s205 = scalar_select %p202, %s203, %s204
      %p208 = pneg %p202
      %p209 = scmp.eq.s32.totalorder %s25, 3
      %p210 = por %p208, %p209
      %p211 = scmp.ne.s32.totalorder %s203, %s206
      %p212 = scmp.eq.s32.totalorder %s25, 0
      %p213 = por %p211, %p212
      %p214 = scmp.ne.s32.totalorder %s203, %s206
      %p215 = scmp.eq.s32.totalorder %s30, 3
      %p216 = por %p214, %p215
      %p217 = scmp.ne.s32.totalorder %s206, %s207
      %p218 = scmp.eq.s32.totalorder %s30, 0
      %p219 = por %p217, %p218
      %p220 = scmp.ne.s32.totalorder %s206, %s207
      %p221 = scmp.eq.s32.totalorder %s31, 3
      %p222 = por %p220, %p221
      %p224 = scmp.ne.s32.totalorder %s207, %s223
      %p225 = scmp.eq.s32.totalorder %s31, 0
      %p226 = por %p224, %p225
      %s227 = ssub.s32 %s33, %s40
      %p228 = scmp.eq.s32.totalorder %s227, 0
      %s230 = sadd.s32 %s229, 1
      %s231 = scalar_select %p228, %s229, %s230
      %p234 = pneg %p228
      %p235 = scmp.eq.s32.totalorder %s25, 3
      %p236 = por %p234, %p235
      %p237 = scmp.ne.s32.totalorder %s229, %s232
      %p238 = scmp.eq.s32.totalorder %s25, 0
      %p239 = por %p237, %p238
      %p240 = scmp.ne.s32.totalorder %s229, %s232
      %p241 = scmp.eq.s32.totalorder %s30, 3
      %p242 = por %p240, %p241
      %p243 = scmp.ne.s32.totalorder %s232, %s233
      %p244 = scmp.eq.s32.totalorder %s30, 0
      %p245 = por %p243, %p244
      %p246 = scmp.ne.s32.totalorder %s232, %s233
      %p247 = scmp.eq.s32.totalorder %s31, 3
      %p248 = por %p246, %p247
      %p250 = scmp.ne.s32.totalorder %s233, %s249
      %p251 = scmp.eq.s32.totalorder %s31, 0
      %p252 = por %p250, %p251
      %s253 = ssub.s32 %s33, %s40
      %p254 = scmp.eq.s32.totalorder %s253, 0
      %s256 = sadd.s32 %s255, 1
      %s257 = scalar_select %p254, %s255, %s256
      %p260 = pneg %p254
      %p261 = scmp.eq.s32.totalorder %s25, 3
      %p262 = por %p260, %p261
      %p263 = scmp.ne.s32.totalorder %s255, %s258
      %p264 = scmp.eq.s32.totalorder %s25, 0
      %p265 = por %p263, %p264
      %p266 = scmp.ne.s32.totalorder %s255, %s258
      %p267 = scmp.eq.s32.totalorder %s30, 3
      %p268 = por %p266, %p267
      %p269 = scmp.ne.s32.totalorder %s258, %s259
      %p270 = scmp.eq.s32.totalorder %s30, 0
      %p271 = por %p269, %p270
      %p272 = scmp.ne.s32.totalorder %s258, %s259
      %p273 = scmp.eq.s32.totalorder %s31, 3
      %p274 = por %p272, %p273
      %p276 = scmp.ne.s32.totalorder %s259, %s275
      %p277 = scmp.eq.s32.totalorder %s31, 0
      %p278 = por %p276, %p277
      %s279 = ssub.s32 %s33, %s40
      %p280 = scmp.eq.s32.totalorder %s279, 0
      %s282 = sadd.s32 %s281, 1
      %s283 = scalar_select %p280, %s281, %s282
      %p286 = pneg %p280
      %p287 = scmp.eq.s32.totalorder %s25, 3
      %p288 = por %p286, %p287
      %p289 = scmp.ne.s32.totalorder %s281, %s284
      %p290 = scmp.eq.s32.totalorder %s25, 0
      %p291 = por %p289, %p290
      %p292 = scmp.ne.s32.totalorder %s281, %s284
      %p293 = scmp.eq.s32.totalorder %s30, 3
      %p294 = por %p292, %p293
      %p295 = scmp.ne.s32.totalorder %s284, %s285
      %p296 = scmp.eq.s32.totalorder %s30, 0
      %p297 = por %p295, %p296
      %p298 = scmp.ne.s32.totalorder %s284, %s285
      %p299 = scmp.eq.s32.totalorder %s31, 3
      %p300 = por %p298, %p299
      %p302 = scmp.ne.s32.totalorder %s285, %s301
      %p303 = scmp.eq.s32.totalorder %s31, 0
      %p304 = por %p302, %p303
      %s305 = ssub.s32 %s33, %s40
      %p306 = scmp.eq.s32.totalorder %s305, 0
      %s308 = sadd.s32 %s307, 1
      %s309 = scalar_select %p306, %s307, %s308
      %p312 = pneg %p306
      %p313 = scmp.eq.s32.totalorder %s25, 3
      %p314 = por %p312, %p313
      %p315 = scmp.ne.s32.totalorder %s307, %s310
      %p316 = scmp.eq.s32.totalorder %s25, 0
      %p317 = por %p315, %p316
      %p318 = scmp.ne.s32.totalorder %s307, %s310
      %p319 = scmp.eq.s32.totalorder %s30, 3
      %p320 = por %p318, %p319
      %p321 = scmp.ne.s32.totalorder %s310, %s311
      %p322 = scmp.eq.s32.totalorder %s30, 0
      %p323 = por %p321, %p322
      %p324 = scmp.ne.s32.totalorder %s310, %s311
      %p325 = scmp.eq.s32.totalorder %s31, 3
      %p326 = por %p324, %p325
      %p328 = scmp.ne.s32.totalorder %s311, %s327
      %p329 = scmp.eq.s32.totalorder %s31, 0
      %p330 = por %p328, %p329
      %s331 = ssub.s32 %s33, %s40
      %p332 = scmp.eq.s32.totalorder %s331, 0
      %s334 = sadd.s32 %s333, 1
      %s335 = scalar_select %p332, %s333, %s334
      %p338 = pneg %p332
      %p339 = scmp.eq.s32.totalorder %s25, 3
      %p340 = por %p338, %p339
      %p341 = scmp.ne.s32.totalorder %s333, %s336
      %p342 = scmp.eq.s32.totalorder %s25, 0
      %p343 = por %p341, %p342
      %p344 = scmp.ne.s32.totalorder %s333, %s336
      %p345 = scmp.eq.s32.totalorder %s30, 3
      %p346 = por %p344, %p345
      %p347 = scmp.ne.s32.totalorder %s336, %s337
      %p348 = scmp.eq.s32.totalorder %s30, 0
      %p349 = por %p347, %p348
      %p350 = scmp.ne.s32.totalorder %s336, %s337
      %p351 = scmp.eq.s32.totalorder %s31, 3
      %p352 = por %p350, %p351
      %p354 = scmp.ne.s32.totalorder %s337, %s353
      %p355 = scmp.eq.s32.totalorder %s31, 0
      %p356 = por %p354, %p355
      %s357 = ssub.s32 %s33, %s40
      %p358 = scmp.eq.s32.totalorder %s357, 0
      %s360 = sadd.s32 %s359, 1
      %s361 = scalar_select %p358, %s359, %s360
      %p364 = pneg %p358
      %p365 = scmp.eq.s32.totalorder %s25, 3
      %p366 = por %p364, %p365
      %p367 = scmp.ne.s32.totalorder %s359, %s362
      %p368 = scmp.eq.s32.totalorder %s25, 0
      %p369 = por %p367, %p368
      %p370 = scmp.ne.s32.totalorder %s359, %s362
      %p371 = scmp.eq.s32.totalorder %s30, 3
      %p372 = por %p370, %p371
      %p373 = scmp.ne.s32.totalorder %s362, %s363
      %p374 = scmp.eq.s32.totalorder %s30, 0
      %p375 = por %p373, %p374
      %p376 = scmp.ne.s32.totalorder %s362, %s363
      %p377 = scmp.eq.s32.totalorder %s31, 3
      %p378 = por %p376, %p377
      %p380 = scmp.ne.s32.totalorder %s363, %s379
      %p381 = scmp.eq.s32.totalorder %s31, 0
      %p382 = por %p380, %p381
      %s383 = ssub.s32 %s32, %s44
      %p384 = scmp.eq.s32.totalorder %s383, 0
      %s386 = sadd.s32 %s385, 1
      %s387 = scalar_select %p384, %s385, %s386
      %p390 = pneg %p384
      %p391 = scmp.eq.s32.totalorder %s25, 3
      %p392 = por %p390, %p391
      %p393 = scmp.ne.s32.totalorder %s385, %s388
      %p394 = scmp.eq.s32.totalorder %s25, 0
      %p395 = por %p393, %p394
      %p396 = scmp.ne.s32.totalorder %s385, %s388
      %p397 = scmp.eq.s32.totalorder %s30, 3
      %p398 = por %p396, %p397
      %p399 = scmp.ne.s32.totalorder %s388, %s389
      %p400 = scmp.eq.s32.totalorder %s30, 0
      %p401 = por %p399, %p400
      %p402 = scmp.ne.s32.totalorder %s388, %s389
      %p403 = scmp.eq.s32.totalorder %s31, 3
      %p404 = por %p402, %p403
      %p406 = scmp.ne.s32.totalorder %s389, %s405
      %p407 = scmp.eq.s32.totalorder %s31, 0
      %p408 = por %p406, %p407
      %p409 = scmp.le.s32.totalorder 1, %s25
      %p410 = scmp.lt.s32.totalorder %s25, 5
      %p411 = pnand %p409, %p410
      %p412 = pneg %p411
      // Predicated region
      $region9: #{vit_caption_forward.8} parent=5 // pred_check
        _
      $region10: #{vit_caption_forward.8} parent=5 // pred_check_branch
        %414 = sbr.rel (%p411) target = $region12
      $region11: #{vit_caption_forward.8} parent=5 // pred_region
        %s415 = ssub.s32 %s25, 1
      $region12: #{vit_caption_forward.8} parent=5 // pred_fallthru
        _
      %p416 = scmp.lt.s32.totalorder %s25, 4
      // Predicated region
      $region13: #{vit_caption_forward.8} parent=5 // pred_check
        %p417 = pneg %p416
      $region14: #{vit_caption_forward.8} parent=5 // pred_check_branch
        %419 = sbr.rel (%p417) target = $region16
      $region15: #{vit_caption_forward.8} parent=5 // pred_region
        // Predicated region
        $region17: #{vit_caption_forward.8} parent=15 // pred_check
          %p420 = pneg %p57
        $region18: #{vit_caption_forward.8} parent=15 // pred_check_branch
          %422 = sbr.rel (%p420) target = $region20
        $region19: #{vit_caption_forward.8} parent=15 // pred_region
          %p423 = scmp.lt.s32.totalorder %s32, 1
          %s424 = scalar_select %p423, %s32, 1
          %s425 = smul.addr %s424, 2
          %s426 = smul.addr %s425, 8
          %s427 = scalar_lea.vmem %s0, %s426
        $region20: #{vit_caption_forward.8} parent=15 // pred_fallthru
          _
        // Predicated region
        $region21: #{vit_caption_forward.8} parent=15 // pred_check
          %p428 = pneg %p83
        $region22: #{vit_caption_forward.8} parent=15 // pred_check_branch
          %430 = sbr.rel (%p428) target = $region24
        $region23: #{vit_caption_forward.8} parent=15 // pred_region
          %p431 = scmp.lt.s32.totalorder %s33, 1
          %s432 = scalar_select %p431, %s33, 1
          %s433 = scalar_lea.vmem %s1, %s432
        $region24: #{vit_caption_forward.8} parent=15 // pred_fallthru
          _
        // Predicated region
        $region25: #{vit_caption_forward.8} parent=15 // pred_check
          %p434 = pneg %p109
        $region26: #{vit_caption_forward.8} parent=15 // pred_check_branch
          %436 = sbr.rel (%p434) target = $region28
        $region27: #{vit_caption_forward.8} parent=15 // pred_region
          %p437 = scmp.lt.s32.totalorder %s33, 1
          %s438 = scalar_select %p437, %s33, 1
          %s439 = scalar_lea.vmem %s2, %s438
        $region28: #{vit_caption_forward.8} parent=15 // pred_fallthru
          _
        // Predicated region
        $region29: #{vit_caption_forward.8} parent=15 // pred_check
          %p440 = pneg %p135
        $region30: #{vit_caption_forward.8} parent=15 // pred_check_branch
          %442 = sbr.rel (%p440) target = $region32
        $region31: #{vit_caption_forward.8} parent=15 // pred_region
          %s443 = sand.u32 %s125, 1
          %s444 = scalar_lea.sflag [#allocation3], %s443
          %s445 = sand.u32 %s125, 1
          %s446 = smul.addr %s445, 192
          %s447 = scalar_lea.vmem [#allocation2], %s446
          %449 = vsyncadd %s444, 0
          %s450 = smul.addr %s33, 48
          %s451 = smul.addr %s450, 4
          %s452 = scalar_lea.hbm %s3, %s451
          %s453 = sshll.u32 %s452, 4
          %s454 = int_to_ptr.hbm [resolvable:$true] %s453
          %s455 = sshll.u32 %s447, 4
          %s456 = int_to_ptr.vmem [resolvable:$true] %s455
          %461 = dma.hbm_to_vmem [thread:$0]  %s454, 3072, %s456, %s444, 192, 192, 12
        $region32: #{vit_caption_forward.8} parent=15 // pred_fallthru
          _
        // Predicated region
        $region33: #{vit_caption_forward.8} parent=15 // pred_check
          %p462 = pneg %p161
        $region34: #{vit_caption_forward.8} parent=15 // pred_check_branch
          %464 = sbr.rel (%p462) target = $region36
        $region35: #{vit_caption_forward.8} parent=15 // pred_region
          %p465 = scmp.lt.s32.totalorder %s33, 1
          %s466 = scalar_select %p465, %s33, 1
          %s467 = smul.addr %s466, 3
          %s468 = scalar_lea.vmem %s4, %s467
        $region36: #{vit_caption_forward.8} parent=15 // pred_fallthru
          _
        // Predicated region
        $region37: #{vit_caption_forward.8} parent=15 // pred_check
          %p469 = pneg %p187
        $region38: #{vit_caption_forward.8} parent=15 // pred_check_branch
          %471 = sbr.rel (%p469) target = $region40
        $region39: #{vit_caption_forward.8} parent=15 // pred_region
          %p472 = scmp.lt.s32.totalorder %s33, 1
          %s473 = scalar_select %p472, %s33, 1
          %s474 = smul.addr %s473, 16
          %s475 = smul.addr %s474, 4
          %s476 = scalar_lea.vmem %s5, %s475
        $region40: #{vit_caption_forward.8} parent=15 // pred_fallthru
          _
        // Predicated region
        $region41: #{vit_caption_forward.8} parent=15 // pred_check
          %p477 = pneg %p213
        $region42: #{vit_caption_forward.8} parent=15 // pred_check_branch
          %479 = sbr.rel (%p477) target = $region44
        $region43: #{vit_caption_forward.8} parent=15 // pred_region
          %p480 = scmp.lt.s32.totalorder %s33, 1
          %s481 = scalar_select %p480, %s33, 1
          %s482 = scalar_lea.vmem %s6, %s481
        $region44: #{vit_caption_forward.8} parent=15 // pred_fallthru
          _
        // Predicated region
        $region45: #{vit_caption_forward.8} parent=15 // pred_check
          %p483 = pneg %p239
        $region46: #{vit_caption_forward.8} parent=15 // pred_check_branch
          %485 = sbr.rel (%p483) target = $region48
        $region47: #{vit_caption_forward.8} parent=15 // pred_region
          %p486 = scmp.lt.s32.totalorder %s33, 1
          %s487 = scalar_select %p486, %s33, 1
          %s488 = scalar_lea.vmem %s7, %s487
        $region48: #{vit_caption_forward.8} parent=15 // pred_fallthru
          _
        // Predicated region
        $region49: #{vit_caption_forward.8} parent=15 // pred_check
          %p489 = pneg %p265
        $region50: #{vit_caption_forward.8} parent=15 // pred_check_branch
          %491 = sbr.rel (%p489) target = $region52
        $region51: #{vit_caption_forward.8} parent=15 // pred_region
          %p492 = scmp.lt.s32.totalorder %s33, 1
          %s493 = scalar_select %p492, %s33, 1
          %s494 = scalar_lea.vmem %s8, %s493
        $region52: #{vit_caption_forward.8} parent=15 // pred_fallthru
          _
        // Predicated region
        $region53: #{vit_caption_forward.8} parent=15 // pred_check
          %p495 = pneg %p291
        $region54: #{vit_caption_forward.8} parent=15 // pred_check_branch
          %497 = sbr.rel (%p495) target = $region56
        $region55: #{vit_caption_forward.8} parent=15 // pred_region
          %p498 = scmp.lt.s32.totalorder %s33, 1
          %s499 = scalar_select %p498, %s33, 1
          %s500 = smul.addr %s499, 64
          %s501 = smul.addr %s500, 4
          %s502 = scalar_lea.vmem %s9, %s501
        $region56: #{vit_caption_forward.8} parent=15 // pred_fallthru
          _
        // Predicated region
        $region57: #{vit_caption_forward.8} parent=15 // pred_check
          %p503 = pneg %p317
        $region58: #{vit_caption_forward.8} parent=15 // pred_check_branch
          %505 = sbr.rel (%p503) target = $region60
        $region59: #{vit_caption_forward.8} parent=15 // pred_region
          %p506 = scmp.lt.s32.totalorder %s33, 1
          %s507 = scalar_select %p506, %s33, 1
          %s508 = smul.addr %s507, 4
          %s509 = scalar_lea.vmem %s10, %s508
        $region60: #{vit_caption_forward.8} parent=15 // pred_fallthru
          _
        // Predicated region
        $region61: #{vit_caption_forward.8} parent=15 // pred_check
          %p510 = pneg %p343
        $region62: #{vit_caption_forward.8} parent=15 // pred_check_branch
          %512 = sbr.rel (%p510) target = $region64
        $region63: #{vit_caption_forward.8} parent=15 // pred_region
          %s513 = sand.u32 %s333, 1
          %s514 = scalar_lea.sflag [#allocation5], %s513
          %s515 = sand.u32 %s333, 1
          %s516 = smul.addr %s515, 256
          %s517 = scalar_lea.vmem [#allocation4], %s516
          %519 = vsyncadd %s514, 0
          %s520 = smul.addr %s33, 64
          %s521 = smul.addr %s520, 4
          %s522 = scalar_lea.hbm %s11, %s521
          %s523 = sshll.u32 %s522, 4
          %s524 = int_to_ptr.hbm [resolvable:$true] %s523
          %s525 = sshll.u32 %s517, 4
          %s526 = int_to_ptr.vmem [resolvable:$true] %s525
          %531 = dma.hbm_to_vmem [thread:$0]  %s524, 4096, %s526, %s514, 64, 64, 4
        $region64: #{vit_caption_forward.8} parent=15 // pred_fallthru
          _
        // Predicated region
        $region65: #{vit_caption_forward.8} parent=15 // pred_check
          %p532 = pneg %p369
        $region66: #{vit_caption_forward.8} parent=15 // pred_check_branch
          %534 = sbr.rel (%p532) target = $region68
        $region67: #{vit_caption_forward.8} parent=15 // pred_region
          %p535 = scmp.lt.s32.totalorder %s33, 1
          %s536 = scalar_select %p535, %s33, 1
          %s537 = scalar_lea.vmem %s12, %s536
        $region68: #{vit_caption_forward.8} parent=15 // pred_fallthru
          _
      $region16: #{vit_caption_forward.8} parent=5 // pred_fallthru
        _
      %p538 = scmp.le.s32.totalorder 1, %s25
      %p539 = scmp.lt.s32.totalorder %s25, 5
      %p540 = pnand %p538, %p539
      %p541 = pneg %p540
      // Predicated region
      $region69: #{vit_caption_forward.8} parent=5 // pred_check
        _
      $region70: #{vit_caption_forward.8} parent=5 // pred_check_branch
        %543 = sbr.rel (%p540) target = $region72
      $region71: #{vit_caption_forward.8} parent=5 // pred_region
        %s544 = ssub.s32 %s25, 1
        %s545 = sand.u32 %s128, 1
        %s546 = scalar_lea.sflag [#allocation3], %s545
        %s547 = sand.u32 %s128, 1
        %s548 = smul.addr %s547, 192
        %s549 = scalar_lea.vmem [#allocation2], %s548
        // Predicated region
        $region73: #{vit_caption_forward.8} parent=71 // pred_check
          %p550 = pneg %p141
        $region74: #{vit_caption_forward.8} parent=71 // pred_check_branch
          %552 = sbr.rel (%p550) target = $region76
        $region75: #{vit_caption_forward.8} parent=71 // pred_region
          %554 = dma.done %s546, 3072
        $region76: #{vit_caption_forward.8} parent=71 // pred_fallthru
          _
        %s555 = sand.u32 %s336, 1
        %s556 = scalar_lea.sflag [#allocation5], %s555
        %s557 = sand.u32 %s336, 1
        %s558 = smul.addr %s557, 256
        %s559 = scalar_lea.vmem [#allocation4], %s558
        // Predicated region
        $region77: #{vit_caption_forward.8} parent=71 // pred_check
          %p560 = pneg %p349
        $region78: #{vit_caption_forward.8} parent=71 // pred_check_branch
          %562 = sbr.rel (%p560) target = $region80
        $region79: #{vit_caption_forward.8} parent=71 // pred_region
          %564 = dma.done %s556, 4096
        $region80: #{vit_caption_forward.8} parent=71 // pred_fallthru
          _
        %p565 = scmp.lt.s32.totalorder %s34, 1
        %s566 = scalar_select %p565, %s34, 1
        %s567 = smul.addr %s566, 2
        %s568 = smul.addr %s567, 8
        %s569 = scalar_lea.vmem %s0, %s568
        %p570 = pneg %p63
        %p571 = pneg %p60
        %p572 = scmp.lt.s32.totalorder %s35, 1
        %s573 = scalar_select %p572, %s35, 1
        %s574 = scalar_lea.vmem %s1, %s573
        %p575 = pneg %p89
        %p576 = pneg %p86
        %p577 = scmp.lt.s32.totalorder %s35, 1
        %s578 = scalar_select %p577, %s35, 1
        %s579 = scalar_lea.vmem %s2, %s578
        %p580 = pneg %p115
        %p581 = pneg %p112
        %s582 = sand.u32 %s128, 1
        %s583 = scalar_lea.sflag [#allocation3], %s582
        %s584 = sand.u32 %s128, 1
        %s585 = smul.addr %s584, 192
        %s586 = scalar_lea.vmem [#allocation2], %s585
        %p587 = pneg %p141
        %p588 = pneg %p138
        %p589 = scmp.lt.s32.totalorder %s35, 1
        %s590 = scalar_select %p589, %s35, 1
        %s591 = smul.addr %s590, 3
        %s592 = scalar_lea.vmem %s4, %s591
        %p593 = pneg %p167
        %p594 = pneg %p164
        %p595 = scmp.lt.s32.totalorder %s35, 1
        %s596 = scalar_select %p595, %s35, 1
        %s597 = smul.addr %s596, 16
        %s598 = smul.addr %s597, 4
        %s599 = scalar_lea.vmem %s5, %s598
        %p600 = pneg %p193
        %p601 = pneg %p190
        %p602 = scmp.lt.s32.totalorder %s35, 1
        %s603 = scalar_select %p602, %s35, 1
        %s604 = scalar_lea.vmem %s6, %s603
        %p605 = pneg %p219
        %p606 = pneg %p216
        %p607 = scmp.lt.s32.totalorder %s35, 1
        %s608 = scalar_select %p607, %s35, 1
        %s609 = scalar_lea.vmem %s7, %s608
        %p610 = pneg %p245
        %p611 = pneg %p242
        %p612 = scmp.lt.s32.totalorder %s35, 1
        %s613 = scalar_select %p612, %s35, 1
        %s614 = scalar_lea.vmem %s8, %s613
        %p615 = pneg %p271
        %p616 = pneg %p268
        %p617 = scmp.lt.s32.totalorder %s35, 1
        %s618 = scalar_select %p617, %s35, 1
        %s619 = smul.addr %s618, 64
        %s620 = smul.addr %s619, 4
        %s621 = scalar_lea.vmem %s9, %s620
        %p622 = pneg %p297
        %p623 = pneg %p294
        %p624 = scmp.lt.s32.totalorder %s35, 1
        %s625 = scalar_select %p624, %s35, 1
        %s626 = smul.addr %s625, 4
        %s627 = scalar_lea.vmem %s10, %s626
        %p628 = pneg %p323
        %p629 = pneg %p320
        %s630 = sand.u32 %s336, 1
        %s631 = scalar_lea.sflag [#allocation5], %s630
        %s632 = sand.u32 %s336, 1
        %s633 = smul.addr %s632, 256
        %s634 = scalar_lea.vmem [#allocation4], %s633
        %p635 = pneg %p349
        %p636 = pneg %p346
        %p637 = scmp.lt.s32.totalorder %s35, 1
        %s638 = scalar_select %p637, %s35, 1
        %s639 = scalar_lea.vmem %s12, %s638
        %p640 = pneg %p375
        %p641 = pneg %p372
        %p642 = pneg %p401
        %p643 = pneg %p398
        %p644 = scmp.lt.s32.totalorder %s34, 1
        %s645 = scalar_select %p644, %s34, 1
        %s646 = smul.addr %s645, 2
        %s647 = smul.addr %s646, 8
        %s648 = scalar_lea.vmem %s13, %s647
        %p649 = scmp.lt.s32.totalorder %s34, 1
        %s650 = scalar_select %p649, %s34, 1
        %s651 = smul.addr %s650, 2
        %s652 = smul.addr %s651, 8
        %s653 = scalar_lea.vmem %s0, %s652
        %p654 = scmp.lt.s32.totalorder %s35, 1
        %s655 = scalar_select %p654, %s35, 1
        %s656 = scalar_lea.vmem %s1, %s655
        %p657 = scmp.lt.s32.totalorder %s35, 1
        %s658 = scalar_select %p657, %s35, 1
        %s659 = scalar_lea.vmem %s2, %s658
        %p660 = scmp.lt.s32.totalorder %s35, 1
        %s661 = scalar_select %p660, %s35, 1
        %s662 = smul.addr %s661, 3
        %s663 = scalar_lea.vmem %s4, %s662
        %p664 = scmp.lt.s32.totalorder %s35, 1
        %s665 = scalar_select %p664, %s35, 1
        %s666 = smul.addr %s665, 16
        %s667 = smul.addr %s666, 4
        %s668 = scalar_lea.vmem %s5, %s667
        %p669 = scmp.lt.s32.totalorder %s35, 1
        %s670 = scalar_select %p669, %s35, 1
        %s671 = scalar_lea.vmem %s6, %s670
        %p672 = scmp.lt.s32.totalorder %s35, 1
        %s673 = scalar_select %p672, %s35, 1
        %s674 = scalar_lea.vmem %s7, %s673
        %p675 = scmp.lt.s32.totalorder %s35, 1
        %s676 = scalar_select %p675, %s35, 1
        %s677 = scalar_lea.vmem %s8, %s676
        %p678 = scmp.lt.s32.totalorder %s35, 1
        %s679 = scalar_select %p678, %s35, 1
        %s680 = smul.addr %s679, 64
        %s681 = smul.addr %s680, 4
        %s682 = scalar_lea.vmem %s9, %s681
        %p683 = scmp.lt.s32.totalorder %s35, 1
        %s684 = scalar_select %p683, %s35, 1
        %s685 = smul.addr %s684, 4
        %s686 = scalar_lea.vmem %s10, %s685
        %p687 = scmp.lt.s32.totalorder %s35, 1
        %s688 = scalar_select %p687, %s35, 1
        %s689 = scalar_lea.vmem %s12, %s688
        %p690 = scmp.lt.s32.totalorder %s34, 1
        %s691 = scalar_select %p690, %s34, 1
        %s692 = smul.addr %s691, 2
        %s693 = smul.addr %s692, 8
        %s694 = scalar_lea.vmem %s13, %s693
        %p696 = scmp.eq.s32.totalorder %s35, 0
        // Predicated region
        $region81: #{vit_caption_forward.8} parent=71 // pred_check
          %p697 = pneg %p696
        $region82: #{vit_caption_forward.8} parent=71 // pred_check_branch
          %699 = sbr.rel (%p697) target = $region84
        $region83: #{vit_caption_forward.8} parent=71 // pred_region
          %v700 = vld [vmem:[%s653] sm:$0xff]
          %v701 = vld [vmem:[%s653 + $0x8] sm:$0xff]
          %702 = vst [vmem:[%s694] sm:$0xff] %v700
          %703 = vst [vmem:[%s694 + $0x8] sm:$0xff] %v701
        $region84: #{vit_caption_forward.8} parent=71 // pred_fallthru
          _
        %v704 = vld [vmem:[%s694] sm:$0xff]
        %v705 = vld [vmem:[%s694 + $0x8] sm:$0xff]
        %v706 = vlaneseq
        %v707 = vshrl.u32 %v706, 7
        %v708 = vadd.s32 %v707, 8
        %v709 = vlaneseq
        %v710 = vand.u32 %v709, 127
        %vm711 = vcmp.lt.s32.totalorder %v710, 13
        %vm712 = vcmp.le.s32.totalorder %v710, %v707
        %vm713 = vcmp.le.s32.totalorder %v710, %v708
        %vm714 = vmand %vm711, %vm712
        %vm715 = vmand %vm711, %vm713
        %v716 = vsel %vm714, 0.0, -1e+30
        %v717 = vsel %vm715, 0.0, -1e+30
        %v718 = vld [vmem:[%s656] sm:$0x1]
        %v719 = vld [vmem:[%s659] sm:$0x1]
        %720 = vadd.xlane.f32.xlu0 %v704
        %v721 = vpop.xlane.xlu0 %720
        %722 = vadd.xlane.f32.xlu0 %v705
        %v723 = vpop.xlane.xlu0 %722
        %v724 = vrcp.pop 128.0
        %v725 = vmul.f32 128.0, %v724
        %v726 = vsub.f32 1.0, %v725
        %v727 = vmul.f32 %v724, %v726
        %v728 = vadd.f32 %v724, %v727
        %vm729 = vweird.f32 %v724
        %v730 = vsel %vm729, %v724, %v728
        %v731 = vmul.f32 %v721, %v730
        %v732 = vmul.f32 %v723, %v730
        %v733 = vsub.f32 %v704, %v731
        %v734 = vsub.f32 %v705, %v732
        %v735 = vmul.f32 %v733, %v733
        %v736 = vmul.f32 %v734, %v734
        %737 = vadd.xlane.f32.xlu0 %v735
        %v738 = vpop.xlane.xlu0 %737
        %739 = vadd.xlane.f32.xlu0 %v736
        %v740 = vpop.xlane.xlu0 %739
        %v741 = vmul.f32 %v738, %v730
        %v742 = vmul.f32 %v740, %v730
        %v743 = vadd.f32 %v741, 1e-05
        %v744 = vadd.f32 %v742, 1e-05
        %v745 = vrsqrt.pop %v743
        %v746 = vmul.f32 %v745, %v743
        %v747 = vmul.f32 %v746, %v745
        %v748 = vmul.f32 0.5, %v747
        %v749 = vsub.f32 1.5, %v748
        %v750 = vmul.f32 %v745, %v749
        %vm751 = vweird.f32 %v743
        %vm752 = vweird.f32 %v745
        %vm753 = vmor %vm751, %vm752
        %v754 = vsel %vm753, %v745, %v750
        %v755 = vrsqrt.pop %v744
        %v756 = vmul.f32 %v755, %v744
        %v757 = vmul.f32 %v756, %v755
        %v758 = vmul.f32 0.5, %v757
        %v759 = vsub.f32 1.5, %v758
        %v760 = vmul.f32 %v755, %v759
        %vm761 = vweird.f32 %v744
        %vm762 = vweird.f32 %v755
        %vm763 = vmor %vm761, %vm762
        %v764 = vsel %vm763, %v755, %v760
        %v765 = vmul.f32 %v733, %v754
        %v766 = vmul.f32 %v734, %v764
        %v768 = vperm.slane %v718, 0
        %v770 = vmul.f32 %v765, %v768
        %v771 = vmul.f32 %v766, %v768
        %v773 = vperm.slane %v719, 0
        %v775 = vadd.f32 %v770, %v773
        %v776 = vadd.f32 %v771, %v773
        %v777 = vpack.c.bf16 %v776, %v775
        %v778 = vld [vmem:[%s549] sm:$0xff]
        %v779 = vld [vmem:[%s549 + $0x8] sm:$0xf]
        %v780 = vld [vmem:[%s549 + $0xc] sm:$0xff]
        %v781 = vld [vmem:[%s549 + $0x14] sm:$0xf]
        %v782 = vld [vmem:[%s549 + $0x18] sm:$0xff]
        %v783 = vld [vmem:[%s549 + $0x20] sm:$0xf]
        %v784 = vld [vmem:[%s549 + $0x24] sm:$0xff]
        %v785 = vld [vmem:[%s549 + $0x2c] sm:$0xf]
        %v786 = vld [vmem:[%s549 + $0x30] sm:$0xff]
        %v787 = vld [vmem:[%s549 + $0x38] sm:$0xf]
        %v788 = vld [vmem:[%s549 + $0x3c] sm:$0xff]
        %v789 = vld [vmem:[%s549 + $0x44] sm:$0xf]
        %v790 = vld [vmem:[%s549 + $0x48] sm:$0xff]
        %v791 = vld [vmem:[%s549 + $0x50] sm:$0xf]
        %v792 = vld [vmem:[%s549 + $0x54] sm:$0xff]
        %v793 = vld [vmem:[%s549 + $0x5c] sm:$0xf]
        %v794 = vld [vmem:[%s549 + $0x60] sm:$0xff]
        %v795 = vld [vmem:[%s549 + $0x68] sm:$0xf]
        %v796 = vld [vmem:[%s549 + $0x6c] sm:$0xff]
        %v797 = vld [vmem:[%s549 + $0x74] sm:$0xf]
        %v798 = vld [vmem:[%s549 + $0x78] sm:$0xff]
        %v799 = vld [vmem:[%s549 + $0x80] sm:$0xf]
        %v800 = vld [vmem:[%s549 + $0x84] sm:$0xff]
        %v801 = vld [vmem:[%s549 + $0x8c] sm:$0xf]
        %v802 = vld [vmem:[%s549 + $0x90] sm:$0xff]
        %v803 = vld [vmem:[%s549 + $0x98] sm:$0xf]
        %v804 = vld [vmem:[%s549 + $0x9c] sm:$0xff]
        %v805 = vld [vmem:[%s549 + $0xa4] sm:$0xf]
        %v806 = vld [vmem:[%s549 + $0xa8] sm:$0xff]
        %v807 = vld [vmem:[%s549 + $0xb0] sm:$0xf]
        %v808 = vld [vmem:[%s549 + $0xb4] sm:$0xff]
        %v809 = vld [vmem:[%s549 + $0xbc] sm:$0xf]
        %v810 = vld [vmem:[%s663] sm:$0x7]
        %v812 = vperm.slane %v810, 0
        %v813 = vperm.slane %v810, 1
        %v814 = vperm.slane %v810, 2
        %v850 = vunpack.c.l.b16 %v778
        %v851 = vunpack.c.h.b16 %v778
        %v852 = vunpack.c.l.b16 %v779
        %v853 = vunpack.c.l.b16 %v780
        %v854 = vunpack.c.h.b16 %v780
        %v855 = vunpack.c.l.b16 %v781
        %v856 = vunpack.c.l.b16 %v782
        %v857 = vunpack.c.h.b16 %v782
        %v858 = vunpack.c.l.b16 %v783
        %v859 = vunpack.c.l.b16 %v784
        %v860 = vunpack.c.h.b16 %v784
        %v861 = vunpack.c.l.b16 %v785
        %v862 = vunpack.c.l.b16 %v786
        %v863 = vunpack.c.h.b16 %v786
        %v864 = vunpack.c.l.b16 %v787
        %v865 = vunpack.c.l.b16 %v788
        %v866 = vunpack.c.h.b16 %v788
        %v867 = vunpack.c.l.b16 %v789
        %v868 = vunpack.c.l.b16 %v790
        %v869 = vunpack.c.h.b16 %v790
        %v870 = vunpack.c.l.b16 %v791
        %v871 = vunpack.c.l.b16 %v792
        %v872 = vunpack.c.h.b16 %v792
        %v873 = vunpack.c.l.b16 %v793
        %v874 = vunpack.c.l.b16 %v794
        %v875 = vunpack.c.h.b16 %v794
        %v876 = vunpack.c.l.b16 %v795
        %v877 = vunpack.c.l.b16 %v796
        %v878 = vunpack.c.h.b16 %v796
        %v879 = vunpack.c.l.b16 %v797
        %v880 = vunpack.c.l.b16 %v798
        %v881 = vunpack.c.h.b16 %v798
        %v882 = vunpack.c.l.b16 %v799
        %v883 = vunpack.c.l.b16 %v800
        %v884 = vunpack.c.h.b16 %v800
        %v885 = vunpack.c.l.b16 %v801
        %v886 = vunpack.c.l.b16 %v802
        %v887 = vunpack.c.h.b16 %v802
        %v888 = vunpack.c.l.b16 %v803
        %v889 = vunpack.c.l.b16 %v804
        %v890 = vunpack.c.h.b16 %v804
        %v891 = vunpack.c.l.b16 %v805
        %v892 = vunpack.c.l.b16 %v806
        %v893 = vunpack.c.h.b16 %v806
        %v894 = vunpack.c.l.b16 %v807
        %v895 = vunpack.c.l.b16 %v808
        %v896 = vunpack.c.h.b16 %v808
        %v897 = vunpack.c.l.b16 %v809
        %v898 = vpack.c.b16 %v853, %v850
        %v899 = vpack.c.b16 %v854, %v851
        %v900 = vpack.c.b16 %v855, %v852
        %v901 = vpack.c.b16 %v859, %v856
        %v902 = vpack.c.b16 %v860, %v857
        %v903 = vpack.c.b16 %v861, %v858
        %v904 = vpack.c.b16 %v865, %v862
        %v905 = vpack.c.b16 %v866, %v863
        %v906 = vpack.c.b16 %v867, %v864
        %v907 = vpack.c.b16 %v871, %v868
        %v908 = vpack.c.b16 %v872, %v869
        %v909 = vpack.c.b16 %v873, %v870
        %v910 = vpack.c.b16 %v877, %v874
        %v911 = vpack.c.b16 %v878, %v875
        %v912 = vpack.c.b16 %v879, %v876
        %v913 = vpack.c.b16 %v883, %v880
        %v914 = vpack.c.b16 %v884, %v881
        %v915 = vpack.c.b16 %v885, %v882
        %v916 = vpack.c.b16 %v889, %v886
        %v917 = vpack.c.b16 %v890, %v887
        %v918 = vpack.c.b16 %v891, %v888
        %v919 = vpack.c.b16 %v895, %v892
        %v920 = vpack.c.b16 %v896, %v893
        %v921 = vpack.c.b16 %v897, %v894
        %946 = vmatpush.bf16.msra.mxu0 %v919
        %947 = vmatpush.bf16.msra.mxu0 %v916
        %948 = vmatpush.bf16.msra.mxu0 %v913
        %949 = vmatpush.bf16.msra.mxu0 %v910
        %950 = vmatpush.bf16.msra.mxu0 %v907
        %951 = vmatpush.bf16.msra.mxu0 %v904
        %952 = vmatpush.bf16.msra.mxu0 %v901
        %953 = vmatpush.bf16.msra.mxu0 %v898
        %954 = vmatmul.bf16.gmra.mxu0 %v777
        %v955 = vpop.f32.mrf.mxu0
        %v956 = vadd.f32 %v812, %v955
        %v957 = vpop.f32.mrf.mxu0
        %v958 = vadd.f32 %v812, %v957
        %959 = vdwg.mxu0
        %960 = vmatpush.bf16.msra.mxu0 %v920
        %961 = vmatpush.bf16.msra.mxu0 %v917
        %962 = vmatpush.bf16.msra.mxu0 %v914
        %963 = vmatpush.bf16.msra.mxu0 %v911
        %964 = vmatpush.bf16.msra.mxu0 %v908
        %965 = vmatpush.bf16.msra.mxu0 %v905
        %966 = vmatpush.bf16.msra.mxu0 %v902
        %967 = vmatpush.bf16.msra.mxu0 %v899
        %968 = vmatmul.bf16.gmra.mxu0 %v777
        %v969 = vpop.f32.mrf.mxu0
        %v970 = vadd.f32 %v813, %v969
        %v971 = vpop.f32.mrf.mxu0
        %v972 = vadd.f32 %v813, %v971
        %973 = vdwg.mxu0
        %974 = vmatpush.bf16.msra.mxu0 %v921
        %975 = vmatpush.bf16.msra.mxu0 %v918
        %976 = vmatpush.bf16.msra.mxu0 %v915
        %977 = vmatpush.bf16.msra.mxu0 %v912
        %978 = vmatpush.bf16.msra.mxu0 %v909
        %979 = vmatpush.bf16.msra.mxu0 %v906
        %980 = vmatpush.bf16.msra.mxu0 %v903
        %981 = vmatpush.bf16.msra.mxu0 %v900
        %982 = vmatmul.bf16.gmra.mxu0 %v777
        %v983 = vpop.f32.mrf.mxu0
        %v984 = vadd.f32 %v814, %v983
        %v985 = vpop.f32.mrf.mxu0
        %v986 = vadd.f32 %v814, %v985
        %987 = vdwg.mxu0
        %v988 = vpack.c.bf16 %v956, %v956
        %v989 = vpack.c.bf16 %v958, %v958
        %992 = vrot.lane.b32.xlu0 %v988, 96
        %v993 = vpop.permute.xlu0 %992
        %994 = vrot.lane.b32.xlu0 %v989, 96
        %v995 = vpop.permute.xlu0 %994
        %996 = vrot.lane.b32.xlu0 %v988, 64
        %v997 = vpop.permute.xlu0 %996
        %998 = vrot.lane.b32.xlu0 %v989, 64
        %v999 = vpop.permute.xlu0 %998
        %1000 = vrot.lane.b32.xlu0 %v988, 32
        %v1001 = vpop.permute.xlu0 %1000
        %1002 = vrot.lane.b32.xlu0 %v989, 32
        %v1003 = vpop.permute.xlu0 %1002
        %v1004 = vpack.c.bf16 %v970, %v970
        %v1005 = vpack.c.bf16 %v972, %v972
        %1008 = vrot.lane.b32.xlu0 %v1004, 96
        %v1009 = vpop.permute.xlu0 %1008
        %1010 = vrot.lane.b32.xlu0 %v1005, 96
        %v1011 = vpop.permute.xlu0 %1010
        %1012 = vrot.lane.b32.xlu0 %v1004, 64
        %v1013 = vpop.permute.xlu0 %1012
        %1014 = vrot.lane.b32.xlu0 %v1005, 64
        %v1015 = vpop.permute.xlu0 %1014
        %1016 = vrot.lane.b32.xlu0 %v1004, 32
        %v1017 = vpop.permute.xlu0 %1016
        %1018 = vrot.lane.b32.xlu0 %v1005, 32
        %v1019 = vpop.permute.xlu0 %1018
        %v1020 = vpack.c.bf16 %v984, %v984
        %v1021 = vpack.c.bf16 %v986, %v986
        %1024 = vrot.lane.b32.xlu0 %v1020, 96
        %v1025 = vpop.permute.xlu0 %1024
        %1026 = vrot.lane.b32.xlu0 %v1021, 96
        %v1027 = vpop.permute.xlu0 %1026
        %1028 = vrot.lane.b32.xlu0 %v1020, 64
        %v1029 = vpop.permute.xlu0 %1028
        %1030 = vrot.lane.b32.xlu0 %v1021, 64
        %v1031 = vpop.permute.xlu0 %1030
        %1032 = vrot.lane.b32.xlu0 %v1020, 32
        %v1033 = vpop.permute.xlu0 %1032
        %1034 = vrot.lane.b32.xlu0 %v1021, 32
        %v1035 = vpop.permute.xlu0 %1034
        %v1036 = vunpack.c.l.b16 %v988
        %v1037 = vunpack.c.l.b16 %v989
        %v1038 = vpack.c.b16 %v1037, %v1036
        %v1039 = vunpack.c.l.b16 %v1004
        %v1040 = vunpack.c.l.b16 %v1005
        %v1041 = vpack.c.b16 %v1040, %v1039
        %vm1042 = vcmask 261120
        %v1044 = vsel %vm1042, %v1038, 0
        %v1047 = vsel %vm1042, %v1041, 0
        %1049 = vmatpush.bf16.xpose.msra.mxu0 0
        %1050 = vmatpush.bf16.xpose.msra.mxu0 0
        %1051 = vmatpush.bf16.xpose.msra.mxu0 0
        %1052 = vmatpush.bf16.xpose.msra.mxu0 0
        %1053 = vmatpush.bf16.xpose.msra.mxu0 0
        %1054 = vmatpush.bf16.xpose.msra.mxu0 0
        %1055 = vmatpush.bf16.xpose.msra.mxu0 0
        %1056 = vmatpush.bf16.xpose.msra.mxu0 %v1047
        %1057 = vmatmul.bf16.gmra.mxu0 %v1044
        %v1058 = vpop.f32.mrf.mxu0
        %v1059 = vadd.f32 0.0, %v1058
        %v1060 = vpop.f32.mrf.mxu0
        %v1061 = vadd.f32 0.0, %v1060
        %1062 = vdwg.mxu0
        %v1063 = vunpack.c.l.b16 %v993
        %v1064 = vunpack.c.l.b16 %v995
        %v1065 = vpack.c.b16 %v1064, %v1063
        %v1066 = vunpack.c.l.b16 %v1009
        %v1067 = vunpack.c.l.b16 %v1011
        %v1068 = vpack.c.b16 %v1067, %v1066
        %v1070 = vsel %vm1042, %v1065, 0
        %v1073 = vsel %vm1042, %v1068, 0
        %1075 = vmatpush.bf16.xpose.msra.mxu0 0
        %1076 = vmatpush.bf16.xpose.msra.mxu0 0
        %1077 = vmatpush.bf16.xpose.msra.mxu0 0
        %1078 = vmatpush.bf16.xpose.msra.mxu0 0
        %1079 = vmatpush.bf16.xpose.msra.mxu0 0
        %1080 = vmatpush.bf16.xpose.msra.mxu0 0
        %1081 = vmatpush.bf16.xpose.msra.mxu0 0
        %1082 = vmatpush.bf16.xpose.msra.mxu0 %v1073
        %1083 = vmatmul.bf16.gmra.mxu0 %v1070
        %v1084 = vpop.f32.mrf.mxu0
        %v1085 = vadd.f32 0.0, %v1084
        %v1086 = vpop.f32.mrf.mxu0
        %v1087 = vadd.f32 0.0, %v1086
        %1088 = vdwg.mxu0
        %v1089 = vunpack.c.l.b16 %v997
        %v1090 = vunpack.c.l.b16 %v999
        %v1091 = vpack.c.b16 %v1090, %v1089
        %v1092 = vunpack.c.l.b16 %v1013
        %v1093 = vunpack.c.l.b16 %v1015
        %v1094 = vpack.c.b16 %v1093, %v1092
        %v1096 = vsel %vm1042, %v1091, 0
        %v1099 = vsel %vm1042, %v1094, 0
        %1101 = vmatpush.bf16.xpose.msra.mxu0 0
        %1102 = vmatpush.bf16.xpose.msra.mxu0 0
        %1103 = vmatpush.bf16.xpose.msra.mxu0 0
        %1104 = vmatpush.bf16.xpose.msra.mxu0 0
        %1105 = vmatpush.bf16.xpose.msra.mxu0 0
        %1106 = vmatpush.bf16.xpose.msra.mxu0 0
        %1107 = vmatpush.bf16.xpose.msra.mxu0 0
        %1108 = vmatpush.bf16.xpose.msra.mxu0 %v1099
        %1109 = vmatmul.bf16.gmra.mxu0 %v1096
        %v1110 = vpop.f32.mrf.mxu0
        %v1111 = vadd.f32 0.0, %v1110
        %v1112 = vpop.f32.mrf.mxu0
        %v1113 = vadd.f32 0.0, %v1112
        %1114 = vdwg.mxu0
        %v1115 = vunpack.c.l.b16 %v1001
        %v1116 = vunpack.c.l.b16 %v1003
        %v1117 = vpack.c.b16 %v1116, %v1115
        %v1118 = vunpack.c.l.b16 %v1017
        %v1119 = vunpack.c.l.b16 %v1019
        %v1120 = vpack.c.b16 %v1119, %v1118
        %v1122 = vsel %vm1042, %v1117, 0
        %v1125 = vsel %vm1042, %v1120, 0
        %1127 = vmatpush.bf16.xpose.msra.mxu0 0
        %1128 = vmatpush.bf16.xpose.msra.mxu0 0
        %1129 = vmatpush.bf16.xpose.msra.mxu0 0
        %1130 = vmatpush.bf16.xpose.msra.mxu0 0
        %1131 = vmatpush.bf16.xpose.msra.mxu0 0
        %1132 = vmatpush.bf16.xpose.msra.mxu0 0
        %1133 = vmatpush.bf16.xpose.msra.mxu0 0
        %1134 = vmatpush.bf16.xpose.msra.mxu0 %v1125
        %1135 = vmatmul.bf16.gmra.mxu0 %v1122
        %v1136 = vpop.f32.mrf.mxu0
        %v1137 = vadd.f32 0.0, %v1136
        %v1138 = vpop.f32.mrf.mxu0
        %v1139 = vadd.f32 0.0, %v1138
        %1140 = vdwg.mxu0
        %v1141 = vmul.f32 %v1059, 0.17677669
        %v1142 = vmul.f32 %v1061, 0.17677669
        %v1143 = vmul.f32 %v1085, 0.17677669
        %v1144 = vmul.f32 %v1087, 0.17677669
        %v1145 = vmul.f32 %v1111, 0.17677669
        %v1146 = vmul.f32 %v1113, 0.17677669
        %v1147 = vmul.f32 %v1137, 0.17677669
        %v1148 = vmul.f32 %v1139, 0.17677669
        %v1149 = vadd.f32 %v1141, %v716
        %v1150 = vadd.f32 %v1142, %v717
        %v1151 = vadd.f32 %v1143, %v716
        %v1152 = vadd.f32 %v1144, %v717
        %v1153 = vadd.f32 %v1145, %v716
        %v1154 = vadd.f32 %v1146, %v717
        %v1155 = vadd.f32 %v1147, %v716
        %v1156 = vadd.f32 %v1148, %v717
        %vm1157 = vcmask 130048
        %v1158 = vsel %vm1157, %v1149, -inf
        %1159 = vmax.xlane.f32.xlu0 %v1158
        %v1160 = vpop.xlane.xlu0 %1159
        %v1161 = vsel %vm1157, %v1150, -inf
        %1162 = vmax.xlane.f32.xlu0 %v1161
        %v1163 = vpop.xlane.xlu0 %1162
        %v1164 = vsel %vm1157, %v1151, -inf
        %1165 = vmax.xlane.f32.xlu0 %v1164
        %v1166 = vpop.xlane.xlu0 %1165
        %v1167 = vsel %vm1157, %v1152, -inf
        %1168 = vmax.xlane.f32.xlu0 %v1167
        %v1169 = vpop.xlane.xlu0 %1168
        %v1170 = vsel %vm1157, %v1153, -inf
        %1171 = vmax.xlane.f32.xlu0 %v1170
        %v1172 = vpop.xlane.xlu0 %1171
        %v1173 = vsel %vm1157, %v1154, -inf
        %1174 = vmax.xlane.f32.xlu0 %v1173
        %v1175 = vpop.xlane.xlu0 %1174
        %v1176 = vsel %vm1157, %v1155, -inf
        %1177 = vmax.xlane.f32.xlu0 %v1176
        %v1178 = vpop.xlane.xlu0 %1177
        %v1179 = vsel %vm1157, %v1156, -inf
        %1180 = vmax.xlane.f32.xlu0 %v1179
        %v1181 = vpop.xlane.xlu0 %1180
        %v1182 = vsub.f32 %v1149, %v1160
        %v1183 = vsub.f32 %v1150, %v1163
        %v1184 = vsub.f32 %v1151, %v1166
        %v1185 = vsub.f32 %v1152, %v1169
        %v1186 = vsub.f32 %v1153, %v1172
        %v1187 = vsub.f32 %v1154, %v1175
        %v1188 = vsub.f32 %v1155, %v1178
        %v1189 = vsub.f32 %v1156, %v1181
        %v1190 = vmul.f32 %v1182, 1.442695
        %v1191 = vpow.pop %v1190
        %v1192 = vmul.f32 %v1183, 1.442695
        %v1193 = vpow.pop %v1192
        %v1194 = vmul.f32 %v1184, 1.442695
        %v1195 = vpow.pop %v1194
        %v1196 = vmul.f32 %v1185, 1.442695
        %v1197 = vpow.pop %v1196
        %v1198 = vmul.f32 %v1186, 1.442695
        %v1199 = vpow.pop %v1198
        %v1200 = vmul.f32 %v1187, 1.442695
        %v1201 = vpow.pop %v1200
        %v1202 = vmul.f32 %v1188, 1.442695
        %v1203 = vpow.pop %v1202
        %v1204 = vmul.f32 %v1189, 1.442695
        %v1205 = vpow.pop %v1204
        %v1206 = vsel %vm1157, %v1191, 0.0
        %1207 = vadd.xlane.f32.xlu0 %v1206
        %v1208 = vpop.xlane.xlu0 %1207
        %v1209 = vsel %vm1157, %v1193, 0.0
        %1210 = vadd.xlane.f32.xlu0 %v1209
        %v1211 = vpop.xlane.xlu0 %1210
        %v1212 = vsel %vm1157, %v1195, 0.0
        %1213 = vadd.xlane.f32.xlu0 %v1212
        %v1214 = vpop.xlane.xlu0 %1213
        %v1215 = vsel %vm1157, %v1197, 0.0
        %1216 = vadd.xlane.f32.xlu0 %v1215
        %v1217 = vpop.xlane.xlu0 %1216
        %v1218 = vsel %vm1157, %v1199, 0.0
        %1219 = vadd.xlane.f32.xlu0 %v1218
        %v1220 = vpop.xlane.xlu0 %1219
        %v1221 = vsel %vm1157, %v1201, 0.0
        %1222 = vadd.xlane.f32.xlu0 %v1221
        %v1223 = vpop.xlane.xlu0 %1222
        %v1224 = vsel %vm1157, %v1203, 0.0
        %1225 = vadd.xlane.f32.xlu0 %v1224
        %v1226 = vpop.xlane.xlu0 %1225
        %v1227 = vsel %vm1157, %v1205, 0.0
        %1228 = vadd.xlane.f32.xlu0 %v1227
        %v1229 = vpop.xlane.xlu0 %1228
        %v1230 = vrcp.pop %v1208
        %v1231 = vrcp.pop %v1211
        %v1232 = vrcp.pop %v1214
        %v1233 = vrcp.pop %v1217
        %v1234 = vrcp.pop %v1220
        %v1235 = vrcp.pop %v1223
        %v1236 = vrcp.pop %v1226
        %v1237 = vrcp.pop %v1229
        %v1238 = vmul.f32 %v1191, %v1230
        %v1239 = vmul.f32 %v1193, %v1231
        %v1240 = vmul.f32 %v1195, %v1232
        %v1241 = vmul.f32 %v1197, %v1233
        %v1242 = vmul.f32 %v1199, %v1234
        %v1243 = vmul.f32 %v1201, %v1235
        %v1244 = vmul.f32 %v1203, %v1236
        %v1245 = vmul.f32 %v1205, %v1237
        %v1246 = vpack.c.bf16 %v1238, %v1238
        %v1247 = vpack.c.bf16 %v1239, %v1239
        %v1248 = vpack.c.bf16 %v1240, %v1240
        %v1249 = vpack.c.bf16 %v1241, %v1241
        %v1250 = vpack.c.bf16 %v1242, %v1242
        %v1251 = vpack.c.bf16 %v1243, %v1243
        %v1252 = vpack.c.bf16 %v1244, %v1244
        %v1253 = vpack.c.bf16 %v1245, %v1245
        %v1256 = vunpack.c.l.b16 %v1246
        %v1257 = vunpack.c.l.b16 %v1247
        %v1258 = vpack.c.b16 %v1257, %v1256
        %v1259 = vunpack.c.l.b16 %v1020
        %v1260 = vunpack.c.l.b16 %v1021
        %v1261 = vpack.c.b16 %v1260, %v1259
        %v1264 = vsel %vm1157, %v1258, 0
        %1266 = vmatpush.bf16.msra.mxu0 0
        %1267 = vmatpush.bf16.msra.mxu0 0
        %1268 = vmatpush.bf16.msra.mxu0 0
        %1269 = vmatpush.bf16.msra.mxu0 0
        %1270 = vmatpush.bf16.msra.mxu0 0
        %1271 = vmatpush.bf16.msra.mxu0 0
        %1272 = vmatpush.bf16.msra.mxu0 0
        %1273 = vmatpush.bf16.msra.mxu0 %v1261
        %1274 = vmatmul.bf16.gmra.mxu0 %v1264
        %v1275 = vpop.f32.mrf.mxu0
        %v1276 = vadd.f32 0.0, %v1275
        %v1277 = vpop.f32.mrf.mxu0
        %v1278 = vadd.f32 0.0, %v1277
        %1279 = vdwg.mxu0
        %v1282 = vunpack.c.l.b16 %v1248
        %v1283 = vunpack.c.l.b16 %v1249
        %v1284 = vpack.c.b16 %v1283, %v1282
        %v1285 = vunpack.c.l.b16 %v1025
        %v1286 = vunpack.c.l.b16 %v1027
        %v1287 = vpack.c.b16 %v1286, %v1285
        %v1290 = vsel %vm1157, %v1284, 0
        %1292 = vmatpush.bf16.msra.mxu0 0
        %1293 = vmatpush.bf16.msra.mxu0 0
        %1294 = vmatpush.bf16.msra.mxu0 0
        %1295 = vmatpush.bf16.msra.mxu0 0
        %1296 = vmatpush.bf16.msra.mxu0 0
        %1297 = vmatpush.bf16.msra.mxu0 0
        %1298 = vmatpush.bf16.msra.mxu0 0
        %1299 = vmatpush.bf16.msra.mxu0 %v1287
        %1300 = vmatmul.bf16.gmra.mxu0 %v1290
        %v1301 = vpop.f32.mrf.mxu0
        %v1302 = vadd.f32 0.0, %v1301
        %v1303 = vpop.f32.mrf.mxu0
        %v1304 = vadd.f32 0.0, %v1303
        %1305 = vdwg.mxu0
        %v1308 = vunpack.c.l.b16 %v1250
        %v1309 = vunpack.c.l.b16 %v1251
        %v1310 = vpack.c.b16 %v1309, %v1308
        %v1311 = vunpack.c.l.b16 %v1029
        %v1312 = vunpack.c.l.b16 %v1031
        %v1313 = vpack.c.b16 %v1312, %v1311
        %v1316 = vsel %vm1157, %v1310, 0
        %1318 = vmatpush.bf16.msra.mxu0 0
        %1319 = vmatpush.bf16.msra.mxu0 0
        %1320 = vmatpush.bf16.msra.mxu0 0
        %1321 = vmatpush.bf16.msra.mxu0 0
        %1322 = vmatpush.bf16.msra.mxu0 0
        %1323 = vmatpush.bf16.msra.mxu0 0
        %1324 = vmatpush.bf16.msra.mxu0 0
        %1325 = vmatpush.bf16.msra.mxu0 %v1313
        %1326 = vmatmul.bf16.gmra.mxu0 %v1316
        %v1327 = vpop.f32.mrf.mxu0
        %v1328 = vadd.f32 0.0, %v1327
        %v1329 = vpop.f32.mrf.mxu0
        %v1330 = vadd.f32 0.0, %v1329
        %1331 = vdwg.mxu0
        %v1334 = vunpack.c.l.b16 %v1252
        %v1335 = vunpack.c.l.b16 %v1253
        %v1336 = vpack.c.b16 %v1335, %v1334
        %v1337 = vunpack.c.l.b16 %v1033
        %v1338 = vunpack.c.l.b16 %v1035
        %v1339 = vpack.c.b16 %v1338, %v1337
        %v1342 = vsel %vm1157, %v1336, 0
        %1344 = vmatpush.bf16.msra.mxu0 0
        %1345 = vmatpush.bf16.msra.mxu0 0
        %1346 = vmatpush.bf16.msra.mxu0 0
        %1347 = vmatpush.bf16.msra.mxu0 0
        %1348 = vmatpush.bf16.msra.mxu0 0
        %1349 = vmatpush.bf16.msra.mxu0 0
        %1350 = vmatpush.bf16.msra.mxu0 0
        %1351 = vmatpush.bf16.msra.mxu0 %v1339
        %1352 = vmatmul.bf16.gmra.mxu0 %v1342
        %v1353 = vpop.f32.mrf.mxu0
        %v1354 = vadd.f32 0.0, %v1353
        %v1355 = vpop.f32.mrf.mxu0
        %v1356 = vadd.f32 0.0, %v1355
        %1357 = vdwg.mxu0
        %1360 = vrot.lane.b32.xlu0 %v1302, 32
        %v1361 = vpop.permute.xlu0 %1360
        %1362 = vrot.lane.b32.xlu0 %v1304, 32
        %v1363 = vpop.permute.xlu0 %1362
        %1368 = vrot.lane.b32.xlu0 %v1328, 64
        %v1369 = vpop.permute.xlu0 %1368
        %1370 = vrot.lane.b32.xlu0 %v1330, 64
        %v1371 = vpop.permute.xlu0 %1370
        %1376 = vrot.lane.b32.xlu0 %v1354, 96
        %v1377 = vpop.permute.xlu0 %1376
        %1378 = vrot.lane.b32.xlu0 %v1356, 96
        %v1379 = vpop.permute.xlu0 %1378
        %v1382 = vsel %vm1042, %v1276, %v1361
        %v1383 = vsel %vm1042, %v1278, %v1363
        %vm1384 = vcmask 523264
        %v1385 = vsel %vm1384, %v1382, %v1369
        %v1386 = vsel %vm1384, %v1383, %v1371
        %vm1387 = vcmask 785408
        %v1388 = vsel %vm1387, %v1385, %v1377
        %v1389 = vsel %vm1387, %v1386, %v1379
        %v1390 = vpack.c.bf16 %v1389, %v1388
        %v1391 = vld [vmem:[%s668] sm:$0xf]
        %v1392 = vld [vmem:[%s668 + $0x4] sm:$0xf]
        %v1393 = vld [vmem:[%s668 + $0x8] sm:$0xf]
        %v1394 = vld [vmem:[%s668 + $0xc] sm:$0xf]
        %v1395 = vld [vmem:[%s668 + $0x10] sm:$0xf]
        %v1396 = vld [vmem:[%s668 + $0x14] sm:$0xf]
        %v1397 = vld [vmem:[%s668 + $0x18] sm:$0xf]
        %v1398 = vld [vmem:[%s668 + $0x1c] sm:$0xf]
        %v1399 = vld [vmem:[%s668 + $0x20] sm:$0xf]
        %v1400 = vld [vmem:[%s668 + $0x24] sm:$0xf]
        %v1401 = vld [vmem:[%s668 + $0x28] sm:$0xf]
        %v1402 = vld [vmem:[%s668 + $0x2c] sm:$0xf]
        %v1403 = vld [vmem:[%s668 + $0x30] sm:$0xf]
        %v1404 = vld [vmem:[%s668 + $0x34] sm:$0xf]
        %v1405 = vld [vmem:[%s668 + $0x38] sm:$0xf]
        %v1406 = vld [vmem:[%s668 + $0x3c] sm:$0xf]
        %v1423 = vunpack.c.l.b16 %v1391
        %v1424 = vunpack.c.l.b16 %v1392
        %v1425 = vunpack.c.l.b16 %v1393
        %v1426 = vunpack.c.l.b16 %v1394
        %v1427 = vunpack.c.l.b16 %v1395
        %v1428 = vunpack.c.l.b16 %v1396
        %v1429 = vunpack.c.l.b16 %v1397
        %v1430 = vunpack.c.l.b16 %v1398
        %v1431 = vunpack.c.l.b16 %v1399
        %v1432 = vunpack.c.l.b16 %v1400
        %v1433 = vunpack.c.l.b16 %v1401
        %v1434 = vunpack.c.l.b16 %v1402
        %v1435 = vunpack.c.l.b16 %v1403
        %v1436 = vunpack.c.l.b16 %v1404
        %v1437 = vunpack.c.l.b16 %v1405
        %v1438 = vunpack.c.l.b16 %v1406
        %v1439 = vpack.c.b16 %v1424, %v1423
        %v1440 = vpack.c.b16 %v1426, %v1425
        %v1441 = vpack.c.b16 %v1428, %v1427
        %v1442 = vpack.c.b16 %v1430, %v1429
        %v1443 = vpack.c.b16 %v1432, %v1431
        %v1444 = vpack.c.b16 %v1434, %v1433
        %v1445 = vpack.c.b16 %v1436, %v1435
        %v1446 = vpack.c.b16 %v1438, %v1437
        %1455 = vmatpush.bf16.msra.mxu0 %v1446
        %1456 = vmatpush.bf16.msra.mxu0 %v1445
        %1457 = vmatpush.bf16.msra.mxu0 %v1444
        %1458 = vmatpush.bf16.msra.mxu0 %v1443
        %1459 = vmatpush.bf16.msra.mxu0 %v1442
        %1460 = vmatpush.bf16.msra.mxu0 %v1441
        %1461 = vmatpush.bf16.msra.mxu0 %v1440
        %1462 = vmatpush.bf16.msra.mxu0 %v1439
        %1463 = vmatmul.bf16.gmra.mxu0 %v1390
        %v1464 = vpop.f32.mrf.mxu0
        %v1465 = vadd.f32 0.0, %v1464
        %v1466 = vpop.f32.mrf.mxu0
        %v1467 = vadd.f32 0.0, %v1466
        %1468 = vdwg.mxu0
        %v1469 = vadd.f32 %v704, %v1465
        %v1470 = vadd.f32 %v705, %v1467
        %v1471 = vld [vmem:[%s671] sm:$0x1]
        %v1473 = vperm.slane %v1471, 0
        %v1475 = vadd.f32 %v1469, %v1473
        %v1476 = vadd.f32 %v1470, %v1473
        %v1477 = vld [vmem:[%s674] sm:$0x1]
        %v1478 = vld [vmem:[%s677] sm:$0x1]
        %1479 = vadd.xlane.f32.xlu0 %v1475
        %v1480 = vpop.xlane.xlu0 %1479
        %1481 = vadd.xlane.f32.xlu0 %v1476
        %v1482 = vpop.xlane.xlu0 %1481
        %v1483 = vmul.f32 %v1480, %v730
        %v1484 = vmul.f32 %v1482, %v730
        %v1485 = vsub.f32 %v1475, %v1483
        %v1486 = vsub.f32 %v1476, %v1484
        %v1487 = vmul.f32 %v1485, %v1485
        %v1488 = vmul.f32 %v1486, %v1486
        %1489 = vadd.xlane.f32.xlu0 %v1487
        %v1490 = vpop.xlane.xlu0 %1489
        %1491 = vadd.xlane.f32.xlu0 %v1488
        %v1492 = vpop.xlane.xlu0 %1491
        %v1493 = vmul.f32 %v1490, %v730
        %v1494 = vmul.f32 %v1492, %v730
        %v1495 = vadd.f32 %v1493, 1e-05
        %v1496 = vadd.f32 %v1494, 1e-05
        %v1497 = vrsqrt.pop %v1495
        %v1498 = vmul.f32 %v1497, %v1495
        %v1499 = vmul.f32 %v1498, %v1497
        %v1500 = vmul.f32 0.5, %v1499
        %v1501 = vsub.f32 1.5, %v1500
        %v1502 = vmul.f32 %v1497, %v1501
        %vm1503 = vweird.f32 %v1495
        %vm1504 = vweird.f32 %v1497
        %vm1505 = vmor %vm1503, %vm1504
        %v1506 = vsel %vm1505, %v1497, %v1502
        %v1507 = vrsqrt.pop %v1496
        %v1508 = vmul.f32 %v1507, %v1496
        %v1509 = vmul.f32 %v1508, %v1507
        %v1510 = vmul.f32 0.5, %v1509
        %v1511 = vsub.f32 1.5, %v1510
        %v1512 = vmul.f32 %v1507, %v1511
        %vm1513 = vweird.f32 %v1496
        %vm1514 = vweird.f32 %v1507
        %vm1515 = vmor %vm1513, %vm1514
        %v1516 = vsel %vm1515, %v1507, %v1512
        %v1517 = vmul.f32 %v1485, %v1506
        %v1518 = vmul.f32 %v1486, %v1516
        %v1520 = vperm.slane %v1477, 0
        %v1522 = vmul.f32 %v1517, %v1520
        %v1523 = vmul.f32 %v1518, %v1520
        %v1525 = vperm.slane %v1478, 0
        %v1527 = vadd.f32 %v1522, %v1525
        %v1528 = vadd.f32 %v1523, %v1525
        %v1529 = vpack.c.bf16 %v1528, %v1527
        %v1530 = vld [vmem:[%s682] sm:$0xff]
        %v1531 = vld [vmem:[%s682 + $0x8] sm:$0xff]
        %v1532 = vld [vmem:[%s682 + $0x10] sm:$0xff]
        %v1533 = vld [vmem:[%s682 + $0x18] sm:$0xff]
        %v1534 = vld [vmem:[%s682 + $0x20] sm:$0xff]
        %v1535 = vld [vmem:[%s682 + $0x28] sm:$0xff]
        %v1536 = vld [vmem:[%s682 + $0x30] sm:$0xff]
        %v1537 = vld [vmem:[%s682 + $0x38] sm:$0xff]
        %v1538 = vld [vmem:[%s682 + $0x40] sm:$0xff]
        %v1539 = vld [vmem:[%s682 + $0x48] sm:$0xff]
        %v1540 = vld [vmem:[%s682 + $0x50] sm:$0xff]
        %v1541 = vld [vmem:[%s682 + $0x58] sm:$0xff]
        %v1542 = vld [vmem:[%s682 + $0x60] sm:$0xff]
        %v1543 = vld [vmem:[%s682 + $0x68] sm:$0xff]
        %v1544 = vld [vmem:[%s682 + $0x70] sm:$0xff]
        %v1545 = vld [vmem:[%s682 + $0x78] sm:$0xff]
        %v1546 = vld [vmem:[%s682 + $0x80] sm:$0xff]
        %v1547 = vld [vmem:[%s682 + $0x88] sm:$0xff]
        %v1548 = vld [vmem:[%s682 + $0x90] sm:$0xff]
        %v1549 = vld [vmem:[%s682 + $0x98] sm:$0xff]
        %v1550 = vld [vmem:[%s682 + $0xa0] sm:$0xff]
        %v1551 = vld [vmem:[%s682 + $0xa8] sm:$0xff]
        %v1552 = vld [vmem:[%s682 + $0xb0] sm:$0xff]
        %v1553 = vld [vmem:[%s682 + $0xb8] sm:$0xff]
        %v1554 = vld [vmem:[%s682 + $0xc0] sm:$0xff]
        %v1555 = vld [vmem:[%s682 + $0xc8] sm:$0xff]
        %v1556 = vld [vmem:[%s682 + $0xd0] sm:$0xff]
        %v1557 = vld [vmem:[%s682 + $0xd8] sm:$0xff]
        %v1558 = vld [vmem:[%s682 + $0xe0] sm:$0xff]
        %v1559 = vld [vmem:[%s682 + $0xe8] sm:$0xff]
        %v1560 = vld [vmem:[%s682 + $0xf0] sm:$0xff]
        %v1561 = vld [vmem:[%s682 + $0xf8] sm:$0xff]
        %v1562 = vld [vmem:[%s686] sm:$0xf]
        %v1564 = vperm.slane %v1562, 0
        %v1565 = vperm.slane %v1562, 1
        %v1566 = vperm.slane %v1562, 2
        %v1567 = vperm.slane %v1562, 3
        %v1604 = vunpack.c.l.b16 %v1530
        %v1605 = vunpack.c.h.b16 %v1530
        %v1606 = vunpack.c.l.b16 %v1531
        %v1607 = vunpack.c.h.b16 %v1531
        %v1608 = vunpack.c.l.b16 %v1532
        %v1609 = vunpack.c.h.b16 %v1532
        %v1610 = vunpack.c.l.b16 %v1533
        %v1611 = vunpack.c.h.b16 %v1533
        %v1612 = vunpack.c.l.b16 %v1534
        %v1613 = vunpack.c.h.b16 %v1534
        %v1614 = vunpack.c.l.b16 %v1535
        %v1615 = vunpack.c.h.b16 %v1535
        %v1616 = vunpack.c.l.b16 %v1536
        %v1617 = vunpack.c.h.b16 %v1536
        %v1618 = vunpack.c.l.b16 %v1537
        %v1619 = vunpack.c.h.b16 %v1537
        %v1620 = vunpack.c.l.b16 %v1538
        %v1621 = vunpack.c.h.b16 %v1538
        %v1622 = vunpack.c.l.b16 %v1539
        %v1623 = vunpack.c.h.b16 %v1539
        %v1624 = vunpack.c.l.b16 %v1540
        %v1625 = vunpack.c.h.b16 %v1540
        %v1626 = vunpack.c.l.b16 %v1541
        %v1627 = vunpack.c.h.b16 %v1541
        %v1628 = vunpack.c.l.b16 %v1542
        %v1629 = vunpack.c.h.b16 %v1542
        %v1630 = vunpack.c.l.b16 %v1543
        %v1631 = vunpack.c.h.b16 %v1543
        %v1632 = vunpack.c.l.b16 %v1544
        %v1633 = vunpack.c.h.b16 %v1544
        %v1634 = vunpack.c.l.b16 %v1545
        %v1635 = vunpack.c.h.b16 %v1545
        %v1636 = vunpack.c.l.b16 %v1546
        %v1637 = vunpack.c.h.b16 %v1546
        %v1638 = vunpack.c.l.b16 %v1547
        %v1639 = vunpack.c.h.b16 %v1547
        %v1640 = vunpack.c.l.b16 %v1548
        %v1641 = vunpack.c.h.b16 %v1548
        %v1642 = vunpack.c.l.b16 %v1549
        %v1643 = vunpack.c.h.b16 %v1549
        %v1644 = vunpack.c.l.b16 %v1550
        %v1645 = vunpack.c.h.b16 %v1550
        %v1646 = vunpack.c.l.b16 %v1551
        %v1647 = vunpack.c.h.b16 %v1551
        %v1648 = vunpack.c.l.b16 %v1552
        %v1649 = vunpack.c.h.b16 %v1552
        %v1650 = vunpack.c.l.b16 %v1553
        %v1651 = vunpack.c.h.b16 %v1553
        %v1652 = vunpack.c.l.b16 %v1554
        %v1653 = vunpack.c.h.b16 %v1554
        %v1654 = vunpack.c.l.b16 %v1555
        %v1655 = vunpack.c.h.b16 %v1555
        %v1656 = vunpack.c.l.b16 %v1556
        %v1657 = vunpack.c.h.b16 %v1556
        %v1658 = vunpack.c.l.b16 %v1557
        %v1659 = vunpack.c.h.b16 %v1557
        %v1660 = vunpack.c.l.b16 %v1558
        %v1661 = vunpack.c.h.b16 %v1558
        %v1662 = vunpack.c.l.b16 %v1559
        %v1663 = vunpack.c.h.b16 %v1559
        %v1664 = vunpack.c.l.b16 %v1560
        %v1665 = vunpack.c.h.b16 %v1560
        %v1666 = vunpack.c.l.b16 %v1561
        %v1667 = vunpack.c.h.b16 %v1561
        %v1668 = vpack.c.b16 %v1608, %v1604
        %v1669 = vpack.c.b16 %v1609, %v1605
        %v1670 = vpack.c.b16 %v1610, %v1606
        %v1671 = vpack.c.b16 %v1611, %v1607
        %v1672 = vpack.c.b16 %v1616, %v1612
        %v1673 = vpack.c.b16 %v1617, %v1613
        %v1674 = vpack.c.b16 %v1618, %v1614
        %v1675 = vpack.c.b16 %v1619, %v1615
        %v1676 = vpack.c.b16 %v1624, %v1620
        %v1677 = vpack.c.b16 %v1625, %v1621
        %v1678 = vpack.c.b16 %v1626, %v1622
        %v1679 = vpack.c.b16 %v1627, %v1623
        %v1680 = vpack.c.b16 %v1632, %v1628
        %v1681 = vpack.c.b16 %v1633, %v1629
        %v1682 = vpack.c.b16 %v1634, %v1630
        %v1683 = vpack.c.b16 %v1635, %v1631
        %v1684 = vpack.c.b16 %v1640, %v1636
        %v1685 = vpack.c.b16 %v1641, %v1637
        %v1686 = vpack.c.b16 %v1642, %v1638
        %v1687 = vpack.c.b16 %v1643, %v1639
        %v1688 = vpack.c.b16 %v1648, %v1644
        %v1689 = vpack.c.b16 %v1649, %v1645
        %v1690 = vpack.c.b16 %v1650, %v1646
        %v1691 = vpack.c.b16 %v1651, %v1647
        %v1692 = vpack.c.b16 %v1656, %v1652
        %v1693 = vpack.c.b16 %v1657, %v1653
        %v1694 = vpack.c.b16 %v1658, %v1654
        %v1695 = vpack.c.b16 %v1659, %v1655
        %v1696 = vpack.c.b16 %v1664, %v1660
        %v1697 = vpack.c.b16 %v1665, %v1661
        %v1698 = vpack.c.b16 %v1666, %v1662
        %v1699 = vpack.c.b16 %v1667, %v1663
        %1732 = vmatpush.bf16.msra.mxu0 %v1696
        %1733 = vmatpush.bf16.msra.mxu0 %v1692
        %1734 = vmatpush.bf16.msra.mxu0 %v1688
        %1735 = vmatpush.bf16.msra.mxu0 %v1684
        %1736 = vmatpush.bf16.msra.mxu0 %v1680
        %1737 = vmatpush.bf16.msra.mxu0 %v1676
        %1738 = vmatpush.bf16.msra.mxu0 %v1672
        %1739 = vmatpush.bf16.msra.mxu0 %v1668
        %1740 = vmatmul.bf16.gmra.mxu0 %v1529
        %v1741 = vpop.f32.mrf.mxu0
        %v1742 = vadd.f32 %v1564, %v1741
        %v1743 = vpop.f32.mrf.mxu0
        %v1744 = vadd.f32 %v1564, %v1743
        %1745 = vdwg.mxu0
        %1746 = vmatpush.bf16.msra.mxu0 %v1697
        %1747 = vmatpush.bf16.msra.mxu0 %v1693
        %1748 = vmatpush.bf16.msra.mxu0 %v1689
        %1749 = vmatpush.bf16.msra.mxu0 %v1685
        %1750 = vmatpush.bf16.msra.mxu0 %v1681
        %1751 = vmatpush.bf16.msra.mxu0 %v1677
        %1752 = vmatpush.bf16.msra.mxu0 %v1673
        %1753 = vmatpush.bf16.msra.mxu0 %v1669
        %1754 = vmatmul.bf16.gmra.mxu0 %v1529
        %v1755 = vpop.f32.mrf.mxu0
        %v1756 = vadd.f32 %v1565, %v1755
        %v1757 = vpop.f32.mrf.mxu0
        %v1758 = vadd.f32 %v1565, %v1757
        %1759 = vdwg.mxu0
        %1760 = vmatpush.bf16.msra.mxu0 %v1698
        %1761 = vmatpush.bf16.msra.mxu0 %v1694
        %1762 = vmatpush.bf16.msra.mxu0 %v1690
        %1763 = vmatpush.bf16.msra.mxu0 %v1686
        %1764 = vmatpush.bf16.msra.mxu0 %v1682
        %1765 = vmatpush.bf16.msra.mxu0 %v1678
        %1766 = vmatpush.bf16.msra.mxu0 %v1674
        %1767 = vmatpush.bf16.msra.mxu0 %v1670
        %1768 = vmatmul.bf16.gmra.mxu0 %v1529
        %v1769 = vpop.f32.mrf.mxu0
        %v1770 = vadd.f32 %v1566, %v1769
        %v1771 = vpop.f32.mrf.mxu0
        %v1772 = vadd.f32 %v1566, %v1771
        %1773 = vdwg.mxu0
        %1774 = vmatpush.bf16.msra.mxu0 %v1699
        %1775 = vmatpush.bf16.msra.mxu0 %v1695
        %1776 = vmatpush.bf16.msra.mxu0 %v1691
        %1777 = vmatpush.bf16.msra.mxu0 %v1687
        %1778 = vmatpush.bf16.msra.mxu0 %v1683
        %1779 = vmatpush.bf16.msra.mxu0 %v1679
        %1780 = vmatpush.bf16.msra.mxu0 %v1675
        %1781 = vmatpush.bf16.msra.mxu0 %v1671
        %1782 = vmatmul.bf16.gmra.mxu0 %v1529
        %v1783 = vpop.f32.mrf.mxu0
        %v1784 = vadd.f32 %v1567, %v1783
        %v1785 = vpop.f32.mrf.mxu0
        %v1786 = vadd.f32 %v1567, %v1785
        %1787 = vdwg.mxu0
        %v1788 = vmul.f32 %v1742, 0.5
        %v1789 = vmul.f32 %v1756, 0.5
        %v1790 = vmul.f32 %v1770, 0.5
        %v1791 = vmul.f32 %v1784, 0.5
        %v1792 = vmul.f32 %v1744, 0.5
        %v1793 = vmul.f32 %v1758, 0.5
        %v1794 = vmul.f32 %v1772, 0.5
        %v1795 = vmul.f32 %v1786, 0.5
        %v1796 = vmul.f32 %v1742, 0.044715
        %v1797 = vmul.f32 %v1756, 0.044715
        %v1798 = vmul.f32 %v1770, 0.044715
        %v1799 = vmul.f32 %v1784, 0.044715
        %v1800 = vmul.f32 %v1744, 0.044715
        %v1801 = vmul.f32 %v1758, 0.044715
        %v1802 = vmul.f32 %v1772, 0.044715
        %v1803 = vmul.f32 %v1786, 0.044715
        %v1804 = vmul.f32 %v1796, %v1742
        %v1805 = vmul.f32 %v1797, %v1756
        %v1806 = vmul.f32 %v1798, %v1770
        %v1807 = vmul.f32 %v1799, %v1784
        %v1808 = vmul.f32 %v1800, %v1744
        %v1809 = vmul.f32 %v1801, %v1758
        %v1810 = vmul.f32 %v1802, %v1772
        %v1811 = vmul.f32 %v1803, %v1786
        %v1812 = vmul.f32 %v1804, %v1742
        %v1813 = vmul.f32 %v1805, %v1756
        %v1814 = vmul.f32 %v1806, %v1770
        %v1815 = vmul.f32 %v1807, %v1784
        %v1816 = vmul.f32 %v1808, %v1744
        %v1817 = vmul.f32 %v1809, %v1758
        %v1818 = vmul.f32 %v1810, %v1772
        %v1819 = vmul.f32 %v1811, %v1786
        %v1820 = vadd.f32 %v1742, %v1812
        %v1821 = vadd.f32 %v1756, %v1813
        %v1822 = vadd.f32 %v1770, %v1814
        %v1823 = vadd.f32 %v1784, %v1815
        %v1824 = vadd.f32 %v1744, %v1816
        %v1825 = vadd.f32 %v1758, %v1817
        %v1826 = vadd.f32 %v1772, %v1818
        %v1827 = vadd.f32 %v1786, %v1819
        %v1828 = vmul.f32 %v1820, 0.7978846
        %v1829 = vmul.f32 %v1821, 0.7978846
        %v1830 = vmul.f32 %v1822, 0.7978846
        %v1831 = vmul.f32 %v1823, 0.7978846
        %v1832 = vmul.f32 %v1824, 0.7978846
        %v1833 = vmul.f32 %v1825, 0.7978846
        %v1834 = vmul.f32 %v1826, 0.7978846
        %v1835 = vmul.f32 %v1827, 0.7978846
        %v1836 = vtanh.pop %v1828
        %v1837 = vtanh.pop %v1829
        %v1838 = vtanh.pop %v1830
        %v1839 = vtanh.pop %v1831
        %v1840 = vtanh.pop %v1832
        %v1841 = vtanh.pop %v1833
        %v1842 = vtanh.pop %v1834
        %v1843 = vtanh.pop %v1835
        %v1844 = vadd.f32 %v1836, 1.0
        %v1845 = vadd.f32 %v1837, 1.0
        %v1846 = vadd.f32 %v1838, 1.0
        %v1847 = vadd.f32 %v1839, 1.0
        %v1848 = vadd.f32 %v1840, 1.0
        %v1849 = vadd.f32 %v1841, 1.0
        %v1850 = vadd.f32 %v1842, 1.0
        %v1851 = vadd.f32 %v1843, 1.0
        %v1852 = vmul.f32 %v1788, %v1844
        %v1853 = vmul.f32 %v1789, %v1845
        %v1854 = vmul.f32 %v1790, %v1846
        %v1855 = vmul.f32 %v1791, %v1847
        %v1856 = vmul.f32 %v1792, %v1848
        %v1857 = vmul.f32 %v1793, %v1849
        %v1858 = vmul.f32 %v1794, %v1850
        %v1859 = vmul.f32 %v1795, %v1851
        %v1860 = vpack.c.bf16 %v1856, %v1852
        %v1861 = vpack.c.bf16 %v1857, %v1853
        %v1862 = vpack.c.bf16 %v1858, %v1854
        %v1863 = vpack.c.bf16 %v1859, %v1855
        %v1864 = vld [vmem:[%s559] sm:$0xf]
        %v1865 = vld [vmem:[%s559 + $0x4] sm:$0xf]
        %v1866 = vld [vmem:[%s559 + $0x8] sm:$0xf]
        %v1867 = vld [vmem:[%s559 + $0xc] sm:$0xf]
        %v1868 = vld [vmem:[%s559 + $0x10] sm:$0xf]
        %v1869 = vld [vmem:[%s559 + $0x14] sm:$0xf]
        %v1870 = vld [vmem:[%s559 + $0x18] sm:$0xf]
        %v1871 = vld [vmem:[%s559 + $0x1c] sm:$0xf]
        %v1872 = vld [vmem:[%s559 + $0x20] sm:$0xf]
        %v1873 = vld [vmem:[%s559 + $0x24] sm:$0xf]
        %v1874 = vld [vmem:[%s559 + $0x28] sm:$0xf]
        %v1875 = vld [vmem:[%s559 + $0x2c] sm:$0xf]
        %v1876 = vld [vmem:[%s559 + $0x30] sm:$0xf]
        %v1877 = vld [vmem:[%s559 + $0x34] sm:$0xf]
        %v1878 = vld [vmem:[%s559 + $0x38] sm:$0xf]
        %v1879 = vld [vmem:[%s559 + $0x3c] sm:$0xf]
        %v1880 = vld [vmem:[%s559 + $0x40] sm:$0xf]
        %v1881 = vld [vmem:[%s559 + $0x44] sm:$0xf]
        %v1882 = vld [vmem:[%s559 + $0x48] sm:$0xf]
        %v1883 = vld [vmem:[%s559 + $0x4c] sm:$0xf]
        %v1884 = vld [vmem:[%s559 + $0x50] sm:$0xf]
        %v1885 = vld [vmem:[%s559 + $0x54] sm:$0xf]
        %v1886 = vld [vmem:[%s559 + $0x58] sm:$0xf]
        %v1887 = vld [vmem:[%s559 + $0x5c] sm:$0xf]
        %v1888 = vld [vmem:[%s559 + $0x60] sm:$0xf]
        %v1889 = vld [vmem:[%s559 + $0x64] sm:$0xf]
        %v1890 = vld [vmem:[%s559 + $0x68] sm:$0xf]
        %v1891 = vld [vmem:[%s559 + $0x6c] sm:$0xf]
        %v1892 = vld [vmem:[%s559 + $0x70] sm:$0xf]
        %v1893 = vld [vmem:[%s559 + $0x74] sm:$0xf]
        %v1894 = vld [vmem:[%s559 + $0x78] sm:$0xf]
        %v1895 = vld [vmem:[%s559 + $0x7c] sm:$0xf]
        %v1896 = vld [vmem:[%s559 + $0x80] sm:$0xf]
        %v1897 = vld [vmem:[%s559 + $0x84] sm:$0xf]
        %v1898 = vld [vmem:[%s559 + $0x88] sm:$0xf]
        %v1899 = vld [vmem:[%s559 + $0x8c] sm:$0xf]
        %v1900 = vld [vmem:[%s559 + $0x90] sm:$0xf]
        %v1901 = vld [vmem:[%s559 + $0x94] sm:$0xf]
        %v1902 = vld [vmem:[%s559 + $0x98] sm:$0xf]
        %v1903 = vld [vmem:[%s559 + $0x9c] sm:$0xf]
        %v1904 = vld [vmem:[%s559 + $0xa0] sm:$0xf]
        %v1905 = vld [vmem:[%s559 + $0xa4] sm:$0xf]
        %v1906 = vld [vmem:[%s559 + $0xa8] sm:$0xf]
        %v1907 = vld [vmem:[%s559 + $0xac] sm:$0xf]
        %v1908 = vld [vmem:[%s559 + $0xb0] sm:$0xf]
        %v1909 = vld [vmem:[%s559 + $0xb4] sm:$0xf]
        %v1910 = vld [vmem:[%s559 + $0xb8] sm:$0xf]
        %v1911 = vld [vmem:[%s559 + $0xbc] sm:$0xf]
        %v1912 = vld [vmem:[%s559 + $0xc0] sm:$0xf]
        %v1913 = vld [vmem:[%s559 + $0xc4] sm:$0xf]
        %v1914 = vld [vmem:[%s559 + $0xc8] sm:$0xf]
        %v1915 = vld [vmem:[%s559 + $0xcc] sm:$0xf]
        %v1916 = vld [vmem:[%s559 + $0xd0] sm:$0xf]
        %v1917 = vld [vmem:[%s559 + $0xd4] sm:$0xf]
        %v1918 = vld [vmem:[%s559 + $0xd8] sm:$0xf]
        %v1919 = vld [vmem:[%s559 + $0xdc] sm:$0xf]
        %v1920 = vld [vmem:[%s559 + $0xe0] sm:$0xf]
        %v1921 = vld [vmem:[%s559 + $0xe4] sm:$0xf]
        %v1922 = vld [vmem:[%s559 + $0xe8] sm:$0xf]
        %v1923 = vld [vmem:[%s559 + $0xec] sm:$0xf]
        %v1924 = vld [vmem:[%s559 + $0xf0] sm:$0xf]
        %v1925 = vld [vmem:[%s559 + $0xf4] sm:$0xf]
        %v1926 = vld [vmem:[%s559 + $0xf8] sm:$0xf]
        %v1927 = vld [vmem:[%s559 + $0xfc] sm:$0xf]
        %v1928 = vld [vmem:[%s689] sm:$0x1]
        %v1930 = vperm.slane %v1928, 0
        %v1996 = vunpack.c.l.b16 %v1864
        %v1997 = vunpack.c.l.b16 %v1865
        %v1998 = vunpack.c.l.b16 %v1866
        %v1999 = vunpack.c.l.b16 %v1867
        %v2000 = vunpack.c.l.b16 %v1868
        %v2001 = vunpack.c.l.b16 %v1869
        %v2002 = vunpack.c.l.b16 %v1870
        %v2003 = vunpack.c.l.b16 %v1871
        %v2004 = vunpack.c.l.b16 %v1872
        %v2005 = vunpack.c.l.b16 %v1873
        %v2006 = vunpack.c.l.b16 %v1874
        %v2007 = vunpack.c.l.b16 %v1875
        %v2008 = vunpack.c.l.b16 %v1876
        %v2009 = vunpack.c.l.b16 %v1877
        %v2010 = vunpack.c.l.b16 %v1878
        %v2011 = vunpack.c.l.b16 %v1879
        %v2012 = vunpack.c.l.b16 %v1880
        %v2013 = vunpack.c.l.b16 %v1881
        %v2014 = vunpack.c.l.b16 %v1882
        %v2015 = vunpack.c.l.b16 %v1883
        %v2016 = vunpack.c.l.b16 %v1884
        %v2017 = vunpack.c.l.b16 %v1885
        %v2018 = vunpack.c.l.b16 %v1886
        %v2019 = vunpack.c.l.b16 %v1887
        %v2020 = vunpack.c.l.b16 %v1888
        %v2021 = vunpack.c.l.b16 %v1889
        %v2022 = vunpack.c.l.b16 %v1890
        %v2023 = vunpack.c.l.b16 %v1891
        %v2024 = vunpack.c.l.b16 %v1892
        %v2025 = vunpack.c.l.b16 %v1893
        %v2026 = vunpack.c.l.b16 %v1894
        %v2027 = vunpack.c.l.b16 %v1895
        %v2028 = vunpack.c.l.b16 %v1896
        %v2029 = vunpack.c.l.b16 %v1897
        %v2030 = vunpack.c.l.b16 %v1898
        %v2031 = vunpack.c.l.b16 %v1899
        %v2032 = vunpack.c.l.b16 %v1900
        %v2033 = vunpack.c.l.b16 %v1901
        %v2034 = vunpack.c.l.b16 %v1902
        %v2035 = vunpack.c.l.b16 %v1903
        %v2036 = vunpack.c.l.b16 %v1904
        %v2037 = vunpack.c.l.b16 %v1905
        %v2038 = vunpack.c.l.b16 %v1906
        %v2039 = vunpack.c.l.b16 %v1907
        %v2040 = vunpack.c.l.b16 %v1908
        %v2041 = vunpack.c.l.b16 %v1909
        %v2042 = vunpack.c.l.b16 %v1910
        %v2043 = vunpack.c.l.b16 %v1911
        %v2044 = vunpack.c.l.b16 %v1912
        %v2045 = vunpack.c.l.b16 %v1913
        %v2046 = vunpack.c.l.b16 %v1914
        %v2047 = vunpack.c.l.b16 %v1915
        %v2048 = vunpack.c.l.b16 %v1916
        %v2049 = vunpack.c.l.b16 %v1917
        %v2050 = vunpack.c.l.b16 %v1918
        %v2051 = vunpack.c.l.b16 %v1919
        %v2052 = vunpack.c.l.b16 %v1920
        %v2053 = vunpack.c.l.b16 %v1921
        %v2054 = vunpack.c.l.b16 %v1922
        %v2055 = vunpack.c.l.b16 %v1923
        %v2056 = vunpack.c.l.b16 %v1924
        %v2057 = vunpack.c.l.b16 %v1925
        %v2058 = vunpack.c.l.b16 %v1926
        %v2059 = vunpack.c.l.b16 %v1927
        %v2060 = vpack.c.b16 %v1997, %v1996
        %v2061 = vpack.c.b16 %v1999, %v1998
        %v2062 = vpack.c.b16 %v2001, %v2000
        %v2063 = vpack.c.b16 %v2003, %v2002
        %v2064 = vpack.c.b16 %v2005, %v2004
        %v2065 = vpack.c.b16 %v2007, %v2006
        %v2066 = vpack.c.b16 %v2009, %v2008
        %v2067 = vpack.c.b16 %v2011, %v2010
        %v2068 = vpack.c.b16 %v2013, %v2012
        %v2069 = vpack.c.b16 %v2015, %v2014
        %v2070 = vpack.c.b16 %v2017, %v2016
        %v2071 = vpack.c.b16 %v2019, %v2018
        %v2072 = vpack.c.b16 %v2021, %v2020
        %v2073 = vpack.c.b16 %v2023, %v2022
        %v2074 = vpack.c.b16 %v2025, %v2024
        %v2075 = vpack.c.b16 %v2027, %v2026
        %v2076 = vpack.c.b16 %v2029, %v2028
        %v2077 = vpack.c.b16 %v2031, %v2030
        %v2078 = vpack.c.b16 %v2033, %v2032
        %v2079 = vpack.c.b16 %v2035, %v2034
        %v2080 = vpack.c.b16 %v2037, %v2036
        %v2081 = vpack.c.b16 %v2039, %v2038
        %v2082 = vpack.c.b16 %v2041, %v2040
        %v2083 = vpack.c.b16 %v2043, %v2042
        %v2084 = vpack.c.b16 %v2045, %v2044
        %v2085 = vpack.c.b16 %v2047, %v2046
        %v2086 = vpack.c.b16 %v2049, %v2048
        %v2087 = vpack.c.b16 %v2051, %v2050
        %v2088 = vpack.c.b16 %v2053, %v2052
        %v2089 = vpack.c.b16 %v2055, %v2054
        %v2090 = vpack.c.b16 %v2057, %v2056
        %v2091 = vpack.c.b16 %v2059, %v2058
        %2124 = vmatpush.bf16.msra.mxu0 %v2067
        %2125 = vmatpush.bf16.msra.mxu0 %v2066
        %2126 = vmatpush.bf16.msra.mxu0 %v2065
        %2127 = vmatpush.bf16.msra.mxu0 %v2064
        %2128 = vmatpush.bf16.msra.mxu0 %v2063
        %2129 = vmatpush.bf16.msra.mxu0 %v2062
        %2130 = vmatpush.bf16.msra.mxu0 %v2061
        %2131 = vmatpush.bf16.msra.mxu0 %v2060
        %2132 = vmatmul.bf16.gmra.mxu0 %v1860
        %v2133 = vpop.f32.mrf.mxu0
        %v2134 = vadd.f32 %v1930, %v2133
        %v2135 = vpop.f32.mrf.mxu0
        %v2136 = vadd.f32 %v1930, %v2135
        %2137 = vdwg.mxu0
        %2138 = vmatpush.bf16.msra.mxu0 %v2075
        %2139 = vmatpush.bf16.msra.mxu0 %v2074
        %2140 = vmatpush.bf16.msra.mxu0 %v2073
        %2141 = vmatpush.bf16.msra.mxu0 %v2072
        %2142 = vmatpush.bf16.msra.mxu0 %v2071
        %2143 = vmatpush.bf16.msra.mxu0 %v2070
        %2144 = vmatpush.bf16.msra.mxu0 %v2069
        %2145 = vmatpush.bf16.msra.mxu0 %v2068
        %2146 = vmatmul.bf16.gmra.mxu0 %v1861
        %v2147 = vpop.f32.mrf.mxu0
        %v2148 = vadd.f32 %v2134, %v2147
        %v2149 = vpop.f32.mrf.mxu0
        %v2150 = vadd.f32 %v2136, %v2149
        %2151 = vdwg.mxu0
        %2152 = vmatpush.bf16.msra.mxu0 %v2083
        %2153 = vmatpush.bf16.msra.mxu0 %v2082
        %2154 = vmatpush.bf16.msra.mxu0 %v2081
        %2155 = vmatpush.bf16.msra.mxu0 %v2080
        %2156 = vmatpush.bf16.msra.mxu0 %v2079
        %2157 = vmatpush.bf16.msra.mxu0 %v2078
        %2158 = vmatpush.bf16.msra.mxu0 %v2077
        %2159 = vmatpush.bf16.msra.mxu0 %v2076
        %2160 = vmatmul.bf16.gmra.mxu0 %v1862
        %v2161 = vpop.f32.mrf.mxu0
        %v2162 = vadd.f32 %v2148, %v2161
        %v2163 = vpop.f32.mrf.mxu0
        %v2164 = vadd.f32 %v2150, %v2163
        %2165 = vdwg.mxu0
        %2166 = vmatpush.bf16.msra.mxu0 %v2091
        %2167 = vmatpush.bf16.msra.mxu0 %v2090
        %2168 = vmatpush.bf16.msra.mxu0 %v2089
        %2169 = vmatpush.bf16.msra.mxu0 %v2088
        %2170 = vmatpush.bf16.msra.mxu0 %v2087
        %2171 = vmatpush.bf16.msra.mxu0 %v2086
        %2172 = vmatpush.bf16.msra.mxu0 %v2085
        %2173 = vmatpush.bf16.msra.mxu0 %v2084
        %2174 = vmatmul.bf16.gmra.mxu0 %v1863
        %v2175 = vpop.f32.mrf.mxu0
        %v2176 = vadd.f32 %v2162, %v2175
        %v2177 = vpop.f32.mrf.mxu0
        %v2178 = vadd.f32 %v2164, %v2177
        %2179 = vdwg.mxu0
        %v2180 = vadd.f32 %v1475, %v2176
        %v2181 = vadd.f32 %v1476, %v2178
        %2182 = vst [vmem:[%s694] sm:$0xff] %v2180
        %2183 = vst [vmem:[%s694 + $0x8] sm:$0xff] %v2181
        %p2184 = scmp.lt.s32.totalorder %s34, 1
        %s2185 = scalar_select %p2184, %s34, 1
        %s2186 = smul.addr %s2185, 2
        %s2187 = smul.addr %s2186, 8
        %s2188 = scalar_lea.vmem %s13, %s2187
        // Predicated region
        $region85: #{vit_caption_forward.8} parent=71 // pred_check
          %p2189 = pneg %p398
        $region86: #{vit_caption_forward.8} parent=71 // pred_check_branch
          %2191 = sbr.rel (%p2189) target = $region88
        $region87: #{vit_caption_forward.8} parent=71 // pred_region
          _
        $region88: #{vit_caption_forward.8} parent=71 // pred_fallthru
          _
      $region72: #{vit_caption_forward.8} parent=5 // pred_fallthru
        _
      %p2192 = scmp.le.s32.totalorder 2, %s25
      // Predicated region
      $region89: #{vit_caption_forward.8} parent=5 // pred_check
        %p2193 = pneg %p2192
      $region90: #{vit_caption_forward.8} parent=5 // pred_check_branch
        %2195 = sbr.rel (%p2193) target = $region92
      $region91: #{vit_caption_forward.8} parent=5 // pred_region
        %s2196 = ssub.s32 %s25, 2
        // Predicated region
        $region93: #{vit_caption_forward.8} parent=91 // pred_check
          %p2197 = pneg %p404
        $region94: #{vit_caption_forward.8} parent=91 // pred_check_branch
          %2199 = sbr.rel (%p2197) target = $region96
        $region95: #{vit_caption_forward.8} parent=91 // pred_region
          %p2200 = scmp.lt.s32.totalorder %s36, 1
          %s2201 = scalar_select %p2200, %s36, 1
          %s2202 = smul.addr %s2201, 2
          %s2203 = smul.addr %s2202, 8
          %s2204 = scalar_lea.vmem %s13, %s2203
        $region96: #{vit_caption_forward.8} parent=91 // pred_fallthru
          _
      $region92: #{vit_caption_forward.8} parent=5 // pred_fallthru
        _
    $region6: #{vit_caption_forward.8} parent=1 // loop_footer
      %s29 = sadd.s32 1, %s25
    $region7: #{vit_caption_forward.8} parent=1 // loop_footer_branch
      %24 = sbr.rel target = $region3
    $region8: #{vit_caption_forward.8} parent=1 // loop_exit
      _
    %2205 = vsyncpa [#allocation3], 1
    %s2206 = scalar_lea.sflag [#allocation3], 1
    %2207 = vsyncpa %s2206, 1
    %2208 = vsyncpa [#allocation5], 1
    %s2209 = scalar_lea.sflag [#allocation5], 1
    %2210 = vsyncpa %s2209, 1

</llo_original>
